<compile_context>
chip_gen: v7x
topology: tpu7x:2x2x1
jax: 0.10.0
libtpu: 0.0.40
codegen_flags: <defaults>
</compile_context>

<pallas_src>
import math

import jax
import jax.numpy as jnp
from jax.experimental import pallas as pl
from jax.experimental.pallas import tpu as pltpu

# ----------------------- scaled-down ViT-B config --------------------------
IMG = 32            # stands in for 224
PATCH = 8           # stands in for 16
N_PATCH = (IMG // PATCH) ** 2          # 16
SEQ = N_PATCH + 1                      # 17 (+1 class token)
SEQ_PAD = 24                           # next multiple of 8 (sublane-aligned)
HIDDEN = 64         # stands in for 768
HEADS = 4           # stands in for 12
HEAD_DIM = HIDDEN // HEADS             # 16
MLP = 128           # stands in for 3072
LAYERS = 2          # stands in for 12
EMB_DIM = 32        # stands in for embedding_dim=128
LN_EPS = 1e-6       # torchvision ViT LayerNorm eps
K_PATCH = PATCH * PATCH                # 64 (channel repeat folded into weight)

_F32 = jnp.float32
_BF16 = jnp.bfloat16
_NEG_INF = -1e30


# --------------------------- in-kernel helpers ------------------------------
def _layernorm(x, g, b):
    # LayerNorm over last dim (biased variance, eps inside sqrt) — matches torch
    mu = jnp.mean(x, axis=-1, keepdims=True)
    xc = x - mu
    var = jnp.mean(xc * xc, axis=-1, keepdims=True)
    return xc * jax.lax.rsqrt(var + LN_EPS) * g + b


def _gelu_erf(y):
    # exact (erf-based) GELU matching nn.GELU() default, via the
    # Abramowitz & Stegun 7.1.26 rational approximation of erf.
    # Built only from mul/add/exp/reciprocal so the transcendentals land on EUP.
    z = y * (1.0 / math.sqrt(2.0))
    sgn = jnp.where(z >= 0.0, 1.0, -1.0)
    za = jnp.abs(z)
    t = pl.reciprocal(1.0 + 0.3275911 * za, approx=True)      # EUP vrcp
    poly = ((((1.061405429 * t - 1.453152027) * t + 1.421413741) * t
             - 0.284496736) * t + 0.254829592) * t
    erf = sgn * (1.0 - poly * jnp.exp(-za * za))
    return 0.5 * y * (1.0 + erf)


# ------------------------------ fused kernel --------------------------------
def _vit_encoder_kernel(patches_ref, w_patch_ref, pos_ref, ln_w_ref,
                        w_qkv_ref, b_qkv_ref, w_out_ref, b_out_ref,
                        w_mlp1_ref, b_mlp1_ref, w_mlp2_ref, b_mlp2_ref,
                        ln_f_ref, emb_w_ref, emb_b_ref, out_ref):
    """One batch element per grid step; everything stays in VMEM/vregs.

    In-kernel token order: patch tokens at rows 0..N_PATCH-1, the class token
    at row N_PATCH, padding rows N_PATCH+1..SEQ_PAD-1 (pos_ref is pre-built in
    this order, so the permutation is exactly equivalent to cls-first).
    """
    # padded key columns (>= SEQ real tokens) must never be attended to
    key_id = jax.lax.broadcasted_iota(jnp.int32, (SEQ_PAD, SEQ_PAD), 1)
    key_valid = key_id < SEQ

    # ---- patch embedding; conv bias / cls token / pos-emb folded into pos ----
    tokens = jnp.dot(patches_ref[...].astype(_BF16), w_patch_ref[...],
                     preferred_element_type=_F32)            # (SEQ_PAD, HIDDEN)
    h = tokens + pos_ref[...]

    for lyr in range(LAYERS):                                # unrolled (LAYERS=2)
        lnw = ln_w_ref[lyr]                                  # (4, HIDDEN)

        # ---------------- pre-LN multi-head self-attention ----------------
        y = _layernorm(h, lnw[0:1, :], lnw[1:2, :])
        qkv = (jnp.dot(y.astype(_BF16), w_qkv_ref[lyr],
                       preferred_element_type=_F32)
               + b_qkv_ref[lyr])                             # (SEQ_PAD, 3*HIDDEN)
        w_out_l = w_out_ref[lyr]                             # (HIDDEN, HIDDEN) bf16

        attn_out = jnp.zeros((SEQ_PAD, HIDDEN), _F32)
        for hh in range(HEADS):
            lo = hh * HEAD_DIM
            q_h = qkv[:, lo:lo + HEAD_DIM]                   # pre-scaled by 1/sqrt(d)
            k_h = qkv[:, HIDDEN + lo:HIDDEN + lo + HEAD_DIM]
            v_h = qkv[:, 2 * HIDDEN + lo:2 * HIDDEN + lo + HEAD_DIM]
            # scores = q @ k^T  (contract head_dim), f32 accumulation
            s = jax.lax.dot_general(q_h.astype(_BF16), k_h.astype(_BF16),
                                    (((1,), (1,)), ((), ())),
                                    preferred_element_type=_F32)
            s = jnp.where(key_valid, s, _NEG_INF)
            s = s - jnp.max(s, axis=-1, keepdims=True)
            e = jnp.exp(s)
            p = e / jnp.sum(e, axis=-1, keepdims=True)
            o_h = jnp.dot(p.astype(_BF16), v_h.astype(_BF16),
                          preferred_element_type=_F32)       # (SEQ_PAD, HEAD_DIM)
            # concat(heads) @ W_out  ==  sum_h  o_h @ W_out[rows of head h]
            attn_out = attn_out + jnp.dot(
                o_h.astype(_BF16), w_out_l[lo:lo + HEAD_DIM, :],
                preferred_element_type=_F32)
        h = h + attn_out + b_out_ref[lyr]

        # --------------------------- pre-LN MLP ---------------------------
        y = _layernorm(h, lnw[2:3, :], lnw[3:4, :])
        y = (jnp.dot(y.astype(_BF16), w_mlp1_ref[lyr],
                     preferred_element_type=_F32) + b_mlp1_ref[lyr])
        y = _gelu_erf(y)
        y = (jnp.dot(y.astype(_BF16), w_mlp2_ref[lyr],
                     preferred_element_type=_F32) + b_mlp2_ref[lyr])
        h = h + y

    # ---- final LayerNorm, class token (row N_PATCH), embedding Linear ----
    hf = _layernorm(h, ln_f_ref[0:1, :], ln_f_ref[1:2, :])
    cls_tok = hf[N_PATCH:N_PATCH + 1, :]                     # (1, HIDDEN)
    out_ref[...] = (jnp.dot(cls_tok.astype(_BF16), emb_w_ref[...],
                            preferred_element_type=_F32) + emb_b_ref[...])


# ------------------------------ parameters ----------------------------------
def init_params(key):
    def nrm(k, shape, scale=0.02):
        return scale * jax.random.normal(k, shape, dtype=_F32)

    keys = iter(jax.random.split(key, 4 + LAYERS * 8))
    params = {
        # torch Conv2d weight layout (out_ch, in_ch, kh, kw)
        "conv_w": nrm(next(keys), (HIDDEN, 3, PATCH, PATCH)),
        "conv_b": jnp.zeros((HIDDEN,), _F32),
        "cls": jnp.zeros((1, 1, HIDDEN), _F32),
        "pos": nrm(next(keys), (1, SEQ, HIDDEN)),
        "ln_f_g": jnp.ones((HIDDEN,), _F32),
        "ln_f_b": jnp.zeros((HIDDEN,), _F32),
        "emb_w": nrm(next(keys), (HIDDEN, EMB_DIM)),
        "emb_b": jnp.zeros((EMB_DIM,), _F32),
        "layers": [],
    }
    for _ in range(LAYERS):
        params["layers"].append({
            "ln1_g": jnp.ones((HIDDEN,), _F32),
            "ln1_b": jnp.zeros((HIDDEN,), _F32),
            "w_qkv": nrm(next(keys), (HIDDEN, 3 * HIDDEN)),
            "b_qkv": jnp.zeros((3 * HIDDEN,), _F32),
            "w_out": nrm(next(keys), (HIDDEN, HIDDEN)),
            "b_out": jnp.zeros((HIDDEN,), _F32),
            "ln2_g": jnp.ones((HIDDEN,), _F32),
            "ln2_b": jnp.zeros((HIDDEN,), _F32),
            "w_mlp1": nrm(next(keys), (HIDDEN, MLP)),
            "b_mlp1": jnp.zeros((MLP,), _F32),
            "w_mlp2": nrm(next(keys), (MLP, HIDDEN)),
            "b_mlp2": jnp.zeros((HIDDEN,), _F32),
        })
    return params


def _prep_kernel_params(params):
    """Fold constants into weights and stack per-layer tensors for the kernel.

    - channel repeat x3 folded into w_patch (sum over in_ch; exact because the
      repeated channels are identical copies)
    - conv bias + cls token folded into a padded pos slab (in-kernel order:
      patches first, cls at row N_PATCH, zero padding rows)
    - 1/sqrt(HEAD_DIM) folded into the Q columns of w_qkv / b_qkv
    - matmul weights cast to bf16 (MXU path); LN / bias params stay f32
    """
    inv = 1.0 / math.sqrt(HEAD_DIM)

    w_patch = params["conv_w"].sum(axis=1).reshape(HIDDEN, K_PATCH).T  # (64,64)
    pos = params["pos"][0]                                             # (SEQ, H)
    pos_pad = jnp.zeros((SEQ_PAD, HIDDEN), _F32)
    pos_pad = pos_pad.at[:N_PATCH].set(pos[1:] + params["conv_b"][None, :])
    pos_pad = pos_pad.at[N_PATCH].set(pos[0] + params["cls"][0, 0]
                                      + params["conv_b"])

    ls = params["layers"]
    ln_w = jnp.stack([jnp.stack([l["ln1_g"], l["ln1_b"], l["ln2_g"], l["ln2_b"]])
                      for l in ls])                                    # (L,4,H)
    w_qkv = jnp.stack([l["w_qkv"].at[:, :HIDDEN].multiply(inv) for l in ls])
    b_qkv = jnp.stack([l["b_qkv"].at[:HIDDEN].multiply(inv)[None, :] for l in ls])
    w_out = jnp.stack([l["w_out"] for l in ls])
    b_out = jnp.stack([l["b_out"][None, :] for l in ls])
    w_mlp1 = jnp.stack([l["w_mlp1"] for l in ls])
    b_mlp1 = jnp.stack([l["b_mlp1"][None, :] for l in ls])
    w_mlp2 = jnp.stack([l["w_mlp2"] for l in ls])
    b_mlp2 = jnp.stack([l["b_mlp2"][None, :] for l in ls])
    ln_f = jnp.stack([params["ln_f_g"], params["ln_f_b"]])             # (2,H)

    return (w_patch.astype(_BF16), pos_pad, ln_w,
            w_qkv.astype(_BF16), b_qkv, w_out.astype(_BF16), b_out,
            w_mlp1.astype(_BF16), b_mlp1, w_mlp2.astype(_BF16), b_mlp2,
            ln_f, params["emb_w"].astype(_BF16), params["emb_b"][None, :])


# ------------------------------ forward pass --------------------------------
def _bcast_spec(shape):
    zeros = (0,) * len(shape)
    return pl.BlockSpec(shape, lambda b, _z=zeros: _z)


def vit_forward(params, x):
    B, C, H, W = x.shape
    assert C == 1, "torch forward only defines the single-channel path"

    # --- plain-JAX glue: bilinear resize + patch extraction ------------------
    # TODO(synk): bilinear resize / patch reshape-transpose stay as XLA glue
    # (no clean Pallas equivalent); channel repeat x3 is folded into w_patch.
    x = jax.image.resize(x[:, 0], (B, IMG, IMG), method="bilinear")
    nh = IMG // PATCH
    patches = x.reshape(B, nh, PATCH, nh, PATCH).transpose(0, 1, 3, 2, 4)
    patches = patches.reshape(B, N_PATCH, K_PATCH)
    patches = jnp.pad(patches, ((0, 0), (0, SEQ_PAD - N_PATCH), (0, 0)))

    kargs = _prep_kernel_params(params)

    in_specs = [
        pl.BlockSpec((None, SEQ_PAD, K_PATCH), lambda b: (b, 0, 0)),  # patches
        _bcast_spec((K_PATCH, HIDDEN)),                 # w_patch   (bf16)
        _bcast_spec((SEQ_PAD, HIDDEN)),                 # pos_pad   (f32)
        _bcast_spec((LAYERS, 4, HIDDEN)),               # ln params (f32)
        _bcast_spec((LAYERS, HIDDEN, 3 * HIDDEN)),      # w_qkv     (bf16)
        _bcast_spec((LAYERS, 1, 3 * HIDDEN)),           # b_qkv
        _bcast_spec((LAYERS, HIDDEN, HIDDEN)),          # w_out     (bf16)
        _bcast_spec((LAYERS, 1, HIDDEN)),               # b_out
        _bcast_spec((LAYERS, HIDDEN, MLP)),             # w_mlp1    (bf16)
        _bcast_spec((LAYERS, 1, MLP)),                  # b_mlp1
        _bcast_spec((LAYERS, MLP, HIDDEN)),             # w_mlp2    (bf16)
        _bcast_spec((LAYERS, 1, HIDDEN)),               # b_mlp2
        _bcast_spec((2, HIDDEN)),                       # ln_f
        _bcast_spec((HIDDEN, EMB_DIM)),                 # emb_w     (bf16)
        _bcast_spec((1, EMB_DIM)),                      # emb_b
    ]

    out = pl.pallas_call(
        _vit_encoder_kernel,
        out_shape=jax.ShapeDtypeStruct((B, 1, EMB_DIM), _F32),
        grid=(B,),
        in_specs=in_specs,
        out_specs=pl.BlockSpec((None, 1, EMB_DIM), lambda b: (b, 0, 0)),
        compiler_params=pltpu.CompilerParams(
            dimension_semantics=("parallel",)),   # both TCs on v7x megacore
    )(patches, *kargs)

    return out.reshape(B, EMB_DIM)


if __name__ == "__main__":
    key = jax.random.PRNGKey(0)
    pkey, xkey = jax.random.split(key)
    params = init_params(pkey)
    # small NCHW input with a single channel (the torch forward's only valid path)
    x = jax.random.normal(xkey, (2, 1, 16, 16), dtype=jnp.float32)

    fwd = jax.jit(vit_forward)
    out = jax.block_until_ready(fwd(params, x))
    assert out.shape == (2, EMB_DIM) and out.dtype == jnp.float32
    assert bool(jnp.all(jnp.isfinite(out)))
    print("KERNEL_OK")
</pallas_src>

<mosaic_0001>
module attributes {stable_mosaic.version = 11 : i64} {
  func.func @_vit_encoder_kernel(%arg0: i32, %arg1: memref<1x24x64xf32, #tpu.memory_space<vmem>>, %arg2: memref<64x64xbf16, #tpu.memory_space<vmem>>, %arg3: memref<24x64xf32, #tpu.memory_space<vmem>>, %arg4: memref<2x4x64xf32, #tpu.memory_space<vmem>>, %arg5: memref<2x64x192xbf16, #tpu.memory_space<vmem>>, %arg6: memref<2x1x192xf32, #tpu.memory_space<vmem>>, %arg7: memref<2x64x64xbf16, #tpu.memory_space<vmem>>, %arg8: memref<2x1x64xf32, #tpu.memory_space<vmem>>, %arg9: memref<2x64x128xbf16, #tpu.memory_space<vmem>>, %arg10: memref<2x1x128xf32, #tpu.memory_space<vmem>>, %arg11: memref<2x128x64xbf16, #tpu.memory_space<vmem>>, %arg12: memref<2x1x64xf32, #tpu.memory_space<vmem>>, %arg13: memref<2x64xf32, #tpu.memory_space<vmem>>, %arg14: memref<64x32xbf16, #tpu.memory_space<vmem>>, %arg15: memref<1x32xf32, #tpu.memory_space<vmem>>, %arg16: memref<1x1x32xf32, #tpu.memory_space<vmem>>) attributes {dimension_semantics = [#tpu.dimension_semantics<parallel>], iteration_bounds = array<i64: 2>, scalar_prefetch = 0 : i64, scratch_operands = 0 : i64, tpu.core_type = #tpu.core_type<tc>, window_params = [{transform_indices = @transform_0, window_bounds = array<i64: 1, 24, 64>}, {pipeline_mode = #tpu.pipeline_mode<synchronous>, transform_indices = @transform_1, window_bounds = array<i64: 64, 64>}, {pipeline_mode = #tpu.pipeline_mode<synchronous>, transform_indices = @transform_2, window_bounds = array<i64: 24, 64>}, {pipeline_mode = #tpu.pipeline_mode<synchronous>, transform_indices = @transform_3, window_bounds = array<i64: 2, 4, 64>}, {pipeline_mode = #tpu.pipeline_mode<synchronous>, transform_indices = @transform_4, window_bounds = array<i64: 2, 64, 192>}, {pipeline_mode = #tpu.pipeline_mode<synchronous>, transform_indices = @transform_5, window_bounds = array<i64: 2, 1, 192>}, {pipeline_mode = #tpu.pipeline_mode<synchronous>, transform_indices = @transform_6, window_bounds = array<i64: 2, 64, 64>}, {pipeline_mode = #tpu.pipeline_mode<synchronous>, transform_indices = @transform_7, window_bounds = array<i64: 2, 1, 64>}, {pipeline_mode = #tpu.pipeline_mode<synchronous>, transform_indices = @transform_8, window_bounds = array<i64: 2, 64, 128>}, {pipeline_mode = #tpu.pipeline_mode<synchronous>, transform_indices = @transform_9, window_bounds = array<i64: 2, 1, 128>}, {pipeline_mode = #tpu.pipeline_mode<synchronous>, transform_indices = @transform_10, window_bounds = array<i64: 2, 128, 64>}, {pipeline_mode = #tpu.pipeline_mode<synchronous>, transform_indices = @transform_11, window_bounds = array<i64: 2, 1, 64>}, {pipeline_mode = #tpu.pipeline_mode<synchronous>, transform_indices = @transform_12, window_bounds = array<i64: 2, 64>}, {pipeline_mode = #tpu.pipeline_mode<synchronous>, transform_indices = @transform_13, window_bounds = array<i64: 64, 32>}, {pipeline_mode = #tpu.pipeline_mode<synchronous>, transform_indices = @transform_14, window_bounds = array<i64: 1, 32>}, {transform_indices = @transform_15, window_bounds = array<i64: 1, 1, 32>}]} {
    %0 = tpu.iota {dimensions = array<i32: 1>} : vector<24x24xi32>
    %c17_i32 = arith.constant 17 : i32
    %1 = vector.broadcast %c17_i32 : i32 to vector<24x24xi32>
    %2 = arith.cmpi slt, %0, %1 : vector<24x24xi32>
    %c0 = arith.constant 0 : index
    %c0_0 = arith.constant 0 : index
    %c0_1 = arith.constant 0 : index
    %3 = vector.load %arg1[%c0, %c0_0, %c0_1] : memref<1x24x64xf32, #tpu.memory_space<vmem>>, vector<1x24x64xf32>
    %4 = vector.shape_cast %3 : vector<1x24x64xf32> to vector<24x64xf32>
    %5 = arith.truncf %4 : vector<24x64xf32> to vector<24x64xbf16>
    %c0_2 = arith.constant 0 : index
    %c0_3 = arith.constant 0 : index
    %6 = vector.load %arg2[%c0_2, %c0_3] : memref<64x64xbf16, #tpu.memory_space<vmem>>, vector<64x64xbf16>
    %cst = arith.constant dense<0.000000e+00> : vector<24x64xf32>
    %7 = tpu.matmul %5, %6, %cst {dimension_numbers = #tpu.dot_dimension_numbers<[1], [0], [0], [1], [0, 0, 1, 1], [], []>} : vector<24x64xbf16>, vector<64x64xbf16>, vector<24x64xf32> -> vector<24x64xf32>
    %c0_4 = arith.constant 0 : index
    %c0_5 = arith.constant 0 : index
    %8 = vector.load %arg3[%c0_4, %c0_5] : memref<24x64xf32, #tpu.memory_space<vmem>>, vector<24x64xf32>
    %9 = arith.addf %7, %8 : vector<24x64xf32>
    %c0_6 = arith.constant 0 : index
    %c0_7 = arith.constant 0 : index
    %c0_8 = arith.constant 0 : index
    %10 = vector.load %arg4[%c0_6, %c0_7, %c0_8] : memref<2x4x64xf32, #tpu.memory_space<vmem>>, vector<1x4x64xf32>
    %11 = vector.shape_cast %10 : vector<1x4x64xf32> to vector<4x64xf32>
    %12 = vector.extract_strided_slice %11 {offsets = [0, 0], sizes = [1, 64], strides = [1, 1]} : vector<4x64xf32> to vector<1x64xf32>
    %13 = vector.extract_strided_slice %11 {offsets = [1, 0], sizes = [1, 64], strides = [1, 1]} : vector<4x64xf32> to vector<1x64xf32>
    %cst_9 = arith.constant dense<0.000000e+00> : vector<24xf32>
    %14 = vector.multi_reduction <add>, %9, %cst_9 [1] : vector<24x64xf32> to vector<24xf32>
    %15 = vector.shape_cast %14 : vector<24xf32> to vector<24x1xf32>
    %cst_10 = arith.constant 6.400000e+01 : f32
    %16 = vector.broadcast %cst_10 : f32 to vector<24x1xf32>
    %17 = arith.divf %15, %16 : vector<24x1xf32>
    %18 = vector.broadcast %17 : vector<24x1xf32> to vector<24x64xf32>
    %19 = arith.subf %9, %18 : vector<24x64xf32>
    %20 = arith.mulf %19, %19 : vector<24x64xf32>
    %cst_11 = arith.constant dense<0.000000e+00> : vector<24xf32>
    %21 = vector.multi_reduction <add>, %20, %cst_11 [1] : vector<24x64xf32> to vector<24xf32>
    %22 = vector.shape_cast %21 : vector<24xf32> to vector<24x1xf32>
    %cst_12 = arith.constant 6.400000e+01 : f32
    %23 = vector.broadcast %cst_12 : f32 to vector<24x1xf32>
    %24 = arith.divf %22, %23 : vector<24x1xf32>
    %cst_13 = arith.constant 9.99999997E-7 : f32
    %25 = vector.broadcast %cst_13 : f32 to vector<24x1xf32>
    %26 = arith.addf %24, %25 : vector<24x1xf32>
    %27 = math.rsqrt %26 : vector<24x1xf32>
    %28 = vector.broadcast %27 : vector<24x1xf32> to vector<24x64xf32>
    %29 = arith.mulf %19, %28 : vector<24x64xf32>
    %30 = vector.broadcast %12 : vector<1x64xf32> to vector<24x64xf32>
    %31 = arith.mulf %29, %30 : vector<24x64xf32>
    %32 = vector.broadcast %13 : vector<1x64xf32> to vector<24x64xf32>
    %33 = arith.addf %31, %32 : vector<24x64xf32>
    %34 = arith.truncf %33 : vector<24x64xf32> to vector<24x64xbf16>
    %c0_14 = arith.constant 0 : index
    %c0_15 = arith.constant 0 : index
    %c0_16 = arith.constant 0 : index
    %35 = vector.load %arg5[%c0_14, %c0_15, %c0_16] : memref<2x64x192xbf16, #tpu.memory_space<vmem>>, vector<1x64x192xbf16>
    %36 = vector.shape_cast %35 : vector<1x64x192xbf16> to vector<64x192xbf16>
    %cst_17 = arith.constant dense<0.000000e+00> : vector<24x192xf32>
    %37 = tpu.matmul %34, %36, %cst_17 {dimension_numbers = #tpu.dot_dimension_numbers<[1], [0], [0], [1], [0, 0, 1, 1], [], []>} : vector<24x64xbf16>, vector<64x192xbf16>, vector<24x192xf32> -> vector<24x192xf32>
    %c0_18 = arith.constant 0 : index
    %c0_19 = arith.constant 0 : index
    %c0_20 = arith.constant 0 : index
    %38 = vector.load %arg6[%c0_18, %c0_19, %c0_20] : memref<2x1x192xf32, #tpu.memory_space<vmem>>, vector<1x1x192xf32>
    %39 = vector.shape_cast %38 : vector<1x1x192xf32> to vector<1x192xf32>
    %40 = vector.broadcast %39 : vector<1x192xf32> to vector<24x192xf32>
    %41 = arith.addf %37, %40 : vector<24x192xf32>
    %c0_21 = arith.constant 0 : index
    %c0_22 = arith.constant 0 : index
    %c0_23 = arith.constant 0 : index
    %42 = vector.load %arg7[%c0_21, %c0_22, %c0_23] : memref<2x64x64xbf16, #tpu.memory_space<vmem>>, vector<1x64x64xbf16>
    %43 = vector.shape_cast %42 : vector<1x64x64xbf16> to vector<64x64xbf16>
    %cst_24 = arith.constant 0.000000e+00 : f32
    %44 = vector.broadcast %cst_24 : f32 to vector<24x64xf32>
    %45 = vector.extract_strided_slice %41 {offsets = [0, 0], sizes = [24, 16], strides = [1, 1]} : vector<24x192xf32> to vector<24x16xf32>
    %46 = vector.extract_strided_slice %41 {offsets = [0, 64], sizes = [24, 16], strides = [1, 1]} : vector<24x192xf32> to vector<24x16xf32>
    %47 = vector.extract_strided_slice %41 {offsets = [0, 128], sizes = [24, 16], strides = [1, 1]} : vector<24x192xf32> to vector<24x16xf32>
    %48 = arith.truncf %45 : vector<24x16xf32> to vector<24x16xbf16>
    %49 = arith.truncf %46 : vector<24x16xf32> to vector<24x16xbf16>
    %cst_25 = arith.constant dense<0.000000e+00> : vector<24x24xf32>
    %50 = tpu.matmul %48, %49, %cst_25 {dimension_numbers = #tpu.dot_dimension_numbers<[1], [1], [0], [0], [0, 0, 1, 0], [], []>} : vector<24x16xbf16>, vector<24x16xbf16>, vector<24x24xf32> -> vector<24x24xf32>
    %cst_26 = arith.constant -1.000000e+30 : f32
    %51 = vector.broadcast %cst_26 : f32 to vector<24x24xf32>
    %52 = arith.select %2, %50, %51 : vector<24x24xi1>, vector<24x24xf32>
    %cst_27 = arith.constant dense<0xFF800000> : vector<24xf32>
    %53 = vector.multi_reduction <maximumf>, %52, %cst_27 [1] : vector<24x24xf32> to vector<24xf32>
    %54 = vector.shape_cast %53 : vector<24xf32> to vector<24x1xf32>
    %55 = vector.broadcast %54 : vector<24x1xf32> to vector<24x24xf32>
    %56 = arith.subf %52, %55 : vector<24x24xf32>
    %57 = math.exp %56 : vector<24x24xf32>
    %cst_28 = arith.constant dense<0.000000e+00> : vector<24xf32>
    %58 = vector.multi_reduction <add>, %57, %cst_28 [1] : vector<24x24xf32> to vector<24xf32>
    %59 = vector.shape_cast %58 : vector<24xf32> to vector<24x1xf32>
    %60 = vector.broadcast %59 : vector<24x1xf32> to vector<24x24xf32>
    %61 = arith.divf %57, %60 : vector<24x24xf32>
    %62 = arith.truncf %61 : vector<24x24xf32> to vector<24x24xbf16>
    %63 = arith.truncf %47 : vector<24x16xf32> to vector<24x16xbf16>
    %cst_29 = arith.constant dense<0.000000e+00> : vector<24x16xf32>
    %64 = tpu.matmul %62, %63, %cst_29 {dimension_numbers = #tpu.dot_dimension_numbers<[1], [0], [0], [1], [0, 0, 1, 1], [], []>} : vector<24x24xbf16>, vector<24x16xbf16>, vector<24x16xf32> -> vector<24x16xf32>
    %65 = arith.truncf %64 : vector<24x16xf32> to vector<24x16xbf16>
    %66 = vector.extract_strided_slice %43 {offsets = [0, 0], sizes = [16, 64], strides = [1, 1]} : vector<64x64xbf16> to vector<16x64xbf16>
    %cst_30 = arith.constant dense<0.000000e+00> : vector<24x64xf32>
    %67 = tpu.matmul %65, %66, %cst_30 {dimension_numbers = #tpu.dot_dimension_numbers<[1], [0], [0], [1], [0, 0, 1, 1], [], []>} : vector<24x16xbf16>, vector<16x64xbf16>, vector<24x64xf32> -> vector<24x64xf32>
    %68 = arith.addf %44, %67 : vector<24x64xf32>
    %69 = vector.extract_strided_slice %41 {offsets = [0, 16], sizes = [24, 16], strides = [1, 1]} : vector<24x192xf32> to vector<24x16xf32>
    %70 = vector.extract_strided_slice %41 {offsets = [0, 80], sizes = [24, 16], strides = [1, 1]} : vector<24x192xf32> to vector<24x16xf32>
    %71 = vector.extract_strided_slice %41 {offsets = [0, 144], sizes = [24, 16], strides = [1, 1]} : vector<24x192xf32> to vector<24x16xf32>
    %72 = arith.truncf %69 : vector<24x16xf32> to vector<24x16xbf16>
    %73 = arith.truncf %70 : vector<24x16xf32> to vector<24x16xbf16>
    %cst_31 = arith.constant dense<0.000000e+00> : vector<24x24xf32>
    %74 = tpu.matmul %72, %73, %cst_31 {dimension_numbers = #tpu.dot_dimension_numbers<[1], [1], [0], [0], [0, 0, 1, 0], [], []>} : vector<24x16xbf16>, vector<24x16xbf16>, vector<24x24xf32> -> vector<24x24xf32>
    %cst_32 = arith.constant -1.000000e+30 : f32
    %75 = vector.broadcast %cst_32 : f32 to vector<24x24xf32>
    %76 = arith.select %2, %74, %75 : vector<24x24xi1>, vector<24x24xf32>
    %cst_33 = arith.constant dense<0xFF800000> : vector<24xf32>
    %77 = vector.multi_reduction <maximumf>, %76, %cst_33 [1] : vector<24x24xf32> to vector<24xf32>
    %78 = vector.shape_cast %77 : vector<24xf32> to vector<24x1xf32>
    %79 = vector.broadcast %78 : vector<24x1xf32> to vector<24x24xf32>
    %80 = arith.subf %76, %79 : vector<24x24xf32>
    %81 = math.exp %80 : vector<24x24xf32>
    %cst_34 = arith.constant dense<0.000000e+00> : vector<24xf32>
    %82 = vector.multi_reduction <add>, %81, %cst_34 [1] : vector<24x24xf32> to vector<24xf32>
    %83 = vector.shape_cast %82 : vector<24xf32> to vector<24x1xf32>
    %84 = vector.broadcast %83 : vector<24x1xf32> to vector<24x24xf32>
    %85 = arith.divf %81, %84 : vector<24x24xf32>
    %86 = arith.truncf %85 : vector<24x24xf32> to vector<24x24xbf16>
    %87 = arith.truncf %71 : vector<24x16xf32> to vector<24x16xbf16>
    %cst_35 = arith.constant dense<0.000000e+00> : vector<24x16xf32>
    %88 = tpu.matmul %86, %87, %cst_35 {dimension_numbers = #tpu.dot_dimension_numbers<[1], [0], [0], [1], [0, 0, 1, 1], [], []>} : vector<24x24xbf16>, vector<24x16xbf16>, vector<24x16xf32> -> vector<24x16xf32>
    %89 = arith.truncf %88 : vector<24x16xf32> to vector<24x16xbf16>
    %90 = vector.extract_strided_slice %43 {offsets = [16, 0], sizes = [16, 64], strides = [1, 1]} : vector<64x64xbf16> to vector<16x64xbf16>
    %cst_36 = arith.constant dense<0.000000e+00> : vector<24x64xf32>
    %91 = tpu.matmul %89, %90, %cst_36 {dimension_numbers = #tpu.dot_dimension_numbers<[1], [0], [0], [1], [0, 0, 1, 1], [], []>} : vector<24x16xbf16>, vector<16x64xbf16>, vector<24x64xf32> -> vector<24x64xf32>
    %92 = arith.addf %68, %91 : vector<24x64xf32>
    %93 = vector.extract_strided_slice %41 {offsets = [0, 32], sizes = [24, 16], strides = [1, 1]} : vector<24x192xf32> to vector<24x16xf32>
    %94 = vector.extract_strided_slice %41 {offsets = [0, 96], sizes = [24, 16], strides = [1, 1]} : vector<24x192xf32> to vector<24x16xf32>
    %95 = vector.extract_strided_slice %41 {offsets = [0, 160], sizes = [24, 16], strides = [1, 1]} : vector<24x192xf32> to vector<24x16xf32>
    %96 = arith.truncf %93 : vector<24x16xf32> to vector<24x16xbf16>
    %97 = arith.truncf %94 : vector<24x16xf32> to vector<24x16xbf16>
    %cst_37 = arith.constant dense<0.000000e+00> : vector<24x24xf32>
    %98 = tpu.matmul %96, %97, %cst_37 {dimension_numbers = #tpu.dot_dimension_numbers<[1], [1], [0], [0], [0, 0, 1, 0], [], []>} : vector<24x16xbf16>, vector<24x16xbf16>, vector<24x24xf32> -> vector<24x24xf32>
    %cst_38 = arith.constant -1.000000e+30 : f32
    %99 = vector.broadcast %cst_38 : f32 to vector<24x24xf32>
    %100 = arith.select %2, %98, %99 : vector<24x24xi1>, vector<24x24xf32>
    %cst_39 = arith.constant dense<0xFF800000> : vector<24xf32>
    %101 = vector.multi_reduction <maximumf>, %100, %cst_39 [1] : vector<24x24xf32> to vector<24xf32>
    %102 = vector.shape_cast %101 : vector<24xf32> to vector<24x1xf32>
    %103 = vector.broadcast %102 : vector<24x1xf32> to vector<24x24xf32>
    %104 = arith.subf %100, %103 : vector<24x24xf32>
    %105 = math.exp %104 : vector<24x24xf32>
    %cst_40 = arith.constant dense<0.000000e+00> : vector<24xf32>
    %106 = vector.multi_reduction <add>, %105, %cst_40 [1] : vector<24x24xf32> to vector<24xf32>
    %107 = vector.shape_cast %106 : vector<24xf32> to vector<24x1xf32>
    %108 = vector.broadcast %107 : vector<24x1xf32> to vector<24x24xf32>
    %109 = arith.divf %105, %108 : vector<24x24xf32>
    %110 = arith.truncf %109 : vector<24x24xf32> to vector<24x24xbf16>
    %111 = arith.truncf %95 : vector<24x16xf32> to vector<24x16xbf16>
    %cst_41 = arith.constant dense<0.000000e+00> : vector<24x16xf32>
    %112 = tpu.matmul %110, %111, %cst_41 {dimension_numbers = #tpu.dot_dimension_numbers<[1], [0], [0], [1], [0, 0, 1, 1], [], []>} : vector<24x24xbf16>, vector<24x16xbf16>, vector<24x16xf32> -> vector<24x16xf32>
    %113 = arith.truncf %112 : vector<24x16xf32> to vector<24x16xbf16>
    %114 = vector.extract_strided_slice %43 {offsets = [32, 0], sizes = [16, 64], strides = [1, 1]} : vector<64x64xbf16> to vector<16x64xbf16>
    %cst_42 = arith.constant dense<0.000000e+00> : vector<24x64xf32>
    %115 = tpu.matmul %113, %114, %cst_42 {dimension_numbers = #tpu.dot_dimension_numbers<[1], [0], [0], [1], [0, 0, 1, 1], [], []>} : vector<24x16xbf16>, vector<16x64xbf16>, vector<24x64xf32> -> vector<24x64xf32>
    %116 = arith.addf %92, %115 : vector<24x64xf32>
    %117 = vector.extract_strided_slice %41 {offsets = [0, 48], sizes = [24, 16], strides = [1, 1]} : vector<24x192xf32> to vector<24x16xf32>
    %118 = vector.extract_strided_slice %41 {offsets = [0, 112], sizes = [24, 16], strides = [1, 1]} : vector<24x192xf32> to vector<24x16xf32>
    %119 = vector.extract_strided_slice %41 {offsets = [0, 176], sizes = [24, 16], strides = [1, 1]} : vector<24x192xf32> to vector<24x16xf32>
    %120 = arith.truncf %117 : vector<24x16xf32> to vector<24x16xbf16>
    %121 = arith.truncf %118 : vector<24x16xf32> to vector<24x16xbf16>
    %cst_43 = arith.constant dense<0.000000e+00> : vector<24x24xf32>
    %122 = tpu.matmul %120, %121, %cst_43 {dimension_numbers = #tpu.dot_dimension_numbers<[1], [1], [0], [0], [0, 0, 1, 0], [], []>} : vector<24x16xbf16>, vector<24x16xbf16>, vector<24x24xf32> -> vector<24x24xf32>
    %cst_44 = arith.constant -1.000000e+30 : f32
    %123 = vector.broadcast %cst_44 : f32 to vector<24x24xf32>
    %124 = arith.select %2, %122, %123 : vector<24x24xi1>, vector<24x24xf32>
    %cst_45 = arith.constant dense<0xFF800000> : vector<24xf32>
    %125 = vector.multi_reduction <maximumf>, %124, %cst_45 [1] : vector<24x24xf32> to vector<24xf32>
    %126 = vector.shape_cast %125 : vector<24xf32> to vector<24x1xf32>
    %127 = vector.broadcast %126 : vector<24x1xf32> to vector<24x24xf32>
    %128 = arith.subf %124, %127 : vector<24x24xf32>
    %129 = math.exp %128 : vector<24x24xf32>
    %cst_46 = arith.constant dense<0.000000e+00> : vector<24xf32>
    %130 = vector.multi_reduction <add>, %129, %cst_46 [1] : vector<24x24xf32> to vector<24xf32>
    %131 = vector.shape_cast %130 : vector<24xf32> to vector<24x1xf32>
    %132 = vector.broadcast %131 : vector<24x1xf32> to vector<24x24xf32>
    %133 = arith.divf %129, %132 : vector<24x24xf32>
    %134 = arith.truncf %133 : vector<24x24xf32> to vector<24x24xbf16>
    %135 = arith.truncf %119 : vector<24x16xf32> to vector<24x16xbf16>
    %cst_47 = arith.constant dense<0.000000e+00> : vector<24x16xf32>
    %136 = tpu.matmul %134, %135, %cst_47 {dimension_numbers = #tpu.dot_dimension_numbers<[1], [0], [0], [1], [0, 0, 1, 1], [], []>} : vector<24x24xbf16>, vector<24x16xbf16>, vector<24x16xf32> -> vector<24x16xf32>
    %137 = arith.truncf %136 : vector<24x16xf32> to vector<24x16xbf16>
    %138 = vector.extract_strided_slice %43 {offsets = [48, 0], sizes = [16, 64], strides = [1, 1]} : vector<64x64xbf16> to vector<16x64xbf16>
    %cst_48 = arith.constant dense<0.000000e+00> : vector<24x64xf32>
    %139 = tpu.matmul %137, %138, %cst_48 {dimension_numbers = #tpu.dot_dimension_numbers<[1], [0], [0], [1], [0, 0, 1, 1], [], []>} : vector<24x16xbf16>, vector<16x64xbf16>, vector<24x64xf32> -> vector<24x64xf32>
    %140 = arith.addf %116, %139 : vector<24x64xf32>
    %141 = arith.addf %9, %140 : vector<24x64xf32>
    %c0_49 = arith.constant 0 : index
    %c0_50 = arith.constant 0 : index
    %c0_51 = arith.constant 0 : index
    %142 = vector.load %arg8[%c0_49, %c0_50, %c0_51] : memref<2x1x64xf32, #tpu.memory_space<vmem>>, vector<1x1x64xf32>
    %143 = vector.shape_cast %142 : vector<1x1x64xf32> to vector<1x64xf32>
    %144 = vector.broadcast %143 : vector<1x64xf32> to vector<24x64xf32>
    %145 = arith.addf %141, %144 : vector<24x64xf32>
    %146 = vector.extract_strided_slice %11 {offsets = [2, 0], sizes = [1, 64], strides = [1, 1]} : vector<4x64xf32> to vector<1x64xf32>
    %147 = vector.extract_strided_slice %11 {offsets = [3, 0], sizes = [1, 64], strides = [1, 1]} : vector<4x64xf32> to vector<1x64xf32>
    %cst_52 = arith.constant dense<0.000000e+00> : vector<24xf32>
    %148 = vector.multi_reduction <add>, %145, %cst_52 [1] : vector<24x64xf32> to vector<24xf32>
    %149 = vector.shape_cast %148 : vector<24xf32> to vector<24x1xf32>
    %cst_53 = arith.constant 6.400000e+01 : f32
    %150 = vector.broadcast %cst_53 : f32 to vector<24x1xf32>
    %151 = arith.divf %149, %150 : vector<24x1xf32>
    %152 = vector.broadcast %151 : vector<24x1xf32> to vector<24x64xf32>
    %153 = arith.subf %145, %152 : vector<24x64xf32>
    %154 = arith.mulf %153, %153 : vector<24x64xf32>
    %cst_54 = arith.constant dense<0.000000e+00> : vector<24xf32>
    %155 = vector.multi_reduction <add>, %154, %cst_54 [1] : vector<24x64xf32> to vector<24xf32>
    %156 = vector.shape_cast %155 : vector<24xf32> to vector<24x1xf32>
    %cst_55 = arith.constant 6.400000e+01 : f32
    %157 = vector.broadcast %cst_55 : f32 to vector<24x1xf32>
    %158 = arith.divf %156, %157 : vector<24x1xf32>
    %cst_56 = arith.constant 9.99999997E-7 : f32
    %159 = vector.broadcast %cst_56 : f32 to vector<24x1xf32>
    %160 = arith.addf %158, %159 : vector<24x1xf32>
    %161 = math.rsqrt %160 : vector<24x1xf32>
    %162 = vector.broadcast %161 : vector<24x1xf32> to vector<24x64xf32>
    %163 = arith.mulf %153, %162 : vector<24x64xf32>
    %164 = vector.broadcast %146 : vector<1x64xf32> to vector<24x64xf32>
    %165 = arith.mulf %163, %164 : vector<24x64xf32>
    %166 = vector.broadcast %147 : vector<1x64xf32> to vector<24x64xf32>
    %167 = arith.addf %165, %166 : vector<24x64xf32>
    %168 = arith.truncf %167 : vector<24x64xf32> to vector<24x64xbf16>
    %c0_57 = arith.constant 0 : index
    %c0_58 = arith.constant 0 : index
    %c0_59 = arith.constant 0 : index
    %169 = vector.load %arg9[%c0_57, %c0_58, %c0_59] : memref<2x64x128xbf16, #tpu.memory_space<vmem>>, vector<1x64x128xbf16>
    %170 = vector.shape_cast %169 : vector<1x64x128xbf16> to vector<64x128xbf16>
    %cst_60 = arith.constant dense<0.000000e+00> : vector<24x128xf32>
    %171 = tpu.matmul %168, %170, %cst_60 {dimension_numbers = #tpu.dot_dimension_numbers<[1], [0], [0], [1], [0, 0, 1, 1], [], []>} : vector<24x64xbf16>, vector<64x128xbf16>, vector<24x128xf32> -> vector<24x128xf32>
    %c0_61 = arith.constant 0 : index
    %c0_62 = arith.constant 0 : index
    %c0_63 = arith.constant 0 : index
    %172 = vector.load %arg10[%c0_61, %c0_62, %c0_63] : memref<2x1x128xf32, #tpu.memory_space<vmem>>, vector<1x1x128xf32>
    %173 = vector.shape_cast %172 : vector<1x1x128xf32> to vector<1x128xf32>
    %174 = vector.broadcast %173 : vector<1x128xf32> to vector<24x128xf32>
    %175 = arith.addf %171, %174 : vector<24x128xf32>
    %cst_64 = arith.constant 0.707106769 : f32
    %176 = vector.broadcast %cst_64 : f32 to vector<24x128xf32>
    %177 = arith.mulf %175, %176 : vector<24x128xf32>
    %cst_65 = arith.constant 0.000000e+00 : f32
    %178 = vector.broadcast %cst_65 : f32 to vector<24x128xf32>
    %179 = arith.cmpf oge, %177, %178 : vector<24x128xf32>
    %cst_66 = arith.constant 1.000000e+00 : f32
    %cst_67 = arith.constant -1.000000e+00 : f32
    %180 = vector.broadcast %cst_66 : f32 to vector<24x128xf32>
    %181 = vector.broadcast %cst_67 : f32 to vector<24x128xf32>
    %182 = arith.select %179, %180, %181 : vector<24x128xi1>, vector<24x128xf32>
    %183 = math.absf %177 : vector<24x128xf32>
    %cst_68 = arith.constant 0.327591091 : f32
    %184 = vector.broadcast %cst_68 : f32 to vector<24x128xf32>
    %185 = arith.mulf %184, %183 : vector<24x128xf32>
    %cst_69 = arith.constant 1.000000e+00 : f32
    %186 = vector.broadcast %cst_69 : f32 to vector<24x128xf32>
    %187 = arith.addf %186, %185 : vector<24x128xf32>
    %188 = tpu.reciprocal %187 {approx = true} : vector<24x128xf32> -> vector<24x128xf32>
    %cst_70 = arith.constant 1.06140542 : f32
    %189 = vector.broadcast %cst_70 : f32 to vector<24x128xf32>
    %190 = arith.mulf %189, %188 : vector<24x128xf32>
    %cst_71 = arith.constant 1.45315206 : f32
    %191 = vector.broadcast %cst_71 : f32 to vector<24x128xf32>
    %192 = arith.subf %190, %191 : vector<24x128xf32>
    %193 = arith.mulf %192, %188 : vector<24x128xf32>
    %cst_72 = arith.constant 1.42141378 : f32
    %194 = vector.broadcast %cst_72 : f32 to vector<24x128xf32>
    %195 = arith.addf %193, %194 : vector<24x128xf32>
    %196 = arith.mulf %195, %188 : vector<24x128xf32>
    %cst_73 = arith.constant 0.284496725 : f32
    %197 = vector.broadcast %cst_73 : f32 to vector<24x128xf32>
    %198 = arith.subf %196, %197 : vector<24x128xf32>
    %199 = arith.mulf %198, %188 : vector<24x128xf32>
    %cst_74 = arith.constant 0.254829586 : f32
    %200 = vector.broadcast %cst_74 : f32 to vector<24x128xf32>
    %201 = arith.addf %199, %200 : vector<24x128xf32>
    %202 = arith.mulf %201, %188 : vector<24x128xf32>
    %cst_75 = arith.constant 0.000000e+00 : f32
    %203 = vector.broadcast %cst_75 : f32 to vector<24x128xf32>
    %204 = arith.subf %203, %183 : vector<24x128xf32>
    %205 = arith.mulf %204, %183 : vector<24x128xf32>
    %206 = math.exp %205 : vector<24x128xf32>
    %207 = arith.mulf %202, %206 : vector<24x128xf32>
    %cst_76 = arith.constant 1.000000e+00 : f32
    %208 = vector.broadcast %cst_76 : f32 to vector<24x128xf32>
    %209 = arith.subf %208, %207 : vector<24x128xf32>
    %210 = arith.mulf %182, %209 : vector<24x128xf32>
    %cst_77 = arith.constant 5.000000e-01 : f32
    %211 = vector.broadcast %cst_77 : f32 to vector<24x128xf32>
    %212 = arith.mulf %211, %175 : vector<24x128xf32>
    %cst_78 = arith.constant 1.000000e+00 : f32
    %213 = vector.broadcast %cst_78 : f32 to vector<24x128xf32>
    %214 = arith.addf %213, %210 : vector<24x128xf32>
    %215 = arith.mulf %212, %214 : vector<24x128xf32>
    %216 = arith.truncf %215 : vector<24x128xf32> to vector<24x128xbf16>
    %c0_79 = arith.constant 0 : index
    %c0_80 = arith.constant 0 : index
    %c0_81 = arith.constant 0 : index
    %217 = vector.load %arg11[%c0_79, %c0_80, %c0_81] : memref<2x128x64xbf16, #tpu.memory_space<vmem>>, vector<1x128x64xbf16>
    %218 = vector.shape_cast %217 : vector<1x128x64xbf16> to vector<128x64xbf16>
    %cst_82 = arith.constant dense<0.000000e+00> : vector<24x64xf32>
    %219 = tpu.matmul %216, %218, %cst_82 {dimension_numbers = #tpu.dot_dimension_numbers<[1], [0], [0], [1], [0, 0, 1, 1], [], []>} : vector<24x128xbf16>, vector<128x64xbf16>, vector<24x64xf32> -> vector<24x64xf32>
    %c0_83 = arith.constant 0 : index
    %c0_84 = arith.constant 0 : index
    %c0_85 = arith.constant 0 : index
    %220 = vector.load %arg12[%c0_83, %c0_84, %c0_85] : memref<2x1x64xf32, #tpu.memory_space<vmem>>, vector<1x1x64xf32>
    %221 = vector.shape_cast %220 : vector<1x1x64xf32> to vector<1x64xf32>
    %222 = vector.broadcast %221 : vector<1x64xf32> to vector<24x64xf32>
    %223 = arith.addf %219, %222 : vector<24x64xf32>
    %224 = arith.addf %145, %223 : vector<24x64xf32>
    %c1 = arith.constant 1 : index
    %c0_86 = arith.constant 0 : index
    %c0_87 = arith.constant 0 : index
    %225 = vector.load %arg4[%c1, %c0_86, %c0_87] : memref<2x4x64xf32, #tpu.memory_space<vmem>>, vector<1x4x64xf32>
    %226 = vector.shape_cast %225 : vector<1x4x64xf32> to vector<4x64xf32>
    %227 = vector.extract_strided_slice %226 {offsets = [0, 0], sizes = [1, 64], strides = [1, 1]} : vector<4x64xf32> to vector<1x64xf32>
    %228 = vector.extract_strided_slice %226 {offsets = [1, 0], sizes = [1, 64], strides = [1, 1]} : vector<4x64xf32> to vector<1x64xf32>
    %cst_88 = arith.constant dense<0.000000e+00> : vector<24xf32>
    %229 = vector.multi_reduction <add>, %224, %cst_88 [1] : vector<24x64xf32> to vector<24xf32>
    %230 = vector.shape_cast %229 : vector<24xf32> to vector<24x1xf32>
    %cst_89 = arith.constant 6.400000e+01 : f32
    %231 = vector.broadcast %cst_89 : f32 to vector<24x1xf32>
    %232 = arith.divf %230, %231 : vector<24x1xf32>
    %233 = vector.broadcast %232 : vector<24x1xf32> to vector<24x64xf32>
    %234 = arith.subf %224, %233 : vector<24x64xf32>
    %235 = arith.mulf %234, %234 : vector<24x64xf32>
    %cst_90 = arith.constant dense<0.000000e+00> : vector<24xf32>
    %236 = vector.multi_reduction <add>, %235, %cst_90 [1] : vector<24x64xf32> to vector<24xf32>
    %237 = vector.shape_cast %236 : vector<24xf32> to vector<24x1xf32>
    %cst_91 = arith.constant 6.400000e+01 : f32
    %238 = vector.broadcast %cst_91 : f32 to vector<24x1xf32>
    %239 = arith.divf %237, %238 : vector<24x1xf32>
    %cst_92 = arith.constant 9.99999997E-7 : f32
    %240 = vector.broadcast %cst_92 : f32 to vector<24x1xf32>
    %241 = arith.addf %239, %240 : vector<24x1xf32>
    %242 = math.rsqrt %241 : vector<24x1xf32>
    %243 = vector.broadcast %242 : vector<24x1xf32> to vector<24x64xf32>
    %244 = arith.mulf %234, %243 : vector<24x64xf32>
    %245 = vector.broadcast %227 : vector<1x64xf32> to vector<24x64xf32>
    %246 = arith.mulf %244, %245 : vector<24x64xf32>
    %247 = vector.broadcast %228 : vector<1x64xf32> to vector<24x64xf32>
    %248 = arith.addf %246, %247 : vector<24x64xf32>
    %249 = arith.truncf %248 : vector<24x64xf32> to vector<24x64xbf16>
    %c1_93 = arith.constant 1 : index
    %c0_94 = arith.constant 0 : index
    %c0_95 = arith.constant 0 : index
    %250 = vector.load %arg5[%c1_93, %c0_94, %c0_95] : memref<2x64x192xbf16, #tpu.memory_space<vmem>>, vector<1x64x192xbf16>
    %251 = vector.shape_cast %250 : vector<1x64x192xbf16> to vector<64x192xbf16>
    %cst_96 = arith.constant dense<0.000000e+00> : vector<24x192xf32>
    %252 = tpu.matmul %249, %251, %cst_96 {dimension_numbers = #tpu.dot_dimension_numbers<[1], [0], [0], [1], [0, 0, 1, 1], [], []>} : vector<24x64xbf16>, vector<64x192xbf16>, vector<24x192xf32> -> vector<24x192xf32>
    %c1_97 = arith.constant 1 : index
    %c0_98 = arith.constant 0 : index
    %c0_99 = arith.constant 0 : index
    %253 = vector.load %arg6[%c1_97, %c0_98, %c0_99] : memref<2x1x192xf32, #tpu.memory_space<vmem>>, vector<1x1x192xf32>
    %254 = vector.shape_cast %253 : vector<1x1x192xf32> to vector<1x192xf32>
    %255 = vector.broadcast %254 : vector<1x192xf32> to vector<24x192xf32>
    %256 = arith.addf %252, %255 : vector<24x192xf32>
    %c1_100 = arith.constant 1 : index
    %c0_101 = arith.constant 0 : index
    %c0_102 = arith.constant 0 : index
    %257 = vector.load %arg7[%c1_100, %c0_101, %c0_102] : memref<2x64x64xbf16, #tpu.memory_space<vmem>>, vector<1x64x64xbf16>
    %258 = vector.shape_cast %257 : vector<1x64x64xbf16> to vector<64x64xbf16>
    %cst_103 = arith.constant 0.000000e+00 : f32
    %259 = vector.broadcast %cst_103 : f32 to vector<24x64xf32>
    %260 = vector.extract_strided_slice %256 {offsets = [0, 0], sizes = [24, 16], strides = [1, 1]} : vector<24x192xf32> to vector<24x16xf32>
    %261 = vector.extract_strided_slice %256 {offsets = [0, 64], sizes = [24, 16], strides = [1, 1]} : vector<24x192xf32> to vector<24x16xf32>
    %262 = vector.extract_strided_slice %256 {offsets = [0, 128], sizes = [24, 16], strides = [1, 1]} : vector<24x192xf32> to vector<24x16xf32>
    %263 = arith.truncf %260 : vector<24x16xf32> to vector<24x16xbf16>
    %264 = arith.truncf %261 : vector<24x16xf32> to vector<24x16xbf16>
    %cst_104 = arith.constant dense<0.000000e+00> : vector<24x24xf32>
    %265 = tpu.matmul %263, %264, %cst_104 {dimension_numbers = #tpu.dot_dimension_numbers<[1], [1], [0], [0], [0, 0, 1, 0], [], []>} : vector<24x16xbf16>, vector<24x16xbf16>, vector<24x24xf32> -> vector<24x24xf32>
    %cst_105 = arith.constant -1.000000e+30 : f32
    %266 = vector.broadcast %cst_105 : f32 to vector<24x24xf32>
    %267 = arith.select %2, %265, %266 : vector<24x24xi1>, vector<24x24xf32>
    %cst_106 = arith.constant dense<0xFF800000> : vector<24xf32>
    %268 = vector.multi_reduction <maximumf>, %267, %cst_106 [1] : vector<24x24xf32> to vector<24xf32>
    %269 = vector.shape_cast %268 : vector<24xf32> to vector<24x1xf32>
    %270 = vector.broadcast %269 : vector<24x1xf32> to vector<24x24xf32>
    %271 = arith.subf %267, %270 : vector<24x24xf32>
    %272 = math.exp %271 : vector<24x24xf32>
    %cst_107 = arith.constant dense<0.000000e+00> : vector<24xf32>
    %273 = vector.multi_reduction <add>, %272, %cst_107 [1] : vector<24x24xf32> to vector<24xf32>
    %274 = vector.shape_cast %273 : vector<24xf32> to vector<24x1xf32>
    %275 = vector.broadcast %274 : vector<24x1xf32> to vector<24x24xf32>
    %276 = arith.divf %272, %275 : vector<24x24xf32>
    %277 = arith.truncf %276 : vector<24x24xf32> to vector<24x24xbf16>
    %278 = arith.truncf %262 : vector<24x16xf32> to vector<24x16xbf16>
    %cst_108 = arith.constant dense<0.000000e+00> : vector<24x16xf32>
    %279 = tpu.matmul %277, %278, %cst_108 {dimension_numbers = #tpu.dot_dimension_numbers<[1], [0], [0], [1], [0, 0, 1, 1], [], []>} : vector<24x24xbf16>, vector<24x16xbf16>, vector<24x16xf32> -> vector<24x16xf32>
    %280 = arith.truncf %279 : vector<24x16xf32> to vector<24x16xbf16>
    %281 = vector.extract_strided_slice %258 {offsets = [0, 0], sizes = [16, 64], strides = [1, 1]} : vector<64x64xbf16> to vector<16x64xbf16>
    %cst_109 = arith.constant dense<0.000000e+00> : vector<24x64xf32>
    %282 = tpu.matmul %280, %281, %cst_109 {dimension_numbers = #tpu.dot_dimension_numbers<[1], [0], [0], [1], [0, 0, 1, 1], [], []>} : vector<24x16xbf16>, vector<16x64xbf16>, vector<24x64xf32> -> vector<24x64xf32>
    %283 = arith.addf %259, %282 : vector<24x64xf32>
    %284 = vector.extract_strided_slice %256 {offsets = [0, 16], sizes = [24, 16], strides = [1, 1]} : vector<24x192xf32> to vector<24x16xf32>
    %285 = vector.extract_strided_slice %256 {offsets = [0, 80], sizes = [24, 16], strides = [1, 1]} : vector<24x192xf32> to vector<24x16xf32>
    %286 = vector.extract_strided_slice %256 {offsets = [0, 144], sizes = [24, 16], strides = [1, 1]} : vector<24x192xf32> to vector<24x16xf32>
    %287 = arith.truncf %284 : vector<24x16xf32> to vector<24x16xbf16>
    %288 = arith.truncf %285 : vector<24x16xf32> to vector<24x16xbf16>
    %cst_110 = arith.constant dense<0.000000e+00> : vector<24x24xf32>
    %289 = tpu.matmul %287, %288, %cst_110 {dimension_numbers = #tpu.dot_dimension_numbers<[1], [1], [0], [0], [0, 0, 1, 0], [], []>} : vector<24x16xbf16>, vector<24x16xbf16>, vector<24x24xf32> -> vector<24x24xf32>
    %cst_111 = arith.constant -1.000000e+30 : f32
    %290 = vector.broadcast %cst_111 : f32 to vector<24x24xf32>
    %291 = arith.select %2, %289, %290 : vector<24x24xi1>, vector<24x24xf32>
    %cst_112 = arith.constant dense<0xFF800000> : vector<24xf32>
    %292 = vector.multi_reduction <maximumf>, %291, %cst_112 [1] : vector<24x24xf32> to vector<24xf32>
    %293 = vector.shape_cast %292 : vector<24xf32> to vector<24x1xf32>
    %294 = vector.broadcast %293 : vector<24x1xf32> to vector<24x24xf32>
    %295 = arith.subf %291, %294 : vector<24x24xf32>
    %296 = math.exp %295 : vector<24x24xf32>
    %cst_113 = arith.constant dense<0.000000e+00> : vector<24xf32>
    %297 = vector.multi_reduction <add>, %296, %cst_113 [1] : vector<24x24xf32> to vector<24xf32>
    %298 = vector.shape_cast %297 : vector<24xf32> to vector<24x1xf32>
    %299 = vector.broadcast %298 : vector<24x1xf32> to vector<24x24xf32>
    %300 = arith.divf %296, %299 : vector<24x24xf32>
    %301 = arith.truncf %300 : vector<24x24xf32> to vector<24x24xbf16>
    %302 = arith.truncf %286 : vector<24x16xf32> to vector<24x16xbf16>
    %cst_114 = arith.constant dense<0.000000e+00> : vector<24x16xf32>
    %303 = tpu.matmul %301, %302, %cst_114 {dimension_numbers = #tpu.dot_dimension_numbers<[1], [0], [0], [1], [0, 0, 1, 1], [], []>} : vector<24x24xbf16>, vector<24x16xbf16>, vector<24x16xf32> -> vector<24x16xf32>
    %304 = arith.truncf %303 : vector<24x16xf32> to vector<24x16xbf16>
    %305 = vector.extract_strided_slice %258 {offsets = [16, 0], sizes = [16, 64], strides = [1, 1]} : vector<64x64xbf16> to vector<16x64xbf16>
    %cst_115 = arith.constant dense<0.000000e+00> : vector<24x64xf32>
    %306 = tpu.matmul %304, %305, %cst_115 {dimension_numbers = #tpu.dot_dimension_numbers<[1], [0], [0], [1], [0, 0, 1, 1], [], []>} : vector<24x16xbf16>, vector<16x64xbf16>, vector<24x64xf32> -> vector<24x64xf32>
    %307 = arith.addf %283, %306 : vector<24x64xf32>
    %308 = vector.extract_strided_slice %256 {offsets = [0, 32], sizes = [24, 16], strides = [1, 1]} : vector<24x192xf32> to vector<24x16xf32>
    %309 = vector.extract_strided_slice %256 {offsets = [0, 96], sizes = [24, 16], strides = [1, 1]} : vector<24x192xf32> to vector<24x16xf32>
    %310 = vector.extract_strided_slice %256 {offsets = [0, 160], sizes = [24, 16], strides = [1, 1]} : vector<24x192xf32> to vector<24x16xf32>
    %311 = arith.truncf %308 : vector<24x16xf32> to vector<24x16xbf16>
    %312 = arith.truncf %309 : vector<24x16xf32> to vector<24x16xbf16>
    %cst_116 = arith.constant dense<0.000000e+00> : vector<24x24xf32>
    %313 = tpu.matmul %311, %312, %cst_116 {dimension_numbers = #tpu.dot_dimension_numbers<[1], [1], [0], [0], [0, 0, 1, 0], [], []>} : vector<24x16xbf16>, vector<24x16xbf16>, vector<24x24xf32> -> vector<24x24xf32>
    %cst_117 = arith.constant -1.000000e+30 : f32
    %314 = vector.broadcast %cst_117 : f32 to vector<24x24xf32>
    %315 = arith.select %2, %313, %314 : vector<24x24xi1>, vector<24x24xf32>
    %cst_118 = arith.constant dense<0xFF800000> : vector<24xf32>
    %316 = vector.multi_reduction <maximumf>, %315, %cst_118 [1] : vector<24x24xf32> to vector<24xf32>
    %317 = vector.shape_cast %316 : vector<24xf32> to vector<24x1xf32>
    %318 = vector.broadcast %317 : vector<24x1xf32> to vector<24x24xf32>
    %319 = arith.subf %315, %318 : vector<24x24xf32>
    %320 = math.exp %319 : vector<24x24xf32>
    %cst_119 = arith.constant dense<0.000000e+00> : vector<24xf32>
    %321 = vector.multi_reduction <add>, %320, %cst_119 [1] : vector<24x24xf32> to vector<24xf32>
    %322 = vector.shape_cast %321 : vector<24xf32> to vector<24x1xf32>
    %323 = vector.broadcast %322 : vector<24x1xf32> to vector<24x24xf32>
    %324 = arith.divf %320, %323 : vector<24x24xf32>
    %325 = arith.truncf %324 : vector<24x24xf32> to vector<24x24xbf16>
    %326 = arith.truncf %310 : vector<24x16xf32> to vector<24x16xbf16>
    %cst_120 = arith.constant dense<0.000000e+00> : vector<24x16xf32>
    %327 = tpu.matmul %325, %326, %cst_120 {dimension_numbers = #tpu.dot_dimension_numbers<[1], [0], [0], [1], [0, 0, 1, 1], [], []>} : vector<24x24xbf16>, vector<24x16xbf16>, vector<24x16xf32> -> vector<24x16xf32>
    %328 = arith.truncf %327 : vector<24x16xf32> to vector<24x16xbf16>
    %329 = vector.extract_strided_slice %258 {offsets = [32, 0], sizes = [16, 64], strides = [1, 1]} : vector<64x64xbf16> to vector<16x64xbf16>
    %cst_121 = arith.constant dense<0.000000e+00> : vector<24x64xf32>
    %330 = tpu.matmul %328, %329, %cst_121 {dimension_numbers = #tpu.dot_dimension_numbers<[1], [0], [0], [1], [0, 0, 1, 1], [], []>} : vector<24x16xbf16>, vector<16x64xbf16>, vector<24x64xf32> -> vector<24x64xf32>
    %331 = arith.addf %307, %330 : vector<24x64xf32>
    %332 = vector.extract_strided_slice %256 {offsets = [0, 48], sizes = [24, 16], strides = [1, 1]} : vector<24x192xf32> to vector<24x16xf32>
    %333 = vector.extract_strided_slice %256 {offsets = [0, 112], sizes = [24, 16], strides = [1, 1]} : vector<24x192xf32> to vector<24x16xf32>
    %334 = vector.extract_strided_slice %256 {offsets = [0, 176], sizes = [24, 16], strides = [1, 1]} : vector<24x192xf32> to vector<24x16xf32>
    %335 = arith.truncf %332 : vector<24x16xf32> to vector<24x16xbf16>
    %336 = arith.truncf %333 : vector<24x16xf32> to vector<24x16xbf16>
    %cst_122 = arith.constant dense<0.000000e+00> : vector<24x24xf32>
    %337 = tpu.matmul %335, %336, %cst_122 {dimension_numbers = #tpu.dot_dimension_numbers<[1], [1], [0], [0], [0, 0, 1, 0], [], []>} : vector<24x16xbf16>, vector<24x16xbf16>, vector<24x24xf32> -> vector<24x24xf32>
    %cst_123 = arith.constant -1.000000e+30 : f32
    %338 = vector.broadcast %cst_123 : f32 to vector<24x24xf32>
    %339 = arith.select %2, %337, %338 : vector<24x24xi1>, vector<24x24xf32>
    %cst_124 = arith.constant dense<0xFF800000> : vector<24xf32>
    %340 = vector.multi_reduction <maximumf>, %339, %cst_124 [1] : vector<24x24xf32> to vector<24xf32>
    %341 = vector.shape_cast %340 : vector<24xf32> to vector<24x1xf32>
    %342 = vector.broadcast %341 : vector<24x1xf32> to vector<24x24xf32>
    %343 = arith.subf %339, %342 : vector<24x24xf32>
    %344 = math.exp %343 : vector<24x24xf32>
    %cst_125 = arith.constant dense<0.000000e+00> : vector<24xf32>
    %345 = vector.multi_reduction <add>, %344, %cst_125 [1] : vector<24x24xf32> to vector<24xf32>
    %346 = vector.shape_cast %345 : vector<24xf32> to vector<24x1xf32>
    %347 = vector.broadcast %346 : vector<24x1xf32> to vector<24x24xf32>
    %348 = arith.divf %344, %347 : vector<24x24xf32>
    %349 = arith.truncf %348 : vector<24x24xf32> to vector<24x24xbf16>
    %350 = arith.truncf %334 : vector<24x16xf32> to vector<24x16xbf16>
    %cst_126 = arith.constant dense<0.000000e+00> : vector<24x16xf32>
    %351 = tpu.matmul %349, %350, %cst_126 {dimension_numbers = #tpu.dot_dimension_numbers<[1], [0], [0], [1], [0, 0, 1, 1], [], []>} : vector<24x24xbf16>, vector<24x16xbf16>, vector<24x16xf32> -> vector<24x16xf32>
    %352 = arith.truncf %351 : vector<24x16xf32> to vector<24x16xbf16>
    %353 = vector.extract_strided_slice %258 {offsets = [48, 0], sizes = [16, 64], strides = [1, 1]} : vector<64x64xbf16> to vector<16x64xbf16>
    %cst_127 = arith.constant dense<0.000000e+00> : vector<24x64xf32>
    %354 = tpu.matmul %352, %353, %cst_127 {dimension_numbers = #tpu.dot_dimension_numbers<[1], [0], [0], [1], [0, 0, 1, 1], [], []>} : vector<24x16xbf16>, vector<16x64xbf16>, vector<24x64xf32> -> vector<24x64xf32>
    %355 = arith.addf %331, %354 : vector<24x64xf32>
    %356 = arith.addf %224, %355 : vector<24x64xf32>
    %c1_128 = arith.constant 1 : index
    %c0_129 = arith.constant 0 : index
    %c0_130 = arith.constant 0 : index
    %357 = vector.load %arg8[%c1_128, %c0_129, %c0_130] : memref<2x1x64xf32, #tpu.memory_space<vmem>>, vector<1x1x64xf32>
    %358 = vector.shape_cast %357 : vector<1x1x64xf32> to vector<1x64xf32>
    %359 = vector.broadcast %358 : vector<1x64xf32> to vector<24x64xf32>
    %360 = arith.addf %356, %359 : vector<24x64xf32>
    %361 = vector.extract_strided_slice %226 {offsets = [2, 0], sizes = [1, 64], strides = [1, 1]} : vector<4x64xf32> to vector<1x64xf32>
    %362 = vector.extract_strided_slice %226 {offsets = [3, 0], sizes = [1, 64], strides = [1, 1]} : vector<4x64xf32> to vector<1x64xf32>
    %cst_131 = arith.constant dense<0.000000e+00> : vector<24xf32>
    %363 = vector.multi_reduction <add>, %360, %cst_131 [1] : vector<24x64xf32> to vector<24xf32>
    %364 = vector.shape_cast %363 : vector<24xf32> to vector<24x1xf32>
    %cst_132 = arith.constant 6.400000e+01 : f32
    %365 = vector.broadcast %cst_132 : f32 to vector<24x1xf32>
    %366 = arith.divf %364, %365 : vector<24x1xf32>
    %367 = vector.broadcast %366 : vector<24x1xf32> to vector<24x64xf32>
    %368 = arith.subf %360, %367 : vector<24x64xf32>
    %369 = arith.mulf %368, %368 : vector<24x64xf32>
    %cst_133 = arith.constant dense<0.000000e+00> : vector<24xf32>
    %370 = vector.multi_reduction <add>, %369, %cst_133 [1] : vector<24x64xf32> to vector<24xf32>
    %371 = vector.shape_cast %370 : vector<24xf32> to vector<24x1xf32>
    %cst_134 = arith.constant 6.400000e+01 : f32
    %372 = vector.broadcast %cst_134 : f32 to vector<24x1xf32>
    %373 = arith.divf %371, %372 : vector<24x1xf32>
    %cst_135 = arith.constant 9.99999997E-7 : f32
    %374 = vector.broadcast %cst_135 : f32 to vector<24x1xf32>
    %375 = arith.addf %373, %374 : vector<24x1xf32>
    %376 = math.rsqrt %375 : vector<24x1xf32>
    %377 = vector.broadcast %376 : vector<24x1xf32> to vector<24x64xf32>
    %378 = arith.mulf %368, %377 : vector<24x64xf32>
    %379 = vector.broadcast %361 : vector<1x64xf32> to vector<24x64xf32>
    %380 = arith.mulf %378, %379 : vector<24x64xf32>
    %381 = vector.broadcast %362 : vector<1x64xf32> to vector<24x64xf32>
    %382 = arith.addf %380, %381 : vector<24x64xf32>
    %383 = arith.truncf %382 : vector<24x64xf32> to vector<24x64xbf16>
    %c1_136 = arith.constant 1 : index
    %c0_137 = arith.constant 0 : index
    %c0_138 = arith.constant 0 : index
    %384 = vector.load %arg9[%c1_136, %c0_137, %c0_138] : memref<2x64x128xbf16, #tpu.memory_space<vmem>>, vector<1x64x128xbf16>
    %385 = vector.shape_cast %384 : vector<1x64x128xbf16> to vector<64x128xbf16>
    %cst_139 = arith.constant dense<0.000000e+00> : vector<24x128xf32>
    %386 = tpu.matmul %383, %385, %cst_139 {dimension_numbers = #tpu.dot_dimension_numbers<[1], [0], [0], [1], [0, 0, 1, 1], [], []>} : vector<24x64xbf16>, vector<64x128xbf16>, vector<24x128xf32> -> vector<24x128xf32>
    %c1_140 = arith.constant 1 : index
    %c0_141 = arith.constant 0 : index
    %c0_142 = arith.constant 0 : index
    %387 = vector.load %arg10[%c1_140, %c0_141, %c0_142] : memref<2x1x128xf32, #tpu.memory_space<vmem>>, vector<1x1x128xf32>
    %388 = vector.shape_cast %387 : vector<1x1x128xf32> to vector<1x128xf32>
    %389 = vector.broadcast %388 : vector<1x128xf32> to vector<24x128xf32>
    %390 = arith.addf %386, %389 : vector<24x128xf32>
    %cst_143 = arith.constant 0.707106769 : f32
    %391 = vector.broadcast %cst_143 : f32 to vector<24x128xf32>
    %392 = arith.mulf %390, %391 : vector<24x128xf32>
    %cst_144 = arith.constant 0.000000e+00 : f32
    %393 = vector.broadcast %cst_144 : f32 to vector<24x128xf32>
    %394 = arith.cmpf oge, %392, %393 : vector<24x128xf32>
    %cst_145 = arith.constant 1.000000e+00 : f32
    %cst_146 = arith.constant -1.000000e+00 : f32
    %395 = vector.broadcast %cst_145 : f32 to vector<24x128xf32>
    %396 = vector.broadcast %cst_146 : f32 to vector<24x128xf32>
    %397 = arith.select %394, %395, %396 : vector<24x128xi1>, vector<24x128xf32>
    %398 = math.absf %392 : vector<24x128xf32>
    %cst_147 = arith.constant 0.327591091 : f32
    %399 = vector.broadcast %cst_147 : f32 to vector<24x128xf32>
    %400 = arith.mulf %399, %398 : vector<24x128xf32>
    %cst_148 = arith.constant 1.000000e+00 : f32
    %401 = vector.broadcast %cst_148 : f32 to vector<24x128xf32>
    %402 = arith.addf %401, %400 : vector<24x128xf32>
    %403 = tpu.reciprocal %402 {approx = true} : vector<24x128xf32> -> vector<24x128xf32>
    %cst_149 = arith.constant 1.06140542 : f32
    %404 = vector.broadcast %cst_149 : f32 to vector<24x128xf32>
    %405 = arith.mulf %404, %403 : vector<24x128xf32>
    %cst_150 = arith.constant 1.45315206 : f32
    %406 = vector.broadcast %cst_150 : f32 to vector<24x128xf32>
    %407 = arith.subf %405, %406 : vector<24x128xf32>
    %408 = arith.mulf %407, %403 : vector<24x128xf32>
    %cst_151 = arith.constant 1.42141378 : f32
    %409 = vector.broadcast %cst_151 : f32 to vector<24x128xf32>
    %410 = arith.addf %408, %409 : vector<24x128xf32>
    %411 = arith.mulf %410, %403 : vector<24x128xf32>
    %cst_152 = arith.constant 0.284496725 : f32
    %412 = vector.broadcast %cst_152 : f32 to vector<24x128xf32>
    %413 = arith.subf %411, %412 : vector<24x128xf32>
    %414 = arith.mulf %413, %403 : vector<24x128xf32>
    %cst_153 = arith.constant 0.254829586 : f32
    %415 = vector.broadcast %cst_153 : f32 to vector<24x128xf32>
    %416 = arith.addf %414, %415 : vector<24x128xf32>
    %417 = arith.mulf %416, %403 : vector<24x128xf32>
    %cst_154 = arith.constant 0.000000e+00 : f32
    %418 = vector.broadcast %cst_154 : f32 to vector<24x128xf32>
    %419 = arith.subf %418, %398 : vector<24x128xf32>
    %420 = arith.mulf %419, %398 : vector<24x128xf32>
    %421 = math.exp %420 : vector<24x128xf32>
    %422 = arith.mulf %417, %421 : vector<24x128xf32>
    %cst_155 = arith.constant 1.000000e+00 : f32
    %423 = vector.broadcast %cst_155 : f32 to vector<24x128xf32>
    %424 = arith.subf %423, %422 : vector<24x128xf32>
    %425 = arith.mulf %397, %424 : vector<24x128xf32>
    %cst_156 = arith.constant 5.000000e-01 : f32
    %426 = vector.broadcast %cst_156 : f32 to vector<24x128xf32>
    %427 = arith.mulf %426, %390 : vector<24x128xf32>
    %cst_157 = arith.constant 1.000000e+00 : f32
    %428 = vector.broadcast %cst_157 : f32 to vector<24x128xf32>
    %429 = arith.addf %428, %425 : vector<24x128xf32>
    %430 = arith.mulf %427, %429 : vector<24x128xf32>
    %431 = arith.truncf %430 : vector<24x128xf32> to vector<24x128xbf16>
    %c1_158 = arith.constant 1 : index
    %c0_159 = arith.constant 0 : index
    %c0_160 = arith.constant 0 : index
    %432 = vector.load %arg11[%c1_158, %c0_159, %c0_160] : memref<2x128x64xbf16, #tpu.memory_space<vmem>>, vector<1x128x64xbf16>
    %433 = vector.shape_cast %432 : vector<1x128x64xbf16> to vector<128x64xbf16>
    %cst_161 = arith.constant dense<0.000000e+00> : vector<24x64xf32>
    %434 = tpu.matmul %431, %433, %cst_161 {dimension_numbers = #tpu.dot_dimension_numbers<[1], [0], [0], [1], [0, 0, 1, 1], [], []>} : vector<24x128xbf16>, vector<128x64xbf16>, vector<24x64xf32> -> vector<24x64xf32>
    %c1_162 = arith.constant 1 : index
    %c0_163 = arith.constant 0 : index
    %c0_164 = arith.constant 0 : index
    %435 = vector.load %arg12[%c1_162, %c0_163, %c0_164] : memref<2x1x64xf32, #tpu.memory_space<vmem>>, vector<1x1x64xf32>
    %436 = vector.shape_cast %435 : vector<1x1x64xf32> to vector<1x64xf32>
    %437 = vector.broadcast %436 : vector<1x64xf32> to vector<24x64xf32>
    %438 = arith.addf %434, %437 : vector<24x64xf32>
    %439 = arith.addf %360, %438 : vector<24x64xf32>
    %c0_165 = arith.constant 0 : index
    %c0_166 = arith.constant 0 : index
    %440 = vector.load %arg13[%c0_165, %c0_166] : memref<2x64xf32, #tpu.memory_space<vmem>>, vector<1x64xf32>
    %c1_167 = arith.constant 1 : index
    %c0_168 = arith.constant 0 : index
    %441 = vector.load %arg13[%c1_167, %c0_168] : memref<2x64xf32, #tpu.memory_space<vmem>>, vector<1x64xf32>
    %cst_169 = arith.constant dense<0.000000e+00> : vector<24xf32>
    %442 = vector.multi_reduction <add>, %439, %cst_169 [1] : vector<24x64xf32> to vector<24xf32>
    %443 = vector.shape_cast %442 : vector<24xf32> to vector<24x1xf32>
    %cst_170 = arith.constant 6.400000e+01 : f32
    %444 = vector.broadcast %cst_170 : f32 to vector<24x1xf32>
    %445 = arith.divf %443, %444 : vector<24x1xf32>
    %446 = vector.broadcast %445 : vector<24x1xf32> to vector<24x64xf32>
    %447 = arith.subf %439, %446 : vector<24x64xf32>
    %448 = arith.mulf %447, %447 : vector<24x64xf32>
    %cst_171 = arith.constant dense<0.000000e+00> : vector<24xf32>
    %449 = vector.multi_reduction <add>, %448, %cst_171 [1] : vector<24x64xf32> to vector<24xf32>
    %450 = vector.shape_cast %449 : vector<24xf32> to vector<24x1xf32>
    %cst_172 = arith.constant 6.400000e+01 : f32
    %451 = vector.broadcast %cst_172 : f32 to vector<24x1xf32>
    %452 = arith.divf %450, %451 : vector<24x1xf32>
    %cst_173 = arith.constant 9.99999997E-7 : f32
    %453 = vector.broadcast %cst_173 : f32 to vector<24x1xf32>
    %454 = arith.addf %452, %453 : vector<24x1xf32>
    %455 = math.rsqrt %454 : vector<24x1xf32>
    %456 = vector.broadcast %455 : vector<24x1xf32> to vector<24x64xf32>
    %457 = arith.mulf %447, %456 : vector<24x64xf32>
    %458 = vector.broadcast %440 : vector<1x64xf32> to vector<24x64xf32>
    %459 = arith.mulf %457, %458 : vector<24x64xf32>
    %460 = vector.broadcast %441 : vector<1x64xf32> to vector<24x64xf32>
    %461 = arith.addf %459, %460 : vector<24x64xf32>
    %462 = vector.extract_strided_slice %461 {offsets = [16, 0], sizes = [1, 64], strides = [1, 1]} : vector<24x64xf32> to vector<1x64xf32>
    %463 = arith.truncf %462 : vector<1x64xf32> to vector<1x64xbf16>
    %c0_174 = arith.constant 0 : index
    %c0_175 = arith.constant 0 : index
    %464 = vector.load %arg14[%c0_174, %c0_175] : memref<64x32xbf16, #tpu.memory_space<vmem>>, vector<64x32xbf16>
    %cst_176 = arith.constant dense<0.000000e+00> : vector<1x32xf32>
    %465 = tpu.matmul %463, %464, %cst_176 {dimension_numbers = #tpu.dot_dimension_numbers<[1], [0], [0], [1], [0, 0, 1, 1], [], []>} : vector<1x64xbf16>, vector<64x32xbf16>, vector<1x32xf32> -> vector<1x32xf32>
    %c0_177 = arith.constant 0 : index
    %c0_178 = arith.constant 0 : index
    %466 = vector.load %arg15[%c0_177, %c0_178] : memref<1x32xf32, #tpu.memory_space<vmem>>, vector<1x32xf32>
    %467 = arith.addf %465, %466 : vector<1x32xf32>
    %c0_179 = arith.constant 0 : index
    %c0_180 = arith.constant 0 : index
    %c0_181 = arith.constant 0 : index
    %468 = vector.load %arg16[%c0_179, %c0_180, %c0_181] : memref<1x1x32xf32, #tpu.memory_space<vmem>>, vector<1x1x32xf32>
    %469 = vector.shape_cast %468 : vector<1x1x32xf32> to vector<1x32xf32>
    %470 = vector.shape_cast %467 : vector<1x32xf32> to vector<1x1x32xf32>
    tpu.vector_store %arg16[%c0_179, %c0_180, %c0_181], %470 {strides = array<i32>} : memref<1x1x32xf32, #tpu.memory_space<vmem>>, vector<1x1x32xf32>,
    return
  }
  func.func @transform_0(%arg0: i32) -> (i32, i32, i32) {
    %c0_i32 = arith.constant 0 : i32
    %c0_i32_0 = arith.constant 0 : i32
    %c0_i32_1 = arith.constant 0 : i32
    return %arg0, %c0_i32, %c0_i32_0 : i32, i32, i32
  }
  func.func @transform_1(%arg0: i32) -> (i32, i32) {
    %c0_i32 = arith.constant 0 : i32
    %c0_i32_0 = arith.constant 0 : i32
    %c0_i32_1 = arith.constant 0 : i32
    return %c0_i32, %c0_i32_0 : i32, i32
  }
  func.func @transform_2(%arg0: i32) -> (i32, i32) {
    %c0_i32 = arith.constant 0 : i32
    %c0_i32_0 = arith.constant 0 : i32
    %c0_i32_1 = arith.constant 0 : i32
    return %c0_i32, %c0_i32_0 : i32, i32
  }
  func.func @transform_3(%arg0: i32) -> (i32, i32, i32) {
    %c0_i32 = arith.constant 0 : i32
    %c0_i32_0 = arith.constant 0 : i32
    %c0_i32_1 = arith.constant 0 : i32
    %c0_i32_2 = arith.constant 0 : i32
    return %c0_i32, %c0_i32_0, %c0_i32_1 : i32, i32, i32
  }
  func.func @transform_4(%arg0: i32) -> (i32, i32, i32) {
    %c0_i32 = arith.constant 0 : i32
    %c0_i32_0 = arith.constant 0 : i32
    %c0_i32_1 = arith.constant 0 : i32
    %c0_i32_2 = arith.constant 0 : i32
    return %c0_i32, %c0_i32_0, %c0_i32_1 : i32, i32, i32
  }
  func.func @transform_5(%arg0: i32) -> (i32, i32, i32) {
    %c0_i32 = arith.constant 0 : i32
    %c0_i32_0 = arith.constant 0 : i32
    %c0_i32_1 = arith.constant 0 : i32
    %c0_i32_2 = arith.constant 0 : i32
    return %c0_i32, %c0_i32_0, %c0_i32_1 : i32, i32, i32
  }
  func.func @transform_6(%arg0: i32) -> (i32, i32, i32) {
    %c0_i32 = arith.constant 0 : i32
    %c0_i32_0 = arith.constant 0 : i32
    %c0_i32_1 = arith.constant 0 : i32
    %c0_i32_2 = arith.constant 0 : i32
    return %c0_i32, %c0_i32_0, %c0_i32_1 : i32, i32, i32
  }
  func.func @transform_7(%arg0: i32) -> (i32, i32, i32) {
    %c0_i32 = arith.constant 0 : i32
    %c0_i32_0 = arith.constant 0 : i32
    %c0_i32_1 = arith.constant 0 : i32
    %c0_i32_2 = arith.constant 0 : i32
    return %c0_i32, %c0_i32_0, %c0_i32_1 : i32, i32, i32
  }
  func.func @transform_8(%arg0: i32) -> (i32, i32, i32) {
    %c0_i32 = arith.constant 0 : i32
    %c0_i32_0 = arith.constant 0 : i32
    %c0_i32_1 = arith.constant 0 : i32
    %c0_i32_2 = arith.constant 0 : i32
    return %c0_i32, %c0_i32_0, %c0_i32_1 : i32, i32, i32
  }
  func.func @transform_9(%arg0: i32) -> (i32, i32, i32) {
    %c0_i32 = arith.constant 0 : i32
    %c0_i32_0 = arith.constant 0 : i32
    %c0_i32_1 = arith.constant 0 : i32
    %c0_i32_2 = arith.constant 0 : i32
    return %c0_i32, %c0_i32_0, %c0_i32_1 : i32, i32, i32
  }
  func.func @transform_10(%arg0: i32) -> (i32, i32, i32) {
    %c0_i32 = arith.constant 0 : i32
    %c0_i32_0 = arith.constant 0 : i32
    %c0_i32_1 = arith.constant 0 : i32
    %c0_i32_2 = arith.constant 0 : i32
    return %c0_i32, %c0_i32_0, %c0_i32_1 : i32, i32, i32
  }
  func.func @transform_11(%arg0: i32) -> (i32, i32, i32) {
    %c0_i32 = arith.constant 0 : i32
    %c0_i32_0 = arith.constant 0 : i32
    %c0_i32_1 = arith.constant 0 : i32
    %c0_i32_2 = arith.constant 0 : i32
    return %c0_i32, %c0_i32_0, %c0_i32_1 : i32, i32, i32
  }
  func.func @transform_12(%arg0: i32) -> (i32, i32) {
    %c0_i32 = arith.constant 0 : i32
    %c0_i32_0 = arith.constant 0 : i32
    %c0_i32_1 = arith.constant 0 : i32
    return %c0_i32, %c0_i32_0 : i32, i32
  }
  func.func @transform_13(%arg0: i32) -> (i32, i32) {
    %c0_i32 = arith.constant 0 : i32
    %c0_i32_0 = arith.constant 0 : i32
    %c0_i32_1 = arith.constant 0 : i32
    return %c0_i32, %c0_i32_0 : i32, i32
  }
  func.func @transform_14(%arg0: i32) -> (i32, i32) {
    %c0_i32 = arith.constant 0 : i32
    %c0_i32_0 = arith.constant 0 : i32
    %c0_i32_1 = arith.constant 0 : i32
    return %c0_i32, %c0_i32_0 : i32, i32
  }
  func.func @transform_15(%arg0: i32) -> (i32, i32, i32) {
    %c0_i32 = arith.constant 0 : i32
    %c0_i32_0 = arith.constant 0 : i32
    %c0_i32_1 = arith.constant 0 : i32
    return %arg0, %c0_i32, %c0_i32_0 : i32, i32, i32
  }
}

</mosaic_0001>

<llo_original>
// kernel: vit_forward.1
$region0: #{vit_forward.1}
  #allocation0 [shape = 'u32[]', space=smem, size = 0x4, offset = 0x4, fixed_abs, tag = 'smem constant byte address 0x4 - core index']
  #allocation1 [shape = 'u32[144,128]{1,0:T(1,128)}', space=vmem, size = 0x12000, scoped, tag = 'internal scratch']
  %s0 = inlined_call_operand.vmem [shape: f32[2,24,64], index: 0, kind: input, shape index: {}]
  %s1 = inlined_call_operand.vmem [shape: bf16[64,64], index: 1, kind: input, shape index: {}]
  %s2 = inlined_call_operand.vmem [shape: f32[24,64], index: 2, kind: input, shape index: {}]
  %s3 = inlined_call_operand.vmem [shape: f32[2,4,64], index: 3, kind: input, shape index: {}]
  %s4 = inlined_call_operand.vmem [shape: bf16[2,64,192], index: 4, kind: input, shape index: {}]
  %s5 = inlined_call_operand.vmem [shape: f32[2,1,192], index: 5, kind: input, shape index: {}]
  %s6 = inlined_call_operand.vmem [shape: bf16[2,64,64], index: 6, kind: input, shape index: {}]
  %s7 = inlined_call_operand.vmem [shape: f32[2,1,64], index: 7, kind: input, shape index: {}]
  %s8 = inlined_call_operand.vmem [shape: bf16[2,64,128], index: 8, kind: input, shape index: {}]
  %s9 = inlined_call_operand.vmem [shape: f32[2,1,128], index: 9, kind: input, shape index: {}]
  %s10 = inlined_call_operand.vmem [shape: bf16[2,128,64], index: 10, kind: input, shape index: {}]
  %s11 = inlined_call_operand.vmem [shape: f32[2,1,64], index: 11, kind: input, shape index: {}]
  %s12 = inlined_call_operand.vmem [shape: f32[2,64], index: 12, kind: input, shape index: {}]
  %s13 = inlined_call_operand.vmem [shape: bf16[64,32], index: 13, kind: input, shape index: {}]
  %s14 = inlined_call_operand.vmem [shape: f32[1,32], index: 14, kind: input, shape index: {}]
  %s15 = inlined_call_operand.hbm [shape: f32[2,1,32], index: 15, kind: output, shape index: {}]
  %s16 = sld [smem:[#allocation0]]
  $region93: #{vit_forward.1} parent=0
    _
  %s18 = ssub.s32 1, %s16
  %s19 = scalar_select 0, %s18, %s16
  $region1: #{vit_forward.1} parent=0
    #allocation2 [shape = 'u8[1024]{0}', space=vmem, size = 0x400, scoped, tag = 'output window, operand 0']
    #allocation3 [shape = 's32[2]{0}', space=sflag, size = 0x8, scoped, tag = 'scoped memory for vit_forward.1']
    %20 = vsyncpa [#allocation3], 0
    %s21 = scalar_lea.sflag [#allocation3], 1
    %22 = vsyncpa %s21, 0
    loop: start=0, step=1, limit=4
    $region2: #{vit_forward.1} parent=1 // loop_pre_header
      _
    $region3: #{vit_forward.1} parent=1 // loop_header
      %s24 = sphi 0, %s28
      %p25 = scmp.ge.s32.totalorder %s24, 4
      %s34 = sphi 0, %s36
      %s37 = sphi 0, %s34
      %s38 = sphi 0, %s37
      %s54 = sphi 0, %s38
      %s58 = sphi 0, %s58
      %s60 = sphi 0, %s58
      %s61 = sphi 0, %s60
      %s75 = sphi 0, %s61
      %s79 = sphi 0, %s79
      %s81 = sphi 0, %s79
      %s82 = sphi 0, %s81
      %s96 = sphi 0, %s82
      %s100 = sphi 0, %s100
      %s102 = sphi 0, %s100
      %s103 = sphi 0, %s102
      %s117 = sphi 0, %s103
      %s121 = sphi 0, %s121
      %s123 = sphi 0, %s121
      %s124 = sphi 0, %s123
      %s138 = sphi 0, %s124
      %s142 = sphi 0, %s142
      %s144 = sphi 0, %s142
      %s145 = sphi 0, %s144
      %s159 = sphi 0, %s145
      %s163 = sphi 0, %s163
      %s165 = sphi 0, %s163
      %s166 = sphi 0, %s165
      %s180 = sphi 0, %s166
      %s184 = sphi 0, %s184
      %s186 = sphi 0, %s184
      %s187 = sphi 0, %s186
      %s201 = sphi 0, %s187
      %s205 = sphi 0, %s205
      %s207 = sphi 0, %s205
      %s208 = sphi 0, %s207
      %s222 = sphi 0, %s208
      %s226 = sphi 0, %s226
      %s228 = sphi 0, %s226
      %s229 = sphi 0, %s228
      %s243 = sphi 0, %s229
      %s247 = sphi 0, %s247
      %s249 = sphi 0, %s247
      %s250 = sphi 0, %s249
      %s264 = sphi 0, %s250
      %s268 = sphi 0, %s268
      %s270 = sphi 0, %s268
      %s271 = sphi 0, %s270
      %s285 = sphi 0, %s271
      %s289 = sphi 0, %s289
      %s291 = sphi 0, %s289
      %s292 = sphi 0, %s291
      %s306 = sphi 0, %s292
      %s310 = sphi 0, %s310
      %s312 = sphi 0, %s310
      %s313 = sphi 0, %s312
      %s327 = sphi 0, %s313
      %s331 = sphi 0, %s331
      %s333 = sphi 0, %s331
      %s334 = sphi 0, %s333
      %s348 = sphi 0, %s334
      %s354 = sphi 0, %s356
      %s357 = sphi 0, %s354
      %s358 = sphi 0, %s357
      %s374 = sphi 0, %s358
    $region4: #{vit_forward.1} parent=1 // loop_header_branch
      %27 = sbr.rel (%p25) target = $region8
    $region5: #{vit_forward.1} parent=1 // loop_body
      %s29 = ssub.s32 %s24, 1
      %s30 = ssub.s32 %s24, 2
      %s31 = sadd.s32 %s24, 1
      %s32 = ssub.s32 %s24, %s31
      %p33 = scmp.eq.s32.totalorder %s32, 0
      %s35 = sadd.s32 %s34, 1
      %s36 = scalar_select %p33, %s34, %s35
      %p39 = pneg %p33
      %p40 = scmp.eq.s32.totalorder %s24, 1
      %p41 = por %p39, %p40
      %p42 = scmp.ne.s32.totalorder %s34, %s37
      %p43 = scmp.eq.s32.totalorder %s24, 0
      %p44 = por %p42, %p43
      %p45 = scmp.ne.s32.totalorder %s34, %s37
      %p46 = scmp.eq.s32.totalorder %s29, 1
      %p47 = por %p45, %p46
      %p48 = scmp.ne.s32.totalorder %s37, %s38
      %p49 = scmp.eq.s32.totalorder %s29, 0
      %p50 = por %p48, %p49
      %p51 = scmp.ne.s32.totalorder %s37, %s38
      %p52 = scmp.eq.s32.totalorder %s30, 1
      %p53 = por %p51, %p52
      %p55 = scmp.ne.s32.totalorder %s38, %s54
      %p56 = scmp.eq.s32.totalorder %s30, 0
      %p57 = por %p55, %p56
      %s59 = sadd.s32 %s58, 1
      %p62 = scmp.eq.s32.totalorder %s24, 1
      %p63 = scmp.ne.s32.totalorder %s58, %s60
      %p64 = scmp.eq.s32.totalorder %s24, 0
      %p65 = por %p63, %p64
      %p66 = scmp.ne.s32.totalorder %s58, %s60
      %p67 = scmp.eq.s32.totalorder %s29, 1
      %p68 = por %p66, %p67
      %p69 = scmp.ne.s32.totalorder %s60, %s61
      %p70 = scmp.eq.s32.totalorder %s29, 0
      %p71 = por %p69, %p70
      %p72 = scmp.ne.s32.totalorder %s60, %s61
      %p73 = scmp.eq.s32.totalorder %s30, 1
      %p74 = por %p72, %p73
      %p76 = scmp.ne.s32.totalorder %s61, %s75
      %p77 = scmp.eq.s32.totalorder %s30, 0
      %p78 = por %p76, %p77
      %s80 = sadd.s32 %s79, 1
      %p83 = scmp.eq.s32.totalorder %s24, 1
      %p84 = scmp.ne.s32.totalorder %s79, %s81
      %p85 = scmp.eq.s32.totalorder %s24, 0
      %p86 = por %p84, %p85
      %p87 = scmp.ne.s32.totalorder %s79, %s81
      %p88 = scmp.eq.s32.totalorder %s29, 1
      %p89 = por %p87, %p88
      %p90 = scmp.ne.s32.totalorder %s81, %s82
      %p91 = scmp.eq.s32.totalorder %s29, 0
      %p92 = por %p90, %p91
      %p93 = scmp.ne.s32.totalorder %s81, %s82
      %p94 = scmp.eq.s32.totalorder %s30, 1
      %p95 = por %p93, %p94
      %p97 = scmp.ne.s32.totalorder %s82, %s96
      %p98 = scmp.eq.s32.totalorder %s30, 0
      %p99 = por %p97, %p98
      %s101 = sadd.s32 %s100, 1
      %p104 = scmp.eq.s32.totalorder %s24, 1
      %p105 = scmp.ne.s32.totalorder %s100, %s102
      %p106 = scmp.eq.s32.totalorder %s24, 0
      %p107 = por %p105, %p106
      %p108 = scmp.ne.s32.totalorder %s100, %s102
      %p109 = scmp.eq.s32.totalorder %s29, 1
      %p110 = por %p108, %p109
      %p111 = scmp.ne.s32.totalorder %s102, %s103
      %p112 = scmp.eq.s32.totalorder %s29, 0
      %p113 = por %p111, %p112
      %p114 = scmp.ne.s32.totalorder %s102, %s103
      %p115 = scmp.eq.s32.totalorder %s30, 1
      %p116 = por %p114, %p115
      %p118 = scmp.ne.s32.totalorder %s103, %s117
      %p119 = scmp.eq.s32.totalorder %s30, 0
      %p120 = por %p118, %p119
      %s122 = sadd.s32 %s121, 1
      %p125 = scmp.eq.s32.totalorder %s24, 1
      %p126 = scmp.ne.s32.totalorder %s121, %s123
      %p127 = scmp.eq.s32.totalorder %s24, 0
      %p128 = por %p126, %p127
      %p129 = scmp.ne.s32.totalorder %s121, %s123
      %p130 = scmp.eq.s32.totalorder %s29, 1
      %p131 = por %p129, %p130
      %p132 = scmp.ne.s32.totalorder %s123, %s124
      %p133 = scmp.eq.s32.totalorder %s29, 0
      %p134 = por %p132, %p133
      %p135 = scmp.ne.s32.totalorder %s123, %s124
      %p136 = scmp.eq.s32.totalorder %s30, 1
      %p137 = por %p135, %p136
      %p139 = scmp.ne.s32.totalorder %s124, %s138
      %p140 = scmp.eq.s32.totalorder %s30, 0
      %p141 = por %p139, %p140
      %s143 = sadd.s32 %s142, 1
      %p146 = scmp.eq.s32.totalorder %s24, 1
      %p147 = scmp.ne.s32.totalorder %s142, %s144
      %p148 = scmp.eq.s32.totalorder %s24, 0
      %p149 = por %p147, %p148
      %p150 = scmp.ne.s32.totalorder %s142, %s144
      %p151 = scmp.eq.s32.totalorder %s29, 1
      %p152 = por %p150, %p151
      %p153 = scmp.ne.s32.totalorder %s144, %s145
      %p154 = scmp.eq.s32.totalorder %s29, 0
      %p155 = por %p153, %p154
      %p156 = scmp.ne.s32.totalorder %s144, %s145
      %p157 = scmp.eq.s32.totalorder %s30, 1
      %p158 = por %p156, %p157
      %p160 = scmp.ne.s32.totalorder %s145, %s159
      %p161 = scmp.eq.s32.totalorder %s30, 0
      %p162 = por %p160, %p161
      %s164 = sadd.s32 %s163, 1
      %p167 = scmp.eq.s32.totalorder %s24, 1
      %p168 = scmp.ne.s32.totalorder %s163, %s165
      %p169 = scmp.eq.s32.totalorder %s24, 0
      %p170 = por %p168, %p169
      %p171 = scmp.ne.s32.totalorder %s163, %s165
      %p172 = scmp.eq.s32.totalorder %s29, 1
      %p173 = por %p171, %p172
      %p174 = scmp.ne.s32.totalorder %s165, %s166
      %p175 = scmp.eq.s32.totalorder %s29, 0
      %p176 = por %p174, %p175
      %p177 = scmp.ne.s32.totalorder %s165, %s166
      %p178 = scmp.eq.s32.totalorder %s30, 1
      %p179 = por %p177, %p178
      %p181 = scmp.ne.s32.totalorder %s166, %s180
      %p182 = scmp.eq.s32.totalorder %s30, 0
      %p183 = por %p181, %p182
      %s185 = sadd.s32 %s184, 1
      %p188 = scmp.eq.s32.totalorder %s24, 1
      %p189 = scmp.ne.s32.totalorder %s184, %s186
      %p190 = scmp.eq.s32.totalorder %s24, 0
      %p191 = por %p189, %p190
      %p192 = scmp.ne.s32.totalorder %s184, %s186
      %p193 = scmp.eq.s32.totalorder %s29, 1
      %p194 = por %p192, %p193
      %p195 = scmp.ne.s32.totalorder %s186, %s187
      %p196 = scmp.eq.s32.totalorder %s29, 0
      %p197 = por %p195, %p196
      %p198 = scmp.ne.s32.totalorder %s186, %s187
      %p199 = scmp.eq.s32.totalorder %s30, 1
      %p200 = por %p198, %p199
      %p202 = scmp.ne.s32.totalorder %s187, %s201
      %p203 = scmp.eq.s32.totalorder %s30, 0
      %p204 = por %p202, %p203
      %s206 = sadd.s32 %s205, 1
      %p209 = scmp.eq.s32.totalorder %s24, 1
      %p210 = scmp.ne.s32.totalorder %s205, %s207
      %p211 = scmp.eq.s32.totalorder %s24, 0
      %p212 = por %p210, %p211
      %p213 = scmp.ne.s32.totalorder %s205, %s207
      %p214 = scmp.eq.s32.totalorder %s29, 1
      %p215 = por %p213, %p214
      %p216 = scmp.ne.s32.totalorder %s207, %s208
      %p217 = scmp.eq.s32.totalorder %s29, 0
      %p218 = por %p216, %p217
      %p219 = scmp.ne.s32.totalorder %s207, %s208
      %p220 = scmp.eq.s32.totalorder %s30, 1
      %p221 = por %p219, %p220
      %p223 = scmp.ne.s32.totalorder %s208, %s222
      %p224 = scmp.eq.s32.totalorder %s30, 0
      %p225 = por %p223, %p224
      %s227 = sadd.s32 %s226, 1
      %p230 = scmp.eq.s32.totalorder %s24, 1
      %p231 = scmp.ne.s32.totalorder %s226, %s228
      %p232 = scmp.eq.s32.totalorder %s24, 0
      %p233 = por %p231, %p232
      %p234 = scmp.ne.s32.totalorder %s226, %s228
      %p235 = scmp.eq.s32.totalorder %s29, 1
      %p236 = por %p234, %p235
      %p237 = scmp.ne.s32.totalorder %s228, %s229
      %p238 = scmp.eq.s32.totalorder %s29, 0
      %p239 = por %p237, %p238
      %p240 = scmp.ne.s32.totalorder %s228, %s229
      %p241 = scmp.eq.s32.totalorder %s30, 1
      %p242 = por %p240, %p241
      %p244 = scmp.ne.s32.totalorder %s229, %s243
      %p245 = scmp.eq.s32.totalorder %s30, 0
      %p246 = por %p244, %p245
      %s248 = sadd.s32 %s247, 1
      %p251 = scmp.eq.s32.totalorder %s24, 1
      %p252 = scmp.ne.s32.totalorder %s247, %s249
      %p253 = scmp.eq.s32.totalorder %s24, 0
      %p254 = por %p252, %p253
      %p255 = scmp.ne.s32.totalorder %s247, %s249
      %p256 = scmp.eq.s32.totalorder %s29, 1
      %p257 = por %p255, %p256
      %p258 = scmp.ne.s32.totalorder %s249, %s250
      %p259 = scmp.eq.s32.totalorder %s29, 0
      %p260 = por %p258, %p259
      %p261 = scmp.ne.s32.totalorder %s249, %s250
      %p262 = scmp.eq.s32.totalorder %s30, 1
      %p263 = por %p261, %p262
      %p265 = scmp.ne.s32.totalorder %s250, %s264
      %p266 = scmp.eq.s32.totalorder %s30, 0
      %p267 = por %p265, %p266
      %s269 = sadd.s32 %s268, 1
      %p272 = scmp.eq.s32.totalorder %s24, 1
      %p273 = scmp.ne.s32.totalorder %s268, %s270
      %p274 = scmp.eq.s32.totalorder %s24, 0
      %p275 = por %p273, %p274
      %p276 = scmp.ne.s32.totalorder %s268, %s270
      %p277 = scmp.eq.s32.totalorder %s29, 1
      %p278 = por %p276, %p277
      %p279 = scmp.ne.s32.totalorder %s270, %s271
      %p280 = scmp.eq.s32.totalorder %s29, 0
      %p281 = por %p279, %p280
      %p282 = scmp.ne.s32.totalorder %s270, %s271
      %p283 = scmp.eq.s32.totalorder %s30, 1
      %p284 = por %p282, %p283
      %p286 = scmp.ne.s32.totalorder %s271, %s285
      %p287 = scmp.eq.s32.totalorder %s30, 0
      %p288 = por %p286, %p287
      %s290 = sadd.s32 %s289, 1
      %p293 = scmp.eq.s32.totalorder %s24, 1
      %p294 = scmp.ne.s32.totalorder %s289, %s291
      %p295 = scmp.eq.s32.totalorder %s24, 0
      %p296 = por %p294, %p295
      %p297 = scmp.ne.s32.totalorder %s289, %s291
      %p298 = scmp.eq.s32.totalorder %s29, 1
      %p299 = por %p297, %p298
      %p300 = scmp.ne.s32.totalorder %s291, %s292
      %p301 = scmp.eq.s32.totalorder %s29, 0
      %p302 = por %p300, %p301
      %p303 = scmp.ne.s32.totalorder %s291, %s292
      %p304 = scmp.eq.s32.totalorder %s30, 1
      %p305 = por %p303, %p304
      %p307 = scmp.ne.s32.totalorder %s292, %s306
      %p308 = scmp.eq.s32.totalorder %s30, 0
      %p309 = por %p307, %p308
      %s311 = sadd.s32 %s310, 1
      %p314 = scmp.eq.s32.totalorder %s24, 1
      %p315 = scmp.ne.s32.totalorder %s310, %s312
      %p316 = scmp.eq.s32.totalorder %s24, 0
      %p317 = por %p315, %p316
      %p318 = scmp.ne.s32.totalorder %s310, %s312
      %p319 = scmp.eq.s32.totalorder %s29, 1
      %p320 = por %p318, %p319
      %p321 = scmp.ne.s32.totalorder %s312, %s313
      %p322 = scmp.eq.s32.totalorder %s29, 0
      %p323 = por %p321, %p322
      %p324 = scmp.ne.s32.totalorder %s312, %s313
      %p325 = scmp.eq.s32.totalorder %s30, 1
      %p326 = por %p324, %p325
      %p328 = scmp.ne.s32.totalorder %s313, %s327
      %p329 = scmp.eq.s32.totalorder %s30, 0
      %p330 = por %p328, %p329
      %s332 = sadd.s32 %s331, 1
      %p335 = scmp.eq.s32.totalorder %s24, 1
      %p336 = scmp.ne.s32.totalorder %s331, %s333
      %p337 = scmp.eq.s32.totalorder %s24, 0
      %p338 = por %p336, %p337
      %p339 = scmp.ne.s32.totalorder %s331, %s333
      %p340 = scmp.eq.s32.totalorder %s29, 1
      %p341 = por %p339, %p340
      %p342 = scmp.ne.s32.totalorder %s333, %s334
      %p343 = scmp.eq.s32.totalorder %s29, 0
      %p344 = por %p342, %p343
      %p345 = scmp.ne.s32.totalorder %s333, %s334
      %p346 = scmp.eq.s32.totalorder %s30, 1
      %p347 = por %p345, %p346
      %p349 = scmp.ne.s32.totalorder %s334, %s348
      %p350 = scmp.eq.s32.totalorder %s30, 0
      %p351 = por %p349, %p350
      %s352 = ssub.s32 %s24, %s31
      %p353 = scmp.eq.s32.totalorder %s352, 0
      %s355 = sadd.s32 %s354, 1
      %s356 = scalar_select %p353, %s354, %s355
      %p359 = pneg %p353
      %p360 = scmp.eq.s32.totalorder %s24, 1
      %p361 = por %p359, %p360
      %p362 = scmp.ne.s32.totalorder %s354, %s357
      %p363 = scmp.eq.s32.totalorder %s24, 0
      %p364 = por %p362, %p363
      %p365 = scmp.ne.s32.totalorder %s354, %s357
      %p366 = scmp.eq.s32.totalorder %s29, 1
      %p367 = por %p365, %p366
      %p368 = scmp.ne.s32.totalorder %s357, %s358
      %p369 = scmp.eq.s32.totalorder %s29, 0
      %p370 = por %p368, %p369
      %p371 = scmp.ne.s32.totalorder %s357, %s358
      %p372 = scmp.eq.s32.totalorder %s30, 1
      %p373 = por %p371, %p372
      %p375 = scmp.ne.s32.totalorder %s358, %s374
      %p376 = scmp.eq.s32.totalorder %s30, 0
      %p377 = por %p375, %p376
      %p378 = scmp.le.s32.totalorder 1, %s24
      %p379 = scmp.lt.s32.totalorder %s24, 3
      %p380 = pnand %p378, %p379
      %p381 = pneg %p380
      // Predicated region
      $region9: #{vit_forward.1} parent=5 // pred_check
        _
      $region10: #{vit_forward.1} parent=5 // pred_check_branch
        %383 = sbr.rel (%p380) target = $region12
      $region11: #{vit_forward.1} parent=5 // pred_region
        %s384 = ssub.s32 %s24, 1
        // Predicated region
        $region13: #{vit_forward.1} parent=11 // pred_check
          %p385 = pneg %p71
        $region14: #{vit_forward.1} parent=11 // pred_check_branch
          %387 = sbr.rel (%p385) target = $region16
        $region15: #{vit_forward.1} parent=11 // pred_region
          _
        $region16: #{vit_forward.1} parent=11 // pred_fallthru
          _
        // Predicated region
        $region17: #{vit_forward.1} parent=11 // pred_check
          %p388 = pneg %p92
        $region18: #{vit_forward.1} parent=11 // pred_check_branch
          %390 = sbr.rel (%p388) target = $region20
        $region19: #{vit_forward.1} parent=11 // pred_region
          _
        $region20: #{vit_forward.1} parent=11 // pred_fallthru
          _
        // Predicated region
        $region21: #{vit_forward.1} parent=11 // pred_check
          %p391 = pneg %p113
        $region22: #{vit_forward.1} parent=11 // pred_check_branch
          %393 = sbr.rel (%p391) target = $region24
        $region23: #{vit_forward.1} parent=11 // pred_region
          _
        $region24: #{vit_forward.1} parent=11 // pred_fallthru
          _
        // Predicated region
        $region25: #{vit_forward.1} parent=11 // pred_check
          %p394 = pneg %p134
        $region26: #{vit_forward.1} parent=11 // pred_check_branch
          %396 = sbr.rel (%p394) target = $region28
        $region27: #{vit_forward.1} parent=11 // pred_region
          _
        $region28: #{vit_forward.1} parent=11 // pred_fallthru
          _
        // Predicated region
        $region29: #{vit_forward.1} parent=11 // pred_check
          %p397 = pneg %p155
        $region30: #{vit_forward.1} parent=11 // pred_check_branch
          %399 = sbr.rel (%p397) target = $region32
        $region31: #{vit_forward.1} parent=11 // pred_region
          _
        $region32: #{vit_forward.1} parent=11 // pred_fallthru
          _
        // Predicated region
        $region33: #{vit_forward.1} parent=11 // pred_check
          %p400 = pneg %p176
        $region34: #{vit_forward.1} parent=11 // pred_check_branch
          %402 = sbr.rel (%p400) target = $region36
        $region35: #{vit_forward.1} parent=11 // pred_region
          _
        $region36: #{vit_forward.1} parent=11 // pred_fallthru
          _
        // Predicated region
        $region37: #{vit_forward.1} parent=11 // pred_check
          %p403 = pneg %p197
        $region38: #{vit_forward.1} parent=11 // pred_check_branch
          %405 = sbr.rel (%p403) target = $region40
        $region39: #{vit_forward.1} parent=11 // pred_region
          _
        $region40: #{vit_forward.1} parent=11 // pred_fallthru
          _
        // Predicated region
        $region41: #{vit_forward.1} parent=11 // pred_check
          %p406 = pneg %p218
        $region42: #{vit_forward.1} parent=11 // pred_check_branch
          %408 = sbr.rel (%p406) target = $region44
        $region43: #{vit_forward.1} parent=11 // pred_region
          _
        $region44: #{vit_forward.1} parent=11 // pred_fallthru
          _
        // Predicated region
        $region45: #{vit_forward.1} parent=11 // pred_check
          %p409 = pneg %p239
        $region46: #{vit_forward.1} parent=11 // pred_check_branch
          %411 = sbr.rel (%p409) target = $region48
        $region47: #{vit_forward.1} parent=11 // pred_region
          _
        $region48: #{vit_forward.1} parent=11 // pred_fallthru
          _
        // Predicated region
        $region49: #{vit_forward.1} parent=11 // pred_check
          %p412 = pneg %p260
        $region50: #{vit_forward.1} parent=11 // pred_check_branch
          %414 = sbr.rel (%p412) target = $region52
        $region51: #{vit_forward.1} parent=11 // pred_region
          _
        $region52: #{vit_forward.1} parent=11 // pred_fallthru
          _
        // Predicated region
        $region53: #{vit_forward.1} parent=11 // pred_check
          %p415 = pneg %p281
        $region54: #{vit_forward.1} parent=11 // pred_check_branch
          %417 = sbr.rel (%p415) target = $region56
        $region55: #{vit_forward.1} parent=11 // pred_region
          _
        $region56: #{vit_forward.1} parent=11 // pred_fallthru
          _
        // Predicated region
        $region57: #{vit_forward.1} parent=11 // pred_check
          %p418 = pneg %p302
        $region58: #{vit_forward.1} parent=11 // pred_check_branch
          %420 = sbr.rel (%p418) target = $region60
        $region59: #{vit_forward.1} parent=11 // pred_region
          _
        $region60: #{vit_forward.1} parent=11 // pred_fallthru
          _
        // Predicated region
        $region61: #{vit_forward.1} parent=11 // pred_check
          %p421 = pneg %p323
        $region62: #{vit_forward.1} parent=11 // pred_check_branch
          %423 = sbr.rel (%p421) target = $region64
        $region63: #{vit_forward.1} parent=11 // pred_region
          _
        $region64: #{vit_forward.1} parent=11 // pred_fallthru
          _
        // Predicated region
        $region65: #{vit_forward.1} parent=11 // pred_check
          %p424 = pneg %p344
        $region66: #{vit_forward.1} parent=11 // pred_check_branch
          %426 = sbr.rel (%p424) target = $region68
        $region67: #{vit_forward.1} parent=11 // pred_region
          _
        $region68: #{vit_forward.1} parent=11 // pred_fallthru
          _
      $region12: #{vit_forward.1} parent=5 // pred_fallthru
        _
      %p427 = scmp.lt.s32.totalorder %s24, 2
      // Predicated region
      $region69: #{vit_forward.1} parent=5 // pred_check
        %p428 = pneg %p427
      $region70: #{vit_forward.1} parent=5 // pred_check_branch
        %430 = sbr.rel (%p428) target = $region72
      $region71: #{vit_forward.1} parent=5 // pred_region
        // Predicated region
        $region73: #{vit_forward.1} parent=71 // pred_check
          %p431 = pneg %p44
        $region74: #{vit_forward.1} parent=71 // pred_check_branch
          %433 = sbr.rel (%p431) target = $region76
        $region75: #{vit_forward.1} parent=71 // pred_region
          %p434 = scmp.lt.s32.totalorder %s24, 1
          %s435 = scalar_select %p434, %s24, 1
          %s436 = smul.addr %s435, 3
          %s437 = smul.addr %s436, 8
          %s438 = scalar_lea.vmem %s0, %s437
        $region76: #{vit_forward.1} parent=71 // pred_fallthru
          _
      $region72: #{vit_forward.1} parent=5 // pred_fallthru
        _
      %p439 = scmp.le.s32.totalorder 1, %s24
      %p440 = scmp.lt.s32.totalorder %s24, 3
      %p441 = pnand %p439, %p440
      %p442 = pneg %p441
      // Predicated region
      $region77: #{vit_forward.1} parent=5 // pred_check
        _
      $region78: #{vit_forward.1} parent=5 // pred_check_branch
        %444 = sbr.rel (%p441) target = $region80
      $region79: #{vit_forward.1} parent=5 // pred_region
        %s445 = ssub.s32 %s24, 1
        %p446 = scmp.lt.s32.totalorder %s29, 1
        %s447 = scalar_select %p446, %s29, 1
        %s448 = smul.addr %s447, 3
        %s449 = smul.addr %s448, 8
        %s450 = scalar_lea.vmem %s0, %s449
        %p451 = pneg %p50
        %p452 = pneg %p47
        %p453 = pneg %p71
        %p454 = pneg %p68
        %p455 = pneg %p92
        %p456 = pneg %p89
        %p457 = pneg %p113
        %p458 = pneg %p110
        %p459 = pneg %p134
        %p460 = pneg %p131
        %p461 = pneg %p155
        %p462 = pneg %p152
        %p463 = pneg %p176
        %p464 = pneg %p173
        %p465 = pneg %p197
        %p466 = pneg %p194
        %p467 = pneg %p218
        %p468 = pneg %p215
        %p469 = pneg %p239
        %p470 = pneg %p236
        %p471 = pneg %p260
        %p472 = pneg %p257
        %p473 = pneg %p281
        %p474 = pneg %p278
        %p475 = pneg %p302
        %p476 = pneg %p299
        %p477 = pneg %p323
        %p478 = pneg %p320
        %p479 = pneg %p344
        %p480 = pneg %p341
        %p481 = pneg %p370
        %p482 = pneg %p367
        %s483 = sand.u32 %s357, 1
        %s484 = scalar_lea.sflag [#allocation3], %s483
        %s485 = sand.u32 %s357, 1
        %s486 = scalar_lea.vmem [#allocation2], %s485
        %p487 = scmp.lt.s32.totalorder %s29, 1
        %s488 = scalar_select %p487, %s29, 1
        %s489 = smul.addr %s488, 3
        %s490 = smul.addr %s489, 8
        %s491 = scalar_lea.vmem %s0, %s490
        %v493 = vlaneseq
        %v494 = vand.u32 %v493, 127
        %vm495 = vcmp.lt.s32.totalorder %v494, 17
        %v496 = vld [vmem:[%s491] sm:$0xff]
        %v497 = vld [vmem:[%s491 + $0x8] sm:$0xff]
        %v498 = vld [vmem:[%s491 + $0x10] sm:$0xff]
        %v499 = vpack.c.bf16 %v497, %v496
        %v500 = vpack.c.bf16 %v498, %v498
        %v501 = vld [vmem:[%s1] sm:$0xf]
        %v502 = vld [vmem:[%s1 + $0x4] sm:$0xf]
        %v503 = vld [vmem:[%s1 + $0x8] sm:$0xf]
        %v504 = vld [vmem:[%s1 + $0xc] sm:$0xf]
        %v505 = vld [vmem:[%s1 + $0x10] sm:$0xf]
        %v506 = vld [vmem:[%s1 + $0x14] sm:$0xf]
        %v507 = vld [vmem:[%s1 + $0x18] sm:$0xf]
        %v508 = vld [vmem:[%s1 + $0x1c] sm:$0xf]
        %v509 = vld [vmem:[%s2] sm:$0xff]
        %v510 = vld [vmem:[%s2 + $0x8] sm:$0xff]
        %v511 = vld [vmem:[%s2 + $0x10] sm:$0xff]
        %v520 = vunpack.c.l.b16 %v501
        %v521 = vunpack.c.l.b16 %v502
        %v522 = vunpack.c.l.b16 %v503
        %v523 = vunpack.c.l.b16 %v504
        %v524 = vunpack.c.l.b16 %v505
        %v525 = vunpack.c.l.b16 %v506
        %v526 = vunpack.c.l.b16 %v507
        %v527 = vunpack.c.l.b16 %v508
        %v528 = vpack.c.b16 %v521, %v520
        %v529 = vpack.c.b16 %v523, %v522
        %v530 = vpack.c.b16 %v525, %v524
        %v531 = vpack.c.b16 %v527, %v526
        %vm536 = vcmask 523264
        %v538 = vsel %vm536, %v499, 0
        %v541 = vsel %vm536, %v500, 0
        %543 = vmatprep.subr.bf16.mxu0 0
        %544 = vmatpush1.bf16.msra.mxu0 %v528
        %545 = vmatprep.subr.bf16.mxu0 0
        %546 = vmatpush1.bf16.msra.mxu0 %v529
        %547 = vmatprep.subr.bf16.mxu0 0
        %548 = vmatpush1.bf16.msra.mxu0 %v530
        %549 = vmatprep.subr.bf16.mxu0 0
        %550 = vmatpush1.bf16.msra.mxu0 %v531
        %551 = vmatprep.subr.bf16.mxu0 0
        %552 = vmatpush1.bf16.msra.mxu0 0
        %553 = vmatprep.subr.bf16.mxu0 0
        %554 = vmatpush1.bf16.msra.mxu0 0
        %555 = vmatprep.subr.bf16.mxu0 0
        %556 = vmatpush1.bf16.msra.mxu0 0
        %557 = vmatprep.subr.bf16.mxu0 0
        %558 = vmatpush1.bf16.msra.mxu0 0
        %559 = vmatprep.subr.bf16.mxu0 0
        %560 = vmatpush1.bf16.msra.mxu0 0
        %561 = vmatprep.subr.bf16.mxu0 0
        %562 = vmatpush1.bf16.msra.mxu0 0
        %563 = vmatprep.subr.bf16.mxu0 0
        %564 = vmatpush1.bf16.msra.mxu0 0
        %565 = vmatprep.subr.bf16.mxu0 0
        %566 = vmatpush1.bf16.msra.mxu0 0
        %567 = vmatprep.subr.bf16.mxu0 0
        %568 = vmatpush1.bf16.msra.mxu0 0
        %569 = vmatprep.subr.bf16.mxu0 0
        %570 = vmatpush1.bf16.msra.mxu0 0
        %571 = vmatprep.subr.bf16.mxu0 0
        %572 = vmatpush1.bf16.msra.mxu0 0
        %573 = vmatprep.subr.bf16.mxu0 0
        %574 = vmatpush1.bf16.msra.mxu0 0
        %575 = vmatprep.mubr.bf16.mxu0 0
        %576 = vmatmul.mubr.bf16.gmra.mrb[0].mxu0 %v538
        %v577 = vpop.f32.mrb[0].mxu0
        %v578 = vadd.f32 %v509, %v577
        %v579 = vpop.f32.mrb[0].mxu0
        %v580 = vpop.f32.mrb[0].mxu0
        %v581 = vadd.f32 %v510, %v580
        %v582 = vpop.f32.mrb[0].mxu0
        %583 = vmatprep.mubr.bf16.mxu0 0
        %584 = vmatmul.mubr.bf16.gmra.mrb[0].mxu0 %v541
        %v585 = vpop.f32.mrb[0].mxu0
        %v586 = vadd.f32 %v511, %v585
        %v587 = vpop.f32.mrb[0].mxu0
        %v588 = vpop.f32.mrb[0].mxu0
        %v589 = vpop.f32.mrb[0].mxu0
        %590 = vdwg.mxu0
        %v591 = vld [vmem:[%s3] sm:$0xf]
        %v592 = vsel %vm536, %v578, 0.0
        %593 = vadd.xlane.f32.xlu0 %v592
        %v594 = vpop.xlane.xlu0 %593
        %v595 = vsel %vm536, %v581, 0.0
        %596 = vadd.xlane.f32.xlu0 %v595
        %v597 = vpop.xlane.xlu0 %596
        %v598 = vsel %vm536, %v586, 0.0
        %599 = vadd.xlane.f32.xlu0 %v598
        %v600 = vpop.xlane.xlu0 %599
        %v601 = vrcp.pop 64.0
        %v602 = vmul.f32 %v594, %v601
        %v603 = vmul.f32 %v597, %v601
        %v604 = vmul.f32 %v600, %v601
        %v605 = vsub.f32 %v578, %v602
        %v606 = vsub.f32 %v581, %v603
        %v607 = vsub.f32 %v586, %v604
        %v608 = vmul.f32 %v605, %v605
        %v609 = vmul.f32 %v606, %v606
        %v610 = vmul.f32 %v607, %v607
        %v611 = vsel %vm536, %v608, 0.0
        %612 = vadd.xlane.f32.xlu0 %v611
        %v613 = vpop.xlane.xlu0 %612
        %v614 = vsel %vm536, %v609, 0.0
        %615 = vadd.xlane.f32.xlu0 %v614
        %v616 = vpop.xlane.xlu0 %615
        %v617 = vsel %vm536, %v610, 0.0
        %618 = vadd.xlane.f32.xlu0 %v617
        %v619 = vpop.xlane.xlu0 %618
        %v620 = vmul.f32 %v613, %v601
        %v621 = vmul.f32 %v616, %v601
        %v622 = vmul.f32 %v619, %v601
        %v623 = vadd.f32 %v620, 1e-06
        %v624 = vadd.f32 %v621, 1e-06
        %v625 = vadd.f32 %v622, 1e-06
        %v626 = vrsqrt.pop %v623
        %v627 = vrsqrt.pop %v624
        %v628 = vrsqrt.pop %v625
        %v629 = vmul.f32 %v605, %v626
        %v630 = vmul.f32 %v606, %v627
        %v631 = vmul.f32 %v607, %v628
        %v632 = vlaneseq
        %v633 = vshrl.u32 %v632, 7
        %v634 = vsub.s32 0, %v633
        %v635 = vrot.slane %v591, %v634
        %v636 = vmul.f32 %v629, %v635
        %v637 = vmul.f32 %v630, %v635
        %v638 = vmul.f32 %v631, %v635
        %v639 = vlaneseq
        %v640 = vshrl.u32 %v639, 7
        %v641 = vsub.s32 1, %v640
        %v642 = vrot.slane %v591, %v641
        %v643 = vadd.f32 %v636, %v642
        %v644 = vadd.f32 %v637, %v642
        %v645 = vadd.f32 %v638, %v642
        %v646 = vpack.c.bf16 %v644, %v643
        %v647 = vpack.c.bf16 %v645, %v645
        %v648 = vld [vmem:[%s4] sm:$0xff]
        %v649 = vld [vmem:[%s4 + $0x8] sm:$0xff]
        %v650 = vld [vmem:[%s4 + $0x10] sm:$0xff]
        %v651 = vld [vmem:[%s4 + $0x18] sm:$0xff]
        %v652 = vld [vmem:[%s4 + $0x20] sm:$0xff]
        %v653 = vld [vmem:[%s4 + $0x28] sm:$0xff]
        %v654 = vld [vmem:[%s4 + $0x30] sm:$0xff]
        %v655 = vld [vmem:[%s4 + $0x38] sm:$0xff]
        %v656 = vld [vmem:[%s5] sm:$0x3]
        %v658 = vlaneseq
        %v659 = vshrl.u32 %v658, 7
        %v660 = vsub.s32 0, %v659
        %v661 = vrot.slane %v656, %v660
        %v662 = vlaneseq
        %v663 = vshrl.u32 %v662, 7
        %v664 = vsub.s32 1, %v663
        %v665 = vrot.slane %v656, %v664
        %v676 = vunpack.c.l.b16 %v648
        %v677 = vunpack.c.h.b16 %v648
        %v678 = vunpack.c.l.b16 %v649
        %v679 = vunpack.c.h.b16 %v649
        %v680 = vunpack.c.l.b16 %v650
        %v681 = vunpack.c.h.b16 %v650
        %v682 = vunpack.c.l.b16 %v651
        %v683 = vunpack.c.h.b16 %v651
        %v684 = vunpack.c.l.b16 %v652
        %v685 = vunpack.c.h.b16 %v652
        %v686 = vunpack.c.l.b16 %v653
        %v687 = vunpack.c.h.b16 %v653
        %v688 = vunpack.c.l.b16 %v654
        %v689 = vunpack.c.h.b16 %v654
        %v690 = vunpack.c.l.b16 %v655
        %v691 = vunpack.c.h.b16 %v655
        %v692 = vpack.c.b16 %v678, %v676
        %v693 = vpack.c.b16 %v679, %v677
        %v694 = vpack.c.b16 %v682, %v680
        %v695 = vpack.c.b16 %v683, %v681
        %v696 = vpack.c.b16 %v686, %v684
        %v697 = vpack.c.b16 %v687, %v685
        %v698 = vpack.c.b16 %v690, %v688
        %v699 = vpack.c.b16 %v691, %v689
        %v709 = vsel %vm536, %v646, 0
        %v712 = vsel %vm536, %v647, 0
        %714 = vmatprep.subr.bf16.mxu0 %v693
        %715 = vmatpush1.bf16.msra.mxu0 %v692
        %716 = vmatprep.subr.bf16.mxu0 %v695
        %717 = vmatpush1.bf16.msra.mxu0 %v694
        %718 = vmatprep.subr.bf16.mxu0 %v697
        %719 = vmatpush1.bf16.msra.mxu0 %v696
        %720 = vmatprep.subr.bf16.mxu0 %v699
        %721 = vmatpush1.bf16.msra.mxu0 %v698
        %722 = vmatprep.subr.bf16.mxu0 0
        %723 = vmatpush1.bf16.msra.mxu0 0
        %724 = vmatprep.subr.bf16.mxu0 0
        %725 = vmatpush1.bf16.msra.mxu0 0
        %726 = vmatprep.subr.bf16.mxu0 0
        %727 = vmatpush1.bf16.msra.mxu0 0
        %728 = vmatprep.subr.bf16.mxu0 0
        %729 = vmatpush1.bf16.msra.mxu0 0
        %730 = vmatprep.subr.bf16.mxu0 0
        %731 = vmatpush1.bf16.msra.mxu0 0
        %732 = vmatprep.subr.bf16.mxu0 0
        %733 = vmatpush1.bf16.msra.mxu0 0
        %734 = vmatprep.subr.bf16.mxu0 0
        %735 = vmatpush1.bf16.msra.mxu0 0
        %736 = vmatprep.subr.bf16.mxu0 0
        %737 = vmatpush1.bf16.msra.mxu0 0
        %738 = vmatprep.subr.bf16.mxu0 0
        %739 = vmatpush1.bf16.msra.mxu0 0
        %740 = vmatprep.subr.bf16.mxu0 0
        %741 = vmatpush1.bf16.msra.mxu0 0
        %742 = vmatprep.subr.bf16.mxu0 0
        %743 = vmatpush1.bf16.msra.mxu0 0
        %744 = vmatprep.subr.bf16.mxu0 0
        %745 = vmatpush1.bf16.msra.mxu0 0
        %746 = vmatprep.mubr.bf16.mxu0 0
        %747 = vmatmul.mubr.bf16.gmra.mrb[0].mxu0 %v709
        %v748 = vpop.f32.mrb[0].mxu0
        %v749 = vadd.f32 %v661, %v748
        %v750 = vpop.f32.mrb[0].mxu0
        %v751 = vadd.f32 %v665, %v750
        %v752 = vpop.f32.mrb[0].mxu0
        %v753 = vadd.f32 %v661, %v752
        %v754 = vpop.f32.mrb[0].mxu0
        %v755 = vadd.f32 %v665, %v754
        %756 = vmatprep.mubr.bf16.mxu0 0
        %757 = vmatmul.mubr.bf16.gmra.mrb[0].mxu0 %v712
        %v758 = vpop.f32.mrb[0].mxu0
        %v759 = vadd.f32 %v661, %v758
        %v760 = vpop.f32.mrb[0].mxu0
        %v761 = vadd.f32 %v665, %v760
        %v762 = vpop.f32.mrb[0].mxu0
        %v763 = vpop.f32.mrb[0].mxu0
        %764 = vdwg.mxu0
        %v765 = vld [vmem:[%s6] sm:$0xf]
        %v766 = vld [vmem:[%s6 + $0x4] sm:$0xf]
        %v767 = vld [vmem:[%s6 + $0x8] sm:$0xf]
        %v768 = vld [vmem:[%s6 + $0xc] sm:$0xf]
        %v769 = vld [vmem:[%s6 + $0x10] sm:$0xf]
        %v770 = vld [vmem:[%s6 + $0x14] sm:$0xf]
        %v771 = vld [vmem:[%s6 + $0x18] sm:$0xf]
        %v772 = vld [vmem:[%s6 + $0x1c] sm:$0xf]
        %v773 = vpack.c.bf16 %v753, %v749
        %v774 = vpack.c.bf16 %v759, %v759
        %777 = vrot.lane.b32.xlu0 %v773, 64
        %v778 = vpop.permute.xlu0 %777
        %779 = vrot.lane.b32.xlu0 %v774, 64
        %v780 = vpop.permute.xlu0 %779
        %vm781 = vcmask 130048
        %v783 = vsel %vm781, %v773, 0
        %v786 = vsel %vm781, %v774, 0
        %v789 = vsel %vm781, %v778, 0
        %v792 = vsel %vm781, %v780, 0
        %794 = vmatprep.subr.bf16.mxu0 0
        %795 = vmatpush1.bf16.xpose.msra.mxu0 %v789
        %796 = vmatprep.subr.bf16.mxu0 0
        %797 = vmatpush1.bf16.xpose.msra.mxu0 %v792
        %798 = vmatprep.subr.bf16.mxu0 0
        %799 = vmatpush1.bf16.xpose.msra.mxu0 0
        %800 = vmatprep.subr.bf16.mxu0 0
        %801 = vmatpush1.bf16.xpose.msra.mxu0 0
        %802 = vmatprep.subr.bf16.mxu0 0
        %803 = vmatpush1.bf16.xpose.msra.mxu0 0
        %804 = vmatprep.subr.bf16.mxu0 0
        %805 = vmatpush1.bf16.xpose.msra.mxu0 0
        %806 = vmatprep.subr.bf16.mxu0 0
        %807 = vmatpush1.bf16.xpose.msra.mxu0 0
        %808 = vmatprep.subr.bf16.mxu0 0
        %809 = vmatpush1.bf16.xpose.msra.mxu0 0
        %810 = vmatprep.subr.bf16.mxu0 0
        %811 = vmatpush1.bf16.xpose.msra.mxu0 0
        %812 = vmatprep.subr.bf16.mxu0 0
        %813 = vmatpush1.bf16.xpose.msra.mxu0 0
        %814 = vmatprep.subr.bf16.mxu0 0
        %815 = vmatpush1.bf16.xpose.msra.mxu0 0
        %816 = vmatprep.subr.bf16.mxu0 0
        %817 = vmatpush1.bf16.xpose.msra.mxu0 0
        %818 = vmatprep.subr.bf16.mxu0 0
        %819 = vmatpush1.bf16.xpose.msra.mxu0 0
        %820 = vmatprep.subr.bf16.mxu0 0
        %821 = vmatpush1.bf16.xpose.msra.mxu0 0
        %822 = vmatprep.subr.bf16.mxu0 0
        %823 = vmatpush1.bf16.xpose.msra.mxu0 0
        %824 = vmatprep.subr.bf16.mxu0 0
        %825 = vmatpush1.bf16.xpose.msra.mxu0 0
        %826 = vmatprep.mubr.bf16.mxu0 0
        %827 = vmatmul.mubr.bf16.gmra.mrb[0].mxu0 %v783
        %v828 = vpop.f32.mrb[0].mxu0
        %v829 = vadd.f32 0.0, %v828
        %v830 = vpop.f32.mrb[0].mxu0
        %v831 = vpop.f32.mrb[0].mxu0
        %v832 = vadd.f32 0.0, %v831
        %v833 = vpop.f32.mrb[0].mxu0
        %834 = vmatprep.mubr.bf16.mxu0 0
        %835 = vmatmul.mubr.bf16.gmra.mrb[0].mxu0 %v786
        %v836 = vpop.f32.mrb[0].mxu0
        %v837 = vadd.f32 0.0, %v836
        %v838 = vpop.f32.mrb[0].mxu0
        %v839 = vpop.f32.mrb[0].mxu0
        %v840 = vpop.f32.mrb[0].mxu0
        %841 = vdwg.mxu0
        %v842 = vsel %vm495, %v829, -1e+30
        %v843 = vsel %vm495, %v832, -1e+30
        %v844 = vsel %vm495, %v837, -1e+30
        %vm845 = vcmask 195584
        %v846 = vsel %vm845, %v842, -inf
        %847 = vmax.xlane.f32.xlu0 %v846
        %v848 = vpop.xlane.xlu0 %847
        %v849 = vsel %vm845, %v843, -inf
        %850 = vmax.xlane.f32.xlu0 %v849
        %v851 = vpop.xlane.xlu0 %850
        %v852 = vsel %vm845, %v844, -inf
        %853 = vmax.xlane.f32.xlu0 %v852
        %v854 = vpop.xlane.xlu0 %853
        %v855 = vsub.f32 %v842, %v848
        %v856 = vsub.f32 %v843, %v851
        %v857 = vsub.f32 %v844, %v854
        %v858 = vmul.f32 %v855, 1.442695
        %v859 = vpow.pop %v858
        %v860 = vmul.f32 %v856, 1.442695
        %v861 = vpow.pop %v860
        %v862 = vmul.f32 %v857, 1.442695
        %v863 = vpow.pop %v862
        %v864 = vsel %vm845, %v859, 0.0
        %865 = vadd.xlane.f32.xlu0 %v864
        %v866 = vpop.xlane.xlu0 %865
        %v867 = vsel %vm845, %v861, 0.0
        %868 = vadd.xlane.f32.xlu0 %v867
        %v869 = vpop.xlane.xlu0 %868
        %v870 = vsel %vm845, %v863, 0.0
        %871 = vadd.xlane.f32.xlu0 %v870
        %v872 = vpop.xlane.xlu0 %871
        %v873 = vrcp.pop %v866
        %v874 = vmul.f32 %v859, %v873
        %v875 = vrcp.pop %v869
        %v876 = vmul.f32 %v861, %v875
        %v877 = vrcp.pop %v872
        %v878 = vmul.f32 %v863, %v877
        %v879 = vpack.c.bf16 %v876, %v874
        %v880 = vpack.c.bf16 %v878, %v878
        %v881 = vpack.c.bf16 %v755, %v751
        %v882 = vpack.c.bf16 %v761, %v761
        %v884 = vsel %vm845, %v879, 0
        %v887 = vsel %vm845, %v880, 0
        %vm889 = vcmask 1043456
        %v891 = vsel %vm889, %v882, 0
        %893 = vmatprep.subr.bf16.mxu0 0
        %894 = vmatpush1.bf16.msra.mxu0 %v881
        %895 = vmatprep.subr.bf16.mxu0 0
        %896 = vmatpush1.bf16.msra.mxu0 %v891
        %897 = vmatprep.subr.bf16.mxu0 0
        %898 = vmatpush1.bf16.msra.mxu0 0
        %899 = vmatprep.subr.bf16.mxu0 0
        %900 = vmatpush1.bf16.msra.mxu0 0
        %901 = vmatprep.subr.bf16.mxu0 0
        %902 = vmatpush1.bf16.msra.mxu0 0
        %903 = vmatprep.subr.bf16.mxu0 0
        %904 = vmatpush1.bf16.msra.mxu0 0
        %905 = vmatprep.subr.bf16.mxu0 0
        %906 = vmatpush1.bf16.msra.mxu0 0
        %907 = vmatprep.subr.bf16.mxu0 0
        %908 = vmatpush1.bf16.msra.mxu0 0
        %909 = vmatprep.subr.bf16.mxu0 0
        %910 = vmatpush1.bf16.msra.mxu0 0
        %911 = vmatprep.subr.bf16.mxu0 0
        %912 = vmatpush1.bf16.msra.mxu0 0
        %913 = vmatprep.subr.bf16.mxu0 0
        %914 = vmatpush1.bf16.msra.mxu0 0
        %915 = vmatprep.subr.bf16.mxu0 0
        %916 = vmatpush1.bf16.msra.mxu0 0
        %917 = vmatprep.subr.bf16.mxu0 0
        %918 = vmatpush1.bf16.msra.mxu0 0
        %919 = vmatprep.subr.bf16.mxu0 0
        %920 = vmatpush1.bf16.msra.mxu0 0
        %921 = vmatprep.subr.bf16.mxu0 0
        %922 = vmatpush1.bf16.msra.mxu0 0
        %923 = vmatprep.subr.bf16.mxu0 0
        %924 = vmatpush1.bf16.msra.mxu0 0
        %925 = vmatprep.mubr.bf16.mxu0 0
        %926 = vmatmul.mubr.bf16.gmra.mrb[0].mxu0 %v884
        %v927 = vpop.f32.mrb[0].mxu0
        %v928 = vadd.f32 0.0, %v927
        %v929 = vpop.f32.mrb[0].mxu0
        %v930 = vpop.f32.mrb[0].mxu0
        %v931 = vadd.f32 0.0, %v930
        %v932 = vpop.f32.mrb[0].mxu0
        %933 = vmatprep.mubr.bf16.mxu0 0
        %934 = vmatmul.mubr.bf16.gmra.mrb[0].mxu0 %v887
        %v935 = vpop.f32.mrb[0].mxu0
        %v936 = vadd.f32 0.0, %v935
        %v937 = vpop.f32.mrb[0].mxu0
        %v938 = vpop.f32.mrb[0].mxu0
        %v939 = vpop.f32.mrb[0].mxu0
        %940 = vdwg.mxu0
        %v941 = vpack.c.bf16 %v931, %v928
        %v942 = vpack.c.bf16 %v936, %v936
        %943 = vrot.lane.b32.xlu0 %v773, 112
        %v944 = vpop.permute.xlu0 %943
        %945 = vrot.lane.b32.xlu0 %v774, 112
        %v946 = vpop.permute.xlu0 %945
        %947 = vrot.lane.b32.xlu0 %v773, 48
        %v948 = vpop.permute.xlu0 %947
        %949 = vrot.lane.b32.xlu0 %v774, 48
        %v950 = vpop.permute.xlu0 %949
        %v952 = vsel %vm781, %v944, 0
        %v955 = vsel %vm781, %v946, 0
        %v958 = vsel %vm781, %v948, 0
        %v961 = vsel %vm781, %v950, 0
        %963 = vmatprep.subr.bf16.mxu0 0
        %964 = vmatpush1.bf16.xpose.msra.mxu0 %v958
        %965 = vmatprep.subr.bf16.mxu0 0
        %966 = vmatpush1.bf16.xpose.msra.mxu0 %v961
        %967 = vmatprep.subr.bf16.mxu0 0
        %968 = vmatpush1.bf16.xpose.msra.mxu0 0
        %969 = vmatprep.subr.bf16.mxu0 0
        %970 = vmatpush1.bf16.xpose.msra.mxu0 0
        %971 = vmatprep.subr.bf16.mxu0 0
        %972 = vmatpush1.bf16.xpose.msra.mxu0 0
        %973 = vmatprep.subr.bf16.mxu0 0
        %974 = vmatpush1.bf16.xpose.msra.mxu0 0
        %975 = vmatprep.subr.bf16.mxu0 0
        %976 = vmatpush1.bf16.xpose.msra.mxu0 0
        %977 = vmatprep.subr.bf16.mxu0 0
        %978 = vmatpush1.bf16.xpose.msra.mxu0 0
        %979 = vmatprep.subr.bf16.mxu0 0
        %980 = vmatpush1.bf16.xpose.msra.mxu0 0
        %981 = vmatprep.subr.bf16.mxu0 0
        %982 = vmatpush1.bf16.xpose.msra.mxu0 0
        %983 = vmatprep.subr.bf16.mxu0 0
        %984 = vmatpush1.bf16.xpose.msra.mxu0 0
        %985 = vmatprep.subr.bf16.mxu0 0
        %986 = vmatpush1.bf16.xpose.msra.mxu0 0
        %987 = vmatprep.subr.bf16.mxu0 0
        %988 = vmatpush1.bf16.xpose.msra.mxu0 0
        %989 = vmatprep.subr.bf16.mxu0 0
        %990 = vmatpush1.bf16.xpose.msra.mxu0 0
        %991 = vmatprep.subr.bf16.mxu0 0
        %992 = vmatpush1.bf16.xpose.msra.mxu0 0
        %993 = vmatprep.subr.bf16.mxu0 0
        %994 = vmatpush1.bf16.xpose.msra.mxu0 0
        %995 = vmatprep.mubr.bf16.mxu0 0
        %996 = vmatmul.mubr.bf16.gmra.mrb[0].mxu0 %v952
        %v997 = vpop.f32.mrb[0].mxu0
        %v998 = vadd.f32 0.0, %v997
        %v999 = vpop.f32.mrb[0].mxu0
        %v1000 = vpop.f32.mrb[0].mxu0
        %v1001 = vadd.f32 0.0, %v1000
        %v1002 = vpop.f32.mrb[0].mxu0
        %1003 = vmatprep.mubr.bf16.mxu0 0
        %1004 = vmatmul.mubr.bf16.gmra.mrb[0].mxu0 %v955
        %v1005 = vpop.f32.mrb[0].mxu0
        %v1006 = vadd.f32 0.0, %v1005
        %v1007 = vpop.f32.mrb[0].mxu0
        %v1008 = vpop.f32.mrb[0].mxu0
        %v1009 = vpop.f32.mrb[0].mxu0
        %1010 = vdwg.mxu0
        %v1011 = vsel %vm495, %v998, -1e+30
        %v1012 = vsel %vm495, %v1001, -1e+30
        %v1013 = vsel %vm495, %v1006, -1e+30
        %v1014 = vsel %vm845, %v1011, -inf
        %1015 = vmax.xlane.f32.xlu0 %v1014
        %v1016 = vpop.xlane.xlu0 %1015
        %v1017 = vsel %vm845, %v1012, -inf
        %1018 = vmax.xlane.f32.xlu0 %v1017
        %v1019 = vpop.xlane.xlu0 %1018
        %v1020 = vsel %vm845, %v1013, -inf
        %1021 = vmax.xlane.f32.xlu0 %v1020
        %v1022 = vpop.xlane.xlu0 %1021
        %v1023 = vsub.f32 %v1011, %v1016
        %v1024 = vsub.f32 %v1012, %v1019
        %v1025 = vsub.f32 %v1013, %v1022
        %v1026 = vmul.f32 %v1023, 1.442695
        %v1027 = vpow.pop %v1026
        %v1028 = vmul.f32 %v1024, 1.442695
        %v1029 = vpow.pop %v1028
        %v1030 = vmul.f32 %v1025, 1.442695
        %v1031 = vpow.pop %v1030
        %v1032 = vsel %vm845, %v1027, 0.0
        %1033 = vadd.xlane.f32.xlu0 %v1032
        %v1034 = vpop.xlane.xlu0 %1033
        %v1035 = vsel %vm845, %v1029, 0.0
        %1036 = vadd.xlane.f32.xlu0 %v1035
        %v1037 = vpop.xlane.xlu0 %1036
        %v1038 = vsel %vm845, %v1031, 0.0
        %1039 = vadd.xlane.f32.xlu0 %v1038
        %v1040 = vpop.xlane.xlu0 %1039
        %v1041 = vrcp.pop %v1034
        %v1042 = vmul.f32 %v1027, %v1041
        %v1043 = vrcp.pop %v1037
        %v1044 = vmul.f32 %v1029, %v1043
        %v1045 = vrcp.pop %v1040
        %v1046 = vmul.f32 %v1031, %v1045
        %v1047 = vpack.c.bf16 %v1044, %v1042
        %v1048 = vpack.c.bf16 %v1046, %v1046
        %1051 = vrot.lane.b32.xlu0 %v881, 112
        %v1052 = vpop.permute.xlu0 %1051
        %1053 = vrot.lane.b32.xlu0 %v882, 112
        %v1054 = vpop.permute.xlu0 %1053
        %v1057 = vsel %vm845, %v1047, 0
        %v1060 = vsel %vm845, %v1048, 0
        %v1063 = vsel %vm889, %v1054, 0
        %1065 = vmatprep.subr.bf16.mxu0 0
        %1066 = vmatpush1.bf16.msra.mxu0 %v1052
        %1067 = vmatprep.subr.bf16.mxu0 0
        %1068 = vmatpush1.bf16.msra.mxu0 %v1063
        %1069 = vmatprep.subr.bf16.mxu0 0
        %1070 = vmatpush1.bf16.msra.mxu0 0
        %1071 = vmatprep.subr.bf16.mxu0 0
        %1072 = vmatpush1.bf16.msra.mxu0 0
        %1073 = vmatprep.subr.bf16.mxu0 0
        %1074 = vmatpush1.bf16.msra.mxu0 0
        %1075 = vmatprep.subr.bf16.mxu0 0
        %1076 = vmatpush1.bf16.msra.mxu0 0
        %1077 = vmatprep.subr.bf16.mxu0 0
        %1078 = vmatpush1.bf16.msra.mxu0 0
        %1079 = vmatprep.subr.bf16.mxu0 0
        %1080 = vmatpush1.bf16.msra.mxu0 0
        %1081 = vmatprep.subr.bf16.mxu0 0
        %1082 = vmatpush1.bf16.msra.mxu0 0
        %1083 = vmatprep.subr.bf16.mxu0 0
        %1084 = vmatpush1.bf16.msra.mxu0 0
        %1085 = vmatprep.subr.bf16.mxu0 0
        %1086 = vmatpush1.bf16.msra.mxu0 0
        %1087 = vmatprep.subr.bf16.mxu0 0
        %1088 = vmatpush1.bf16.msra.mxu0 0
        %1089 = vmatprep.subr.bf16.mxu0 0
        %1090 = vmatpush1.bf16.msra.mxu0 0
        %1091 = vmatprep.subr.bf16.mxu0 0
        %1092 = vmatpush1.bf16.msra.mxu0 0
        %1093 = vmatprep.subr.bf16.mxu0 0
        %1094 = vmatpush1.bf16.msra.mxu0 0
        %1095 = vmatprep.subr.bf16.mxu0 0
        %1096 = vmatpush1.bf16.msra.mxu0 0
        %1097 = vmatprep.mubr.bf16.mxu0 0
        %1098 = vmatmul.mubr.bf16.gmra.mrb[0].mxu0 %v1057
        %v1099 = vpop.f32.mrb[0].mxu0
        %v1100 = vadd.f32 0.0, %v1099
        %v1101 = vpop.f32.mrb[0].mxu0
        %v1102 = vpop.f32.mrb[0].mxu0
        %v1103 = vadd.f32 0.0, %v1102
        %v1104 = vpop.f32.mrb[0].mxu0
        %1105 = vmatprep.mubr.bf16.mxu0 0
        %1106 = vmatmul.mubr.bf16.gmra.mrb[0].mxu0 %v1060
        %v1107 = vpop.f32.mrb[0].mxu0
        %v1108 = vadd.f32 0.0, %v1107
        %v1109 = vpop.f32.mrb[0].mxu0
        %v1110 = vpop.f32.mrb[0].mxu0
        %v1111 = vpop.f32.mrb[0].mxu0
        %1112 = vdwg.mxu0
        %v1113 = vpack.c.bf16 %v1103, %v1100
        %v1114 = vpack.c.bf16 %v1108, %v1108
        %v1117 = vunpack.c.l.b16 %v767
        %v1118 = vunpack.c.l.b16 %v768
        %v1119 = vpack.c.b16 %v1118, %v1117
        %v1122 = vsel %vm781, %v1113, 0
        %v1125 = vsel %vm781, %v1114, 0
        %1127 = vmatprep.subr.bf16.mxu0 0
        %1128 = vmatpush1.bf16.msra.mxu0 %v1119
        %1129 = vmatprep.subr.bf16.mxu0 0
        %1130 = vmatpush1.bf16.msra.mxu0 0
        %1131 = vmatprep.subr.bf16.mxu0 0
        %1132 = vmatpush1.bf16.msra.mxu0 0
        %1133 = vmatprep.subr.bf16.mxu0 0
        %1134 = vmatpush1.bf16.msra.mxu0 0
        %1135 = vmatprep.subr.bf16.mxu0 0
        %1136 = vmatpush1.bf16.msra.mxu0 0
        %1137 = vmatprep.subr.bf16.mxu0 0
        %1138 = vmatpush1.bf16.msra.mxu0 0
        %1139 = vmatprep.subr.bf16.mxu0 0
        %1140 = vmatpush1.bf16.msra.mxu0 0
        %1141 = vmatprep.subr.bf16.mxu0 0
        %1142 = vmatpush1.bf16.msra.mxu0 0
        %1143 = vmatprep.subr.bf16.mxu0 0
        %1144 = vmatpush1.bf16.msra.mxu0 0
        %1145 = vmatprep.subr.bf16.mxu0 0
        %1146 = vmatpush1.bf16.msra.mxu0 0
        %1147 = vmatprep.subr.bf16.mxu0 0
        %1148 = vmatpush1.bf16.msra.mxu0 0
        %1149 = vmatprep.subr.bf16.mxu0 0
        %1150 = vmatpush1.bf16.msra.mxu0 0
        %1151 = vmatprep.subr.bf16.mxu0 0
        %1152 = vmatpush1.bf16.msra.mxu0 0
        %1153 = vmatprep.subr.bf16.mxu0 0
        %1154 = vmatpush1.bf16.msra.mxu0 0
        %1155 = vmatprep.subr.bf16.mxu0 0
        %1156 = vmatpush1.bf16.msra.mxu0 0
        %1157 = vmatprep.subr.bf16.mxu0 0
        %1158 = vmatpush1.bf16.msra.mxu0 0
        %1159 = vmatprep.mubr.bf16.mxu0 0
        %1160 = vmatmul.mubr.bf16.gmra.mrb[0].mxu0 %v1122
        %v1161 = vpop.f32.mrb[0].mxu0
        %v1162 = vadd.f32 0.0, %v1161
        %v1163 = vpop.f32.mrb[0].mxu0
        %v1164 = vpop.f32.mrb[0].mxu0
        %v1165 = vadd.f32 0.0, %v1164
        %v1166 = vpop.f32.mrb[0].mxu0
        %1167 = vmatprep.mubr.bf16.mxu0 0
        %1168 = vmatmul.mubr.bf16.gmra.mrb[0].mxu0 %v1125
        %v1169 = vpop.f32.mrb[0].mxu0
        %v1170 = vadd.f32 0.0, %v1169
        %v1171 = vpop.f32.mrb[0].mxu0
        %v1172 = vpop.f32.mrb[0].mxu0
        %v1173 = vpop.f32.mrb[0].mxu0
        %1174 = vdwg.mxu0
        %v1177 = vunpack.c.l.b16 %v765
        %v1178 = vunpack.c.l.b16 %v766
        %v1179 = vpack.c.b16 %v1178, %v1177
        %v1182 = vsel %vm781, %v941, 0
        %v1185 = vsel %vm781, %v942, 0
        %1187 = vmatprep.subr.bf16.mxu0 0
        %1188 = vmatpush1.bf16.msra.mxu0 %v1179
        %1189 = vmatprep.subr.bf16.mxu0 0
        %1190 = vmatpush1.bf16.msra.mxu0 0
        %1191 = vmatprep.subr.bf16.mxu0 0
        %1192 = vmatpush1.bf16.msra.mxu0 0
        %1193 = vmatprep.subr.bf16.mxu0 0
        %1194 = vmatpush1.bf16.msra.mxu0 0
        %1195 = vmatprep.subr.bf16.mxu0 0
        %1196 = vmatpush1.bf16.msra.mxu0 0
        %1197 = vmatprep.subr.bf16.mxu0 0
        %1198 = vmatpush1.bf16.msra.mxu0 0
        %1199 = vmatprep.subr.bf16.mxu0 0
        %1200 = vmatpush1.bf16.msra.mxu0 0
        %1201 = vmatprep.subr.bf16.mxu0 0
        %1202 = vmatpush1.bf16.msra.mxu0 0
        %1203 = vmatprep.subr.bf16.mxu0 0
        %1204 = vmatpush1.bf16.msra.mxu0 0
        %1205 = vmatprep.subr.bf16.mxu0 0
        %1206 = vmatpush1.bf16.msra.mxu0 0
        %1207 = vmatprep.subr.bf16.mxu0 0
        %1208 = vmatpush1.bf16.msra.mxu0 0
        %1209 = vmatprep.subr.bf16.mxu0 0
        %1210 = vmatpush1.bf16.msra.mxu0 0
        %1211 = vmatprep.subr.bf16.mxu0 0
        %1212 = vmatpush1.bf16.msra.mxu0 0
        %1213 = vmatprep.subr.bf16.mxu0 0
        %1214 = vmatpush1.bf16.msra.mxu0 0
        %1215 = vmatprep.subr.bf16.mxu0 0
        %1216 = vmatpush1.bf16.msra.mxu0 0
        %1217 = vmatprep.subr.bf16.mxu0 0
        %1218 = vmatpush1.bf16.msra.mxu0 0
        %1219 = vmatprep.mubr.bf16.mxu0 0
        %1220 = vmatmul.mubr.bf16.gmra.mrb[0].mxu0 %v1182
        %v1221 = vpop.f32.mrb[0].mxu0
        %v1222 = vadd.f32 %v1162, %v1221
        %v1223 = vpop.f32.mrb[0].mxu0
        %v1224 = vpop.f32.mrb[0].mxu0
        %v1225 = vadd.f32 %v1165, %v1224
        %v1226 = vpop.f32.mrb[0].mxu0
        %1227 = vmatprep.mubr.bf16.mxu0 0
        %1228 = vmatmul.mubr.bf16.gmra.mrb[0].mxu0 %v1185
        %v1229 = vpop.f32.mrb[0].mxu0
        %v1230 = vadd.f32 %v1170, %v1229
        %v1231 = vpop.f32.mrb[0].mxu0
        %v1232 = vpop.f32.mrb[0].mxu0
        %v1233 = vpop.f32.mrb[0].mxu0
        %1234 = vdwg.mxu0
        %1235 = vrot.lane.b32.xlu0 %v773, 96
        %v1236 = vpop.permute.xlu0 %1235
        %1237 = vrot.lane.b32.xlu0 %v774, 96
        %v1238 = vpop.permute.xlu0 %1237
        %1239 = vrot.lane.b32.xlu0 %v773, 32
        %v1240 = vpop.permute.xlu0 %1239
        %1241 = vrot.lane.b32.xlu0 %v774, 32
        %v1242 = vpop.permute.xlu0 %1241
        %v1244 = vsel %vm781, %v1236, 0
        %v1247 = vsel %vm781, %v1238, 0
        %v1250 = vsel %vm781, %v1240, 0
        %v1253 = vsel %vm781, %v1242, 0
        %1255 = vmatprep.subr.bf16.mxu0 0
        %1256 = vmatpush1.bf16.xpose.msra.mxu0 %v1250
        %1257 = vmatprep.subr.bf16.mxu0 0
        %1258 = vmatpush1.bf16.xpose.msra.mxu0 %v1253
        %1259 = vmatprep.subr.bf16.mxu0 0
        %1260 = vmatpush1.bf16.xpose.msra.mxu0 0
        %1261 = vmatprep.subr.bf16.mxu0 0
        %1262 = vmatpush1.bf16.xpose.msra.mxu0 0
        %1263 = vmatprep.subr.bf16.mxu0 0
        %1264 = vmatpush1.bf16.xpose.msra.mxu0 0
        %1265 = vmatprep.subr.bf16.mxu0 0
        %1266 = vmatpush1.bf16.xpose.msra.mxu0 0
        %1267 = vmatprep.subr.bf16.mxu0 0
        %1268 = vmatpush1.bf16.xpose.msra.mxu0 0
        %1269 = vmatprep.subr.bf16.mxu0 0
        %1270 = vmatpush1.bf16.xpose.msra.mxu0 0
        %1271 = vmatprep.subr.bf16.mxu0 0
        %1272 = vmatpush1.bf16.xpose.msra.mxu0 0
        %1273 = vmatprep.subr.bf16.mxu0 0
        %1274 = vmatpush1.bf16.xpose.msra.mxu0 0
        %1275 = vmatprep.subr.bf16.mxu0 0
        %1276 = vmatpush1.bf16.xpose.msra.mxu0 0
        %1277 = vmatprep.subr.bf16.mxu0 0
        %1278 = vmatpush1.bf16.xpose.msra.mxu0 0
        %1279 = vmatprep.subr.bf16.mxu0 0
        %1280 = vmatpush1.bf16.xpose.msra.mxu0 0
        %1281 = vmatprep.subr.bf16.mxu0 0
        %1282 = vmatpush1.bf16.xpose.msra.mxu0 0
        %1283 = vmatprep.subr.bf16.mxu0 0
        %1284 = vmatpush1.bf16.xpose.msra.mxu0 0
        %1285 = vmatprep.subr.bf16.mxu0 0
        %1286 = vmatpush1.bf16.xpose.msra.mxu0 0
        %1287 = vmatprep.mubr.bf16.mxu0 0
        %1288 = vmatmul.mubr.bf16.gmra.mrb[0].mxu0 %v1244
        %v1289 = vpop.f32.mrb[0].mxu0
        %v1290 = vadd.f32 0.0, %v1289
        %v1291 = vpop.f32.mrb[0].mxu0
        %v1292 = vpop.f32.mrb[0].mxu0
        %v1293 = vadd.f32 0.0, %v1292
        %v1294 = vpop.f32.mrb[0].mxu0
        %1295 = vmatprep.mubr.bf16.mxu0 0
        %1296 = vmatmul.mubr.bf16.gmra.mrb[0].mxu0 %v1247
        %v1297 = vpop.f32.mrb[0].mxu0
        %v1298 = vadd.f32 0.0, %v1297
        %v1299 = vpop.f32.mrb[0].mxu0
        %v1300 = vpop.f32.mrb[0].mxu0
        %v1301 = vpop.f32.mrb[0].mxu0
        %1302 = vdwg.mxu0
        %v1303 = vsel %vm495, %v1290, -1e+30
        %v1304 = vsel %vm495, %v1293, -1e+30
        %v1305 = vsel %vm495, %v1298, -1e+30
        %v1306 = vsel %vm845, %v1303, -inf
        %1307 = vmax.xlane.f32.xlu0 %v1306
        %v1308 = vpop.xlane.xlu0 %1307
        %v1309 = vsel %vm845, %v1304, -inf
        %1310 = vmax.xlane.f32.xlu0 %v1309
        %v1311 = vpop.xlane.xlu0 %1310
        %v1312 = vsel %vm845, %v1305, -inf
        %1313 = vmax.xlane.f32.xlu0 %v1312
        %v1314 = vpop.xlane.xlu0 %1313
        %v1315 = vsub.f32 %v1303, %v1308
        %v1316 = vsub.f32 %v1304, %v1311
        %v1317 = vsub.f32 %v1305, %v1314
        %v1318 = vmul.f32 %v1315, 1.442695
        %v1319 = vpow.pop %v1318
        %v1320 = vmul.f32 %v1316, 1.442695
        %v1321 = vpow.pop %v1320
        %v1322 = vmul.f32 %v1317, 1.442695
        %v1323 = vpow.pop %v1322
        %v1324 = vsel %vm845, %v1319, 0.0
        %1325 = vadd.xlane.f32.xlu0 %v1324
        %v1326 = vpop.xlane.xlu0 %1325
        %v1327 = vsel %vm845, %v1321, 0.0
        %1328 = vadd.xlane.f32.xlu0 %v1327
        %v1329 = vpop.xlane.xlu0 %1328
        %v1330 = vsel %vm845, %v1323, 0.0
        %1331 = vadd.xlane.f32.xlu0 %v1330
        %v1332 = vpop.xlane.xlu0 %1331
        %v1333 = vrcp.pop %v1326
        %v1334 = vmul.f32 %v1319, %v1333
        %v1335 = vrcp.pop %v1329
        %v1336 = vmul.f32 %v1321, %v1335
        %v1337 = vrcp.pop %v1332
        %v1338 = vmul.f32 %v1323, %v1337
        %v1339 = vpack.c.bf16 %v1336, %v1334
        %v1340 = vpack.c.bf16 %v1338, %v1338
        %1341 = vrot.lane.b32.xlu0 %v881, 96
        %v1342 = vpop.permute.xlu0 %1341
        %1343 = vrot.lane.b32.xlu0 %v882, 96
        %v1344 = vpop.permute.xlu0 %1343
        %v1347 = vsel %vm845, %v1339, 0
        %v1350 = vsel %vm845, %v1340, 0
        %v1353 = vsel %vm889, %v1344, 0
        %1355 = vmatprep.subr.bf16.mxu0 0
        %1356 = vmatpush1.bf16.msra.mxu0 %v1342
        %1357 = vmatprep.subr.bf16.mxu0 0
        %1358 = vmatpush1.bf16.msra.mxu0 %v1353
        %1359 = vmatprep.subr.bf16.mxu0 0
        %1360 = vmatpush1.bf16.msra.mxu0 0
        %1361 = vmatprep.subr.bf16.mxu0 0
        %1362 = vmatpush1.bf16.msra.mxu0 0
        %1363 = vmatprep.subr.bf16.mxu0 0
        %1364 = vmatpush1.bf16.msra.mxu0 0
        %1365 = vmatprep.subr.bf16.mxu0 0
        %1366 = vmatpush1.bf16.msra.mxu0 0
        %1367 = vmatprep.subr.bf16.mxu0 0
        %1368 = vmatpush1.bf16.msra.mxu0 0
        %1369 = vmatprep.subr.bf16.mxu0 0
        %1370 = vmatpush1.bf16.msra.mxu0 0
        %1371 = vmatprep.subr.bf16.mxu0 0
        %1372 = vmatpush1.bf16.msra.mxu0 0
        %1373 = vmatprep.subr.bf16.mxu0 0
        %1374 = vmatpush1.bf16.msra.mxu0 0
        %1375 = vmatprep.subr.bf16.mxu0 0
        %1376 = vmatpush1.bf16.msra.mxu0 0
        %1377 = vmatprep.subr.bf16.mxu0 0
        %1378 = vmatpush1.bf16.msra.mxu0 0
        %1379 = vmatprep.subr.bf16.mxu0 0
        %1380 = vmatpush1.bf16.msra.mxu0 0
        %1381 = vmatprep.subr.bf16.mxu0 0
        %1382 = vmatpush1.bf16.msra.mxu0 0
        %1383 = vmatprep.subr.bf16.mxu0 0
        %1384 = vmatpush1.bf16.msra.mxu0 0
        %1385 = vmatprep.subr.bf16.mxu0 0
        %1386 = vmatpush1.bf16.msra.mxu0 0
        %1387 = vmatprep.mubr.bf16.mxu0 0
        %1388 = vmatmul.mubr.bf16.gmra.mrb[0].mxu0 %v1347
        %v1389 = vpop.f32.mrb[0].mxu0
        %v1390 = vadd.f32 0.0, %v1389
        %v1391 = vpop.f32.mrb[0].mxu0
        %v1392 = vpop.f32.mrb[0].mxu0
        %v1393 = vadd.f32 0.0, %v1392
        %v1394 = vpop.f32.mrb[0].mxu0
        %1395 = vmatprep.mubr.bf16.mxu0 0
        %1396 = vmatmul.mubr.bf16.gmra.mrb[0].mxu0 %v1350
        %v1397 = vpop.f32.mrb[0].mxu0
        %v1398 = vadd.f32 0.0, %v1397
        %v1399 = vpop.f32.mrb[0].mxu0
        %v1400 = vpop.f32.mrb[0].mxu0
        %v1401 = vpop.f32.mrb[0].mxu0
        %1402 = vdwg.mxu0
        %v1403 = vpack.c.bf16 %v1393, %v1390
        %v1404 = vpack.c.bf16 %v1398, %v1398
        %v1407 = vunpack.c.l.b16 %v769
        %v1408 = vunpack.c.l.b16 %v770
        %v1409 = vpack.c.b16 %v1408, %v1407
        %v1412 = vsel %vm781, %v1403, 0
        %v1415 = vsel %vm781, %v1404, 0
        %1417 = vmatprep.subr.bf16.mxu0 0
        %1418 = vmatpush1.bf16.msra.mxu0 %v1409
        %1419 = vmatprep.subr.bf16.mxu0 0
        %1420 = vmatpush1.bf16.msra.mxu0 0
        %1421 = vmatprep.subr.bf16.mxu0 0
        %1422 = vmatpush1.bf16.msra.mxu0 0
        %1423 = vmatprep.subr.bf16.mxu0 0
        %1424 = vmatpush1.bf16.msra.mxu0 0
        %1425 = vmatprep.subr.bf16.mxu0 0
        %1426 = vmatpush1.bf16.msra.mxu0 0
        %1427 = vmatprep.subr.bf16.mxu0 0
        %1428 = vmatpush1.bf16.msra.mxu0 0
        %1429 = vmatprep.subr.bf16.mxu0 0
        %1430 = vmatpush1.bf16.msra.mxu0 0
        %1431 = vmatprep.subr.bf16.mxu0 0
        %1432 = vmatpush1.bf16.msra.mxu0 0
        %1433 = vmatprep.subr.bf16.mxu0 0
        %1434 = vmatpush1.bf16.msra.mxu0 0
        %1435 = vmatprep.subr.bf16.mxu0 0
        %1436 = vmatpush1.bf16.msra.mxu0 0
        %1437 = vmatprep.subr.bf16.mxu0 0
        %1438 = vmatpush1.bf16.msra.mxu0 0
        %1439 = vmatprep.subr.bf16.mxu0 0
        %1440 = vmatpush1.bf16.msra.mxu0 0
        %1441 = vmatprep.subr.bf16.mxu0 0
        %1442 = vmatpush1.bf16.msra.mxu0 0
        %1443 = vmatprep.subr.bf16.mxu0 0
        %1444 = vmatpush1.bf16.msra.mxu0 0
        %1445 = vmatprep.subr.bf16.mxu0 0
        %1446 = vmatpush1.bf16.msra.mxu0 0
        %1447 = vmatprep.subr.bf16.mxu0 0
        %1448 = vmatpush1.bf16.msra.mxu0 0
        %1449 = vmatprep.mubr.bf16.mxu0 0
        %1450 = vmatmul.mubr.bf16.gmra.mrb[0].mxu0 %v1412
        %v1451 = vpop.f32.mrb[0].mxu0
        %v1452 = vadd.f32 0.0, %v1451
        %v1453 = vpop.f32.mrb[0].mxu0
        %v1454 = vpop.f32.mrb[0].mxu0
        %v1455 = vadd.f32 0.0, %v1454
        %v1456 = vpop.f32.mrb[0].mxu0
        %1457 = vmatprep.mubr.bf16.mxu0 0
        %1458 = vmatmul.mubr.bf16.gmra.mrb[0].mxu0 %v1415
        %v1459 = vpop.f32.mrb[0].mxu0
        %v1460 = vadd.f32 0.0, %v1459
        %v1461 = vpop.f32.mrb[0].mxu0
        %v1462 = vpop.f32.mrb[0].mxu0
        %v1463 = vpop.f32.mrb[0].mxu0
        %1464 = vdwg.mxu0
        %v1465 = vadd.f32 %v1222, %v1452
        %v1466 = vadd.f32 %v1225, %v1455
        %v1467 = vadd.f32 %v1230, %v1460
        %1468 = vrot.lane.b32.xlu0 %v773, 80
        %v1469 = vpop.permute.xlu0 %1468
        %1470 = vrot.lane.b32.xlu0 %v774, 80
        %v1471 = vpop.permute.xlu0 %1470
        %1472 = vrot.lane.b32.xlu0 %v773, 16
        %v1473 = vpop.permute.xlu0 %1472
        %1474 = vrot.lane.b32.xlu0 %v774, 16
        %v1475 = vpop.permute.xlu0 %1474
        %v1477 = vsel %vm781, %v1469, 0
        %v1480 = vsel %vm781, %v1471, 0
        %v1483 = vsel %vm781, %v1473, 0
        %v1486 = vsel %vm781, %v1475, 0
        %1488 = vmatprep.subr.bf16.mxu0 0
        %1489 = vmatpush1.bf16.xpose.msra.mxu0 %v1483
        %1490 = vmatprep.subr.bf16.mxu0 0
        %1491 = vmatpush1.bf16.xpose.msra.mxu0 %v1486
        %1492 = vmatprep.subr.bf16.mxu0 0
        %1493 = vmatpush1.bf16.xpose.msra.mxu0 0
        %1494 = vmatprep.subr.bf16.mxu0 0
        %1495 = vmatpush1.bf16.xpose.msra.mxu0 0
        %1496 = vmatprep.subr.bf16.mxu0 0
        %1497 = vmatpush1.bf16.xpose.msra.mxu0 0
        %1498 = vmatprep.subr.bf16.mxu0 0
        %1499 = vmatpush1.bf16.xpose.msra.mxu0 0
        %1500 = vmatprep.subr.bf16.mxu0 0
        %1501 = vmatpush1.bf16.xpose.msra.mxu0 0
        %1502 = vmatprep.subr.bf16.mxu0 0
        %1503 = vmatpush1.bf16.xpose.msra.mxu0 0
        %1504 = vmatprep.subr.bf16.mxu0 0
        %1505 = vmatpush1.bf16.xpose.msra.mxu0 0
        %1506 = vmatprep.subr.bf16.mxu0 0
        %1507 = vmatpush1.bf16.xpose.msra.mxu0 0
        %1508 = vmatprep.subr.bf16.mxu0 0
        %1509 = vmatpush1.bf16.xpose.msra.mxu0 0
        %1510 = vmatprep.subr.bf16.mxu0 0
        %1511 = vmatpush1.bf16.xpose.msra.mxu0 0
        %1512 = vmatprep.subr.bf16.mxu0 0
        %1513 = vmatpush1.bf16.xpose.msra.mxu0 0
        %1514 = vmatprep.subr.bf16.mxu0 0
        %1515 = vmatpush1.bf16.xpose.msra.mxu0 0
        %1516 = vmatprep.subr.bf16.mxu0 0
        %1517 = vmatpush1.bf16.xpose.msra.mxu0 0
        %1518 = vmatprep.subr.bf16.mxu0 0
        %1519 = vmatpush1.bf16.xpose.msra.mxu0 0
        %1520 = vmatprep.mubr.bf16.mxu0 0
        %1521 = vmatmul.mubr.bf16.gmra.mrb[0].mxu0 %v1477
        %v1522 = vpop.f32.mrb[0].mxu0
        %v1523 = vadd.f32 0.0, %v1522
        %v1524 = vpop.f32.mrb[0].mxu0
        %v1525 = vpop.f32.mrb[0].mxu0
        %v1526 = vadd.f32 0.0, %v1525
        %v1527 = vpop.f32.mrb[0].mxu0
        %1528 = vmatprep.mubr.bf16.mxu0 0
        %1529 = vmatmul.mubr.bf16.gmra.mrb[0].mxu0 %v1480
        %v1530 = vpop.f32.mrb[0].mxu0
        %v1531 = vadd.f32 0.0, %v1530
        %v1532 = vpop.f32.mrb[0].mxu0
        %v1533 = vpop.f32.mrb[0].mxu0
        %v1534 = vpop.f32.mrb[0].mxu0
        %1535 = vdwg.mxu0
        %v1536 = vsel %vm495, %v1523, -1e+30
        %v1537 = vsel %vm495, %v1526, -1e+30
        %v1538 = vsel %vm495, %v1531, -1e+30
        %v1539 = vsel %vm845, %v1536, -inf
        %1540 = vmax.xlane.f32.xlu0 %v1539
        %v1541 = vpop.xlane.xlu0 %1540
        %v1542 = vsel %vm845, %v1537, -inf
        %1543 = vmax.xlane.f32.xlu0 %v1542
        %v1544 = vpop.xlane.xlu0 %1543
        %v1545 = vsel %vm845, %v1538, -inf
        %1546 = vmax.xlane.f32.xlu0 %v1545
        %v1547 = vpop.xlane.xlu0 %1546
        %v1548 = vsub.f32 %v1536, %v1541
        %v1549 = vsub.f32 %v1537, %v1544
        %v1550 = vsub.f32 %v1538, %v1547
        %v1551 = vmul.f32 %v1548, 1.442695
        %v1552 = vpow.pop %v1551
        %v1553 = vmul.f32 %v1549, 1.442695
        %v1554 = vpow.pop %v1553
        %v1555 = vmul.f32 %v1550, 1.442695
        %v1556 = vpow.pop %v1555
        %v1557 = vsel %vm845, %v1552, 0.0
        %1558 = vadd.xlane.f32.xlu0 %v1557
        %v1559 = vpop.xlane.xlu0 %1558
        %v1560 = vsel %vm845, %v1554, 0.0
        %1561 = vadd.xlane.f32.xlu0 %v1560
        %v1562 = vpop.xlane.xlu0 %1561
        %v1563 = vsel %vm845, %v1556, 0.0
        %1564 = vadd.xlane.f32.xlu0 %v1563
        %v1565 = vpop.xlane.xlu0 %1564
        %v1566 = vrcp.pop %v1559
        %v1567 = vmul.f32 %v1552, %v1566
        %v1568 = vrcp.pop %v1562
        %v1569 = vmul.f32 %v1554, %v1568
        %v1570 = vrcp.pop %v1565
        %v1571 = vmul.f32 %v1556, %v1570
        %v1572 = vpack.c.bf16 %v1569, %v1567
        %v1573 = vpack.c.bf16 %v1571, %v1571
        %1574 = vrot.lane.b32.xlu0 %v881, 80
        %v1575 = vpop.permute.xlu0 %1574
        %1576 = vrot.lane.b32.xlu0 %v882, 80
        %v1577 = vpop.permute.xlu0 %1576
        %v1580 = vsel %vm845, %v1572, 0
        %v1583 = vsel %vm845, %v1573, 0
        %v1586 = vsel %vm889, %v1577, 0
        %1588 = vmatprep.subr.bf16.mxu0 0
        %1589 = vmatpush1.bf16.msra.mxu0 %v1575
        %1590 = vmatprep.subr.bf16.mxu0 0
        %1591 = vmatpush1.bf16.msra.mxu0 %v1586
        %1592 = vmatprep.subr.bf16.mxu0 0
        %1593 = vmatpush1.bf16.msra.mxu0 0
        %1594 = vmatprep.subr.bf16.mxu0 0
        %1595 = vmatpush1.bf16.msra.mxu0 0
        %1596 = vmatprep.subr.bf16.mxu0 0
        %1597 = vmatpush1.bf16.msra.mxu0 0
        %1598 = vmatprep.subr.bf16.mxu0 0
        %1599 = vmatpush1.bf16.msra.mxu0 0
        %1600 = vmatprep.subr.bf16.mxu0 0
        %1601 = vmatpush1.bf16.msra.mxu0 0
        %1602 = vmatprep.subr.bf16.mxu0 0
        %1603 = vmatpush1.bf16.msra.mxu0 0
        %1604 = vmatprep.subr.bf16.mxu0 0
        %1605 = vmatpush1.bf16.msra.mxu0 0
        %1606 = vmatprep.subr.bf16.mxu0 0
        %1607 = vmatpush1.bf16.msra.mxu0 0
        %1608 = vmatprep.subr.bf16.mxu0 0
        %1609 = vmatpush1.bf16.msra.mxu0 0
        %1610 = vmatprep.subr.bf16.mxu0 0
        %1611 = vmatpush1.bf16.msra.mxu0 0
        %1612 = vmatprep.subr.bf16.mxu0 0
        %1613 = vmatpush1.bf16.msra.mxu0 0
        %1614 = vmatprep.subr.bf16.mxu0 0
        %1615 = vmatpush1.bf16.msra.mxu0 0
        %1616 = vmatprep.subr.bf16.mxu0 0
        %1617 = vmatpush1.bf16.msra.mxu0 0
        %1618 = vmatprep.subr.bf16.mxu0 0
        %1619 = vmatpush1.bf16.msra.mxu0 0
        %1620 = vmatprep.mubr.bf16.mxu0 0
        %1621 = vmatmul.mubr.bf16.gmra.mrb[0].mxu0 %v1580
        %v1622 = vpop.f32.mrb[0].mxu0
        %v1623 = vadd.f32 0.0, %v1622
        %v1624 = vpop.f32.mrb[0].mxu0
        %v1625 = vpop.f32.mrb[0].mxu0
        %v1626 = vadd.f32 0.0, %v1625
        %v1627 = vpop.f32.mrb[0].mxu0
        %1628 = vmatprep.mubr.bf16.mxu0 0
        %1629 = vmatmul.mubr.bf16.gmra.mrb[0].mxu0 %v1583
        %v1630 = vpop.f32.mrb[0].mxu0
        %v1631 = vadd.f32 0.0, %v1630
        %v1632 = vpop.f32.mrb[0].mxu0
        %v1633 = vpop.f32.mrb[0].mxu0
        %v1634 = vpop.f32.mrb[0].mxu0
        %1635 = vdwg.mxu0
        %v1636 = vpack.c.bf16 %v1626, %v1623
        %v1637 = vpack.c.bf16 %v1631, %v1631
        %v1640 = vunpack.c.l.b16 %v771
        %v1641 = vunpack.c.l.b16 %v772
        %v1642 = vpack.c.b16 %v1641, %v1640
        %v1645 = vsel %vm781, %v1636, 0
        %v1648 = vsel %vm781, %v1637, 0
        %1650 = vmatprep.subr.bf16.mxu0 0
        %1651 = vmatpush1.bf16.msra.mxu0 %v1642
        %1652 = vmatprep.subr.bf16.mxu0 0
        %1653 = vmatpush1.bf16.msra.mxu0 0
        %1654 = vmatprep.subr.bf16.mxu0 0
        %1655 = vmatpush1.bf16.msra.mxu0 0
        %1656 = vmatprep.subr.bf16.mxu0 0
        %1657 = vmatpush1.bf16.msra.mxu0 0
        %1658 = vmatprep.subr.bf16.mxu0 0
        %1659 = vmatpush1.bf16.msra.mxu0 0
        %1660 = vmatprep.subr.bf16.mxu0 0
        %1661 = vmatpush1.bf16.msra.mxu0 0
        %1662 = vmatprep.subr.bf16.mxu0 0
        %1663 = vmatpush1.bf16.msra.mxu0 0
        %1664 = vmatprep.subr.bf16.mxu0 0
        %1665 = vmatpush1.bf16.msra.mxu0 0
        %1666 = vmatprep.subr.bf16.mxu0 0
        %1667 = vmatpush1.bf16.msra.mxu0 0
        %1668 = vmatprep.subr.bf16.mxu0 0
        %1669 = vmatpush1.bf16.msra.mxu0 0
        %1670 = vmatprep.subr.bf16.mxu0 0
        %1671 = vmatpush1.bf16.msra.mxu0 0
        %1672 = vmatprep.subr.bf16.mxu0 0
        %1673 = vmatpush1.bf16.msra.mxu0 0
        %1674 = vmatprep.subr.bf16.mxu0 0
        %1675 = vmatpush1.bf16.msra.mxu0 0
        %1676 = vmatprep.subr.bf16.mxu0 0
        %1677 = vmatpush1.bf16.msra.mxu0 0
        %1678 = vmatprep.subr.bf16.mxu0 0
        %1679 = vmatpush1.bf16.msra.mxu0 0
        %1680 = vmatprep.subr.bf16.mxu0 0
        %1681 = vmatpush1.bf16.msra.mxu0 0
        %1682 = vmatprep.mubr.bf16.mxu0 0
        %1683 = vmatmul.mubr.bf16.gmra.mrb[0].mxu0 %v1645
        %v1684 = vpop.f32.mrb[0].mxu0
        %v1685 = vadd.f32 0.0, %v1684
        %v1686 = vpop.f32.mrb[0].mxu0
        %v1687 = vpop.f32.mrb[0].mxu0
        %v1688 = vadd.f32 0.0, %v1687
        %v1689 = vpop.f32.mrb[0].mxu0
        %1690 = vmatprep.mubr.bf16.mxu0 0
        %1691 = vmatmul.mubr.bf16.gmra.mrb[0].mxu0 %v1648
        %v1692 = vpop.f32.mrb[0].mxu0
        %v1693 = vadd.f32 0.0, %v1692
        %v1694 = vpop.f32.mrb[0].mxu0
        %v1695 = vpop.f32.mrb[0].mxu0
        %v1696 = vpop.f32.mrb[0].mxu0
        %1697 = vdwg.mxu0
        %v1698 = vadd.f32 %v1465, %v1685
        %v1699 = vadd.f32 %v1466, %v1688
        %v1700 = vadd.f32 %v1467, %v1693
        %v1701 = vadd.f32 %v578, %v1698
        %v1702 = vadd.f32 %v581, %v1699
        %v1703 = vadd.f32 %v586, %v1700
        %v1704 = vld [vmem:[%s7] sm:$0x1]
        %v1706 = vlaneseq
        %v1707 = vshrl.u32 %v1706, 7
        %v1708 = vsub.s32 0, %v1707
        %v1709 = vrot.slane %v1704, %v1708
        %v1711 = vadd.f32 %v1701, %v1709
        %v1712 = vadd.f32 %v1702, %v1709
        %v1713 = vadd.f32 %v1703, %v1709
        %v1714 = vsel %vm536, %v1711, 0.0
        %1715 = vadd.xlane.f32.xlu0 %v1714
        %v1716 = vpop.xlane.xlu0 %1715
        %v1717 = vsel %vm536, %v1712, 0.0
        %1718 = vadd.xlane.f32.xlu0 %v1717
        %v1719 = vpop.xlane.xlu0 %1718
        %v1720 = vsel %vm536, %v1713, 0.0
        %1721 = vadd.xlane.f32.xlu0 %v1720
        %v1722 = vpop.xlane.xlu0 %1721
        %v1723 = vmul.f32 %v1716, %v601
        %v1724 = vmul.f32 %v1719, %v601
        %v1725 = vmul.f32 %v1722, %v601
        %v1726 = vsub.f32 %v1711, %v1723
        %v1727 = vsub.f32 %v1712, %v1724
        %v1728 = vsub.f32 %v1713, %v1725
        %v1729 = vmul.f32 %v1726, %v1726
        %v1730 = vmul.f32 %v1727, %v1727
        %v1731 = vmul.f32 %v1728, %v1728
        %v1732 = vsel %vm536, %v1729, 0.0
        %1733 = vadd.xlane.f32.xlu0 %v1732
        %v1734 = vpop.xlane.xlu0 %1733
        %v1735 = vsel %vm536, %v1730, 0.0
        %1736 = vadd.xlane.f32.xlu0 %v1735
        %v1737 = vpop.xlane.xlu0 %1736
        %v1738 = vsel %vm536, %v1731, 0.0
        %1739 = vadd.xlane.f32.xlu0 %v1738
        %v1740 = vpop.xlane.xlu0 %1739
        %v1741 = vmul.f32 %v1734, %v601
        %v1742 = vmul.f32 %v1737, %v601
        %v1743 = vmul.f32 %v1740, %v601
        %v1744 = vadd.f32 %v1741, 1e-06
        %v1745 = vadd.f32 %v1742, 1e-06
        %v1746 = vadd.f32 %v1743, 1e-06
        %v1747 = vrsqrt.pop %v1744
        %v1748 = vrsqrt.pop %v1745
        %v1749 = vrsqrt.pop %v1746
        %v1750 = vmul.f32 %v1726, %v1747
        %v1751 = vmul.f32 %v1727, %v1748
        %v1752 = vmul.f32 %v1728, %v1749
        %v1753 = vlaneseq
        %v1754 = vshrl.u32 %v1753, 7
        %v1755 = vsub.s32 2, %v1754
        %v1756 = vrot.slane %v591, %v1755
        %v1757 = vmul.f32 %v1750, %v1756
        %v1758 = vmul.f32 %v1751, %v1756
        %v1759 = vmul.f32 %v1752, %v1756
        %v1760 = vlaneseq
        %v1761 = vshrl.u32 %v1760, 7
        %v1762 = vsub.s32 3, %v1761
        %v1763 = vrot.slane %v591, %v1762
        %v1764 = vadd.f32 %v1757, %v1763
        %v1765 = vadd.f32 %v1758, %v1763
        %v1766 = vadd.f32 %v1759, %v1763
        %v1767 = vpack.c.bf16 %v1765, %v1764
        %v1768 = vpack.c.bf16 %v1766, %v1766
        %v1769 = vld [vmem:[%s8] sm:$0xf]
        %v1770 = vld [vmem:[%s8 + $0x4] sm:$0xf]
        %v1771 = vld [vmem:[%s8 + $0x8] sm:$0xf]
        %v1772 = vld [vmem:[%s8 + $0xc] sm:$0xf]
        %v1773 = vld [vmem:[%s8 + $0x10] sm:$0xf]
        %v1774 = vld [vmem:[%s8 + $0x14] sm:$0xf]
        %v1775 = vld [vmem:[%s8 + $0x18] sm:$0xf]
        %v1776 = vld [vmem:[%s8 + $0x1c] sm:$0xf]
        %v1777 = vld [vmem:[%s9] sm:$0x1]
        %v1779 = vlaneseq
        %v1780 = vshrl.u32 %v1779, 7
        %v1781 = vsub.s32 0, %v1780
        %v1782 = vrot.slane %v1777, %v1781
        %v1792 = vunpack.c.l.b16 %v1769
        %v1793 = vunpack.c.l.b16 %v1770
        %v1794 = vunpack.c.l.b16 %v1771
        %v1795 = vunpack.c.l.b16 %v1772
        %v1796 = vunpack.c.l.b16 %v1773
        %v1797 = vunpack.c.l.b16 %v1774
        %v1798 = vunpack.c.l.b16 %v1775
        %v1799 = vunpack.c.l.b16 %v1776
        %v1800 = vpack.c.b16 %v1793, %v1792
        %v1801 = vpack.c.b16 %v1795, %v1794
        %v1802 = vpack.c.b16 %v1797, %v1796
        %v1803 = vpack.c.b16 %v1799, %v1798
        %v1809 = vsel %vm536, %v1767, 0
        %v1812 = vsel %vm536, %v1768, 0
        %1814 = vmatprep.subr.bf16.mxu0 0
        %1815 = vmatpush1.bf16.msra.mxu0 %v1800
        %1816 = vmatprep.subr.bf16.mxu0 0
        %1817 = vmatpush1.bf16.msra.mxu0 %v1801
        %1818 = vmatprep.subr.bf16.mxu0 0
        %1819 = vmatpush1.bf16.msra.mxu0 %v1802
        %1820 = vmatprep.subr.bf16.mxu0 0
        %1821 = vmatpush1.bf16.msra.mxu0 %v1803
        %1822 = vmatprep.subr.bf16.mxu0 0
        %1823 = vmatpush1.bf16.msra.mxu0 0
        %1824 = vmatprep.subr.bf16.mxu0 0
        %1825 = vmatpush1.bf16.msra.mxu0 0
        %1826 = vmatprep.subr.bf16.mxu0 0
        %1827 = vmatpush1.bf16.msra.mxu0 0
        %1828 = vmatprep.subr.bf16.mxu0 0
        %1829 = vmatpush1.bf16.msra.mxu0 0
        %1830 = vmatprep.subr.bf16.mxu0 0
        %1831 = vmatpush1.bf16.msra.mxu0 0
        %1832 = vmatprep.subr.bf16.mxu0 0
        %1833 = vmatpush1.bf16.msra.mxu0 0
        %1834 = vmatprep.subr.bf16.mxu0 0
        %1835 = vmatpush1.bf16.msra.mxu0 0
        %1836 = vmatprep.subr.bf16.mxu0 0
        %1837 = vmatpush1.bf16.msra.mxu0 0
        %1838 = vmatprep.subr.bf16.mxu0 0
        %1839 = vmatpush1.bf16.msra.mxu0 0
        %1840 = vmatprep.subr.bf16.mxu0 0
        %1841 = vmatpush1.bf16.msra.mxu0 0
        %1842 = vmatprep.subr.bf16.mxu0 0
        %1843 = vmatpush1.bf16.msra.mxu0 0
        %1844 = vmatprep.subr.bf16.mxu0 0
        %1845 = vmatpush1.bf16.msra.mxu0 0
        %1846 = vmatprep.mubr.bf16.mxu0 0
        %1847 = vmatmul.mubr.bf16.gmra.mrb[0].mxu0 %v1809
        %v1848 = vpop.f32.mrb[0].mxu0
        %v1849 = vadd.f32 %v1782, %v1848
        %v1850 = vpop.f32.mrb[0].mxu0
        %v1851 = vpop.f32.mrb[0].mxu0
        %v1852 = vadd.f32 %v1782, %v1851
        %v1853 = vpop.f32.mrb[0].mxu0
        %1854 = vmatprep.mubr.bf16.mxu0 0
        %1855 = vmatmul.mubr.bf16.gmra.mrb[0].mxu0 %v1812
        %v1856 = vpop.f32.mrb[0].mxu0
        %v1857 = vadd.f32 %v1782, %v1856
        %v1858 = vpop.f32.mrb[0].mxu0
        %v1859 = vpop.f32.mrb[0].mxu0
        %v1860 = vpop.f32.mrb[0].mxu0
        %1861 = vdwg.mxu0
        %v1862 = vmul.f32 %v1849, 0.70710677
        %v1863 = vmul.f32 %v1852, 0.70710677
        %v1864 = vmul.f32 %v1857, 0.70710677
        %vm1865 = vcmp.ge.f32.partialorder %v1862, 0.0
        %vm1866 = vcmp.ge.f32.partialorder %v1863, 0.0
        %vm1867 = vcmp.ge.f32.partialorder %v1864, 0.0
        %v1868 = vsel %vm1865, 1.0, -1.0
        %v1869 = vsel %vm1866, 1.0, -1.0
        %v1870 = vsel %vm1867, 1.0, -1.0
        %v1871 = vand.u32 2147483647, %v1862
        %v1872 = vand.u32 2147483647, %v1863
        %v1873 = vand.u32 2147483647, %v1864
        %v1874 = vmul.f32 %v1871, 0.3275911
        %v1875 = vmul.f32 %v1872, 0.3275911
        %v1876 = vmul.f32 %v1873, 0.3275911
        %v1877 = vadd.f32 %v1874, 1.0
        %v1878 = vadd.f32 %v1875, 1.0
        %v1879 = vadd.f32 %v1876, 1.0
        %v1880 = vrcp.pop %v1877
        %v1881 = vrcp.pop %v1878
        %v1882 = vrcp.pop %v1879
        %v1883 = vmul.f32 %v1880, 1.0614054
        %v1884 = vmul.f32 %v1881, 1.0614054
        %v1885 = vmul.f32 %v1882, 1.0614054
        %v1886 = vsub.f32 %v1883, 1.4531521
        %v1887 = vsub.f32 %v1884, 1.4531521
        %v1888 = vsub.f32 %v1885, 1.4531521
        %v1889 = vmul.f32 %v1886, %v1880
        %v1890 = vmul.f32 %v1887, %v1881
        %v1891 = vmul.f32 %v1888, %v1882
        %v1892 = vadd.f32 %v1889, 1.4214138
        %v1893 = vadd.f32 %v1890, 1.4214138
        %v1894 = vadd.f32 %v1891, 1.4214138
        %v1895 = vmul.f32 %v1892, %v1880
        %v1896 = vmul.f32 %v1893, %v1881
        %v1897 = vmul.f32 %v1894, %v1882
        %v1898 = vsub.f32 %v1895, 0.28449672
        %v1899 = vsub.f32 %v1896, 0.28449672
        %v1900 = vsub.f32 %v1897, 0.28449672
        %v1901 = vmul.f32 %v1898, %v1880
        %v1902 = vmul.f32 %v1899, %v1881
        %v1903 = vmul.f32 %v1900, %v1882
        %v1904 = vadd.f32 %v1901, 0.2548296
        %v1905 = vadd.f32 %v1902, 0.2548296
        %v1906 = vadd.f32 %v1903, 0.2548296
        %v1907 = vmul.f32 %v1904, %v1880
        %v1908 = vmul.f32 %v1905, %v1881
        %v1909 = vmul.f32 %v1906, %v1882
        %v1910 = vsub.f32 0.0, %v1871
        %v1911 = vsub.f32 0.0, %v1872
        %v1912 = vsub.f32 0.0, %v1873
        %v1913 = vmul.f32 %v1910, %v1871
        %v1914 = vmul.f32 %v1911, %v1872
        %v1915 = vmul.f32 %v1912, %v1873
        %v1916 = vmul.f32 %v1913, 1.442695
        %v1917 = vpow.pop %v1916
        %v1918 = vmul.f32 %v1914, 1.442695
        %v1919 = vpow.pop %v1918
        %v1920 = vmul.f32 %v1915, 1.442695
        %v1921 = vpow.pop %v1920
        %v1922 = vmul.f32 %v1907, %v1917
        %v1923 = vmul.f32 %v1908, %v1919
        %v1924 = vmul.f32 %v1909, %v1921
        %v1925 = vsub.f32 1.0, %v1922
        %v1926 = vsub.f32 1.0, %v1923
        %v1927 = vsub.f32 1.0, %v1924
        %v1928 = vmul.f32 %v1868, %v1925
        %v1929 = vmul.f32 %v1869, %v1926
        %v1930 = vmul.f32 %v1870, %v1927
        %v1931 = vmul.f32 %v1849, 0.5
        %v1932 = vmul.f32 %v1852, 0.5
        %v1933 = vmul.f32 %v1857, 0.5
        %v1934 = vadd.f32 %v1928, 1.0
        %v1935 = vadd.f32 %v1929, 1.0
        %v1936 = vadd.f32 %v1930, 1.0
        %v1937 = vmul.f32 %v1931, %v1934
        %v1938 = vmul.f32 %v1932, %v1935
        %v1939 = vmul.f32 %v1933, %v1936
        %v1940 = vpack.c.bf16 %v1938, %v1937
        %v1941 = vpack.c.bf16 %v1939, %v1939
        %v1942 = vld [vmem:[%s10] sm:$0xf]
        %v1943 = vld [vmem:[%s10 + $0x4] sm:$0xf]
        %v1944 = vld [vmem:[%s10 + $0x8] sm:$0xf]
        %v1945 = vld [vmem:[%s10 + $0xc] sm:$0xf]
        %v1946 = vld [vmem:[%s10 + $0x10] sm:$0xf]
        %v1947 = vld [vmem:[%s10 + $0x14] sm:$0xf]
        %v1948 = vld [vmem:[%s10 + $0x18] sm:$0xf]
        %v1949 = vld [vmem:[%s10 + $0x1c] sm:$0xf]
        %v1950 = vld [vmem:[%s10 + $0x20] sm:$0xf]
        %v1951 = vld [vmem:[%s10 + $0x24] sm:$0xf]
        %v1952 = vld [vmem:[%s10 + $0x28] sm:$0xf]
        %v1953 = vld [vmem:[%s10 + $0x2c] sm:$0xf]
        %v1954 = vld [vmem:[%s10 + $0x30] sm:$0xf]
        %v1955 = vld [vmem:[%s10 + $0x34] sm:$0xf]
        %v1956 = vld [vmem:[%s10 + $0x38] sm:$0xf]
        %v1957 = vld [vmem:[%s10 + $0x3c] sm:$0xf]
        %v1958 = vld [vmem:[%s11] sm:$0x1]
        %v1960 = vlaneseq
        %v1961 = vshrl.u32 %v1960, 7
        %v1962 = vsub.s32 0, %v1961
        %v1963 = vrot.slane %v1958, %v1962
        %v1981 = vunpack.c.l.b16 %v1942
        %v1982 = vunpack.c.l.b16 %v1943
        %v1983 = vunpack.c.l.b16 %v1944
        %v1984 = vunpack.c.l.b16 %v1945
        %v1985 = vunpack.c.l.b16 %v1946
        %v1986 = vunpack.c.l.b16 %v1947
        %v1987 = vunpack.c.l.b16 %v1948
        %v1988 = vunpack.c.l.b16 %v1949
        %v1989 = vunpack.c.l.b16 %v1950
        %v1990 = vunpack.c.l.b16 %v1951
        %v1991 = vunpack.c.l.b16 %v1952
        %v1992 = vunpack.c.l.b16 %v1953
        %v1993 = vunpack.c.l.b16 %v1954
        %v1994 = vunpack.c.l.b16 %v1955
        %v1995 = vunpack.c.l.b16 %v1956
        %v1996 = vunpack.c.l.b16 %v1957
        %v1997 = vpack.c.b16 %v1982, %v1981
        %v1998 = vpack.c.b16 %v1984, %v1983
        %v1999 = vpack.c.b16 %v1986, %v1985
        %v2000 = vpack.c.b16 %v1988, %v1987
        %v2001 = vpack.c.b16 %v1990, %v1989
        %v2002 = vpack.c.b16 %v1992, %v1991
        %v2003 = vpack.c.b16 %v1994, %v1993
        %v2004 = vpack.c.b16 %v1996, %v1995
        %2013 = vmatprep.subr.bf16.mxu0 0
        %2014 = vmatpush1.bf16.msra.mxu0 %v1997
        %2015 = vmatprep.subr.bf16.mxu0 0
        %2016 = vmatpush1.bf16.msra.mxu0 %v1998
        %2017 = vmatprep.subr.bf16.mxu0 0
        %2018 = vmatpush1.bf16.msra.mxu0 %v1999
        %2019 = vmatprep.subr.bf16.mxu0 0
        %2020 = vmatpush1.bf16.msra.mxu0 %v2000
        %2021 = vmatprep.subr.bf16.mxu0 0
        %2022 = vmatpush1.bf16.msra.mxu0 %v2001
        %2023 = vmatprep.subr.bf16.mxu0 0
        %2024 = vmatpush1.bf16.msra.mxu0 %v2002
        %2025 = vmatprep.subr.bf16.mxu0 0
        %2026 = vmatpush1.bf16.msra.mxu0 %v2003
        %2027 = vmatprep.subr.bf16.mxu0 0
        %2028 = vmatpush1.bf16.msra.mxu0 %v2004
        %2029 = vmatprep.subr.bf16.mxu0 0
        %2030 = vmatpush1.bf16.msra.mxu0 0
        %2031 = vmatprep.subr.bf16.mxu0 0
        %2032 = vmatpush1.bf16.msra.mxu0 0
        %2033 = vmatprep.subr.bf16.mxu0 0
        %2034 = vmatpush1.bf16.msra.mxu0 0
        %2035 = vmatprep.subr.bf16.mxu0 0
        %2036 = vmatpush1.bf16.msra.mxu0 0
        %2037 = vmatprep.subr.bf16.mxu0 0
        %2038 = vmatpush1.bf16.msra.mxu0 0
        %2039 = vmatprep.subr.bf16.mxu0 0
        %2040 = vmatpush1.bf16.msra.mxu0 0
        %2041 = vmatprep.subr.bf16.mxu0 0
        %2042 = vmatpush1.bf16.msra.mxu0 0
        %2043 = vmatprep.subr.bf16.mxu0 0
        %2044 = vmatpush1.bf16.msra.mxu0 0
        %2045 = vmatprep.mubr.bf16.mxu0 0
        %2046 = vmatmul.mubr.bf16.gmra.mrb[0].mxu0 %v1940
        %v2047 = vpop.f32.mrb[0].mxu0
        %v2048 = vadd.f32 %v1963, %v2047
        %v2049 = vpop.f32.mrb[0].mxu0
        %v2050 = vpop.f32.mrb[0].mxu0
        %v2051 = vadd.f32 %v1963, %v2050
        %v2052 = vpop.f32.mrb[0].mxu0
        %2053 = vmatprep.mubr.bf16.mxu0 0
        %2054 = vmatmul.mubr.bf16.gmra.mrb[0].mxu0 %v1941
        %v2055 = vpop.f32.mrb[0].mxu0
        %v2056 = vadd.f32 %v1963, %v2055
        %v2057 = vpop.f32.mrb[0].mxu0
        %v2058 = vpop.f32.mrb[0].mxu0
        %v2059 = vpop.f32.mrb[0].mxu0
        %2060 = vdwg.mxu0
        %v2061 = vadd.f32 %v1711, %v2048
        %v2062 = vadd.f32 %v1712, %v2051
        %v2063 = vadd.f32 %v1713, %v2056
        %s2064 = scalar_lea.vmem %s3, 4
        %v2065 = vld [vmem:[%s2064] sm:$0xf]
        %v2066 = vsel %vm536, %v2061, 0.0
        %2067 = vadd.xlane.f32.xlu0 %v2066
        %v2068 = vpop.xlane.xlu0 %2067
        %v2069 = vsel %vm536, %v2062, 0.0
        %2070 = vadd.xlane.f32.xlu0 %v2069
        %v2071 = vpop.xlane.xlu0 %2070
        %v2072 = vsel %vm536, %v2063, 0.0
        %2073 = vadd.xlane.f32.xlu0 %v2072
        %v2074 = vpop.xlane.xlu0 %2073
        %v2075 = vmul.f32 %v2068, %v601
        %v2076 = vmul.f32 %v2071, %v601
        %v2077 = vmul.f32 %v2074, %v601
        %v2078 = vsub.f32 %v2061, %v2075
        %v2079 = vsub.f32 %v2062, %v2076
        %v2080 = vsub.f32 %v2063, %v2077
        %v2081 = vmul.f32 %v2078, %v2078
        %v2082 = vmul.f32 %v2079, %v2079
        %v2083 = vmul.f32 %v2080, %v2080
        %v2084 = vsel %vm536, %v2081, 0.0
        %2085 = vadd.xlane.f32.xlu0 %v2084
        %v2086 = vpop.xlane.xlu0 %2085
        %v2087 = vsel %vm536, %v2082, 0.0
        %2088 = vadd.xlane.f32.xlu0 %v2087
        %v2089 = vpop.xlane.xlu0 %2088
        %v2090 = vsel %vm536, %v2083, 0.0
        %2091 = vadd.xlane.f32.xlu0 %v2090
        %v2092 = vpop.xlane.xlu0 %2091
        %v2093 = vmul.f32 %v2086, %v601
        %v2094 = vmul.f32 %v2089, %v601
        %v2095 = vmul.f32 %v2092, %v601
        %v2096 = vadd.f32 %v2093, 1e-06
        %v2097 = vadd.f32 %v2094, 1e-06
        %v2098 = vadd.f32 %v2095, 1e-06
        %v2099 = vrsqrt.pop %v2096
        %v2100 = vrsqrt.pop %v2097
        %v2101 = vrsqrt.pop %v2098
        %v2102 = vmul.f32 %v2078, %v2099
        %v2103 = vmul.f32 %v2079, %v2100
        %v2104 = vmul.f32 %v2080, %v2101
        %v2105 = vlaneseq
        %v2106 = vshrl.u32 %v2105, 7
        %v2107 = vsub.s32 0, %v2106
        %v2108 = vrot.slane %v2065, %v2107
        %v2109 = vmul.f32 %v2102, %v2108
        %v2110 = vmul.f32 %v2103, %v2108
        %v2111 = vmul.f32 %v2104, %v2108
        %v2112 = vlaneseq
        %v2113 = vshrl.u32 %v2112, 7
        %v2114 = vsub.s32 1, %v2113
        %v2115 = vrot.slane %v2065, %v2114
        %v2116 = vadd.f32 %v2109, %v2115
        %v2117 = vadd.f32 %v2110, %v2115
        %v2118 = vadd.f32 %v2111, %v2115
        %v2119 = vpack.c.bf16 %v2117, %v2116
        %v2120 = vpack.c.bf16 %v2118, %v2118
        %s2121 = scalar_lea.vmem %s4, 64
        %v2122 = vld [vmem:[%s2121] sm:$0xff]
        %v2123 = vld [vmem:[%s2121 + $0x8] sm:$0xff]
        %v2124 = vld [vmem:[%s2121 + $0x10] sm:$0xff]
        %v2125 = vld [vmem:[%s2121 + $0x18] sm:$0xff]
        %v2126 = vld [vmem:[%s2121 + $0x20] sm:$0xff]
        %v2127 = vld [vmem:[%s2121 + $0x28] sm:$0xff]
        %v2128 = vld [vmem:[%s2121 + $0x30] sm:$0xff]
        %v2129 = vld [vmem:[%s2121 + $0x38] sm:$0xff]
        %s2130 = scalar_lea.vmem %s5, 2
        %v2131 = vld [vmem:[%s2130] sm:$0x3]
        %v2133 = vlaneseq
        %v2134 = vshrl.u32 %v2133, 7
        %v2135 = vsub.s32 0, %v2134
        %v2136 = vrot.slane %v2131, %v2135
        %v2137 = vlaneseq
        %v2138 = vshrl.u32 %v2137, 7
        %v2139 = vsub.s32 1, %v2138
        %v2140 = vrot.slane %v2131, %v2139
        %v2151 = vunpack.c.l.b16 %v2122
        %v2152 = vunpack.c.h.b16 %v2122
        %v2153 = vunpack.c.l.b16 %v2123
        %v2154 = vunpack.c.h.b16 %v2123
        %v2155 = vunpack.c.l.b16 %v2124
        %v2156 = vunpack.c.h.b16 %v2124
        %v2157 = vunpack.c.l.b16 %v2125
        %v2158 = vunpack.c.h.b16 %v2125
        %v2159 = vunpack.c.l.b16 %v2126
        %v2160 = vunpack.c.h.b16 %v2126
        %v2161 = vunpack.c.l.b16 %v2127
        %v2162 = vunpack.c.h.b16 %v2127
        %v2163 = vunpack.c.l.b16 %v2128
        %v2164 = vunpack.c.h.b16 %v2128
        %v2165 = vunpack.c.l.b16 %v2129
        %v2166 = vunpack.c.h.b16 %v2129
        %v2167 = vpack.c.b16 %v2153, %v2151
        %v2168 = vpack.c.b16 %v2154, %v2152
        %v2169 = vpack.c.b16 %v2157, %v2155
        %v2170 = vpack.c.b16 %v2158, %v2156
        %v2171 = vpack.c.b16 %v2161, %v2159
        %v2172 = vpack.c.b16 %v2162, %v2160
        %v2173 = vpack.c.b16 %v2165, %v2163
        %v2174 = vpack.c.b16 %v2166, %v2164
        %v2184 = vsel %vm536, %v2119, 0
        %v2187 = vsel %vm536, %v2120, 0
        %2189 = vmatprep.subr.bf16.mxu0 %v2168
        %2190 = vmatpush1.bf16.msra.mxu0 %v2167
        %2191 = vmatprep.subr.bf16.mxu0 %v2170
        %2192 = vmatpush1.bf16.msra.mxu0 %v2169
        %2193 = vmatprep.subr.bf16.mxu0 %v2172
        %2194 = vmatpush1.bf16.msra.mxu0 %v2171
        %2195 = vmatprep.subr.bf16.mxu0 %v2174
        %2196 = vmatpush1.bf16.msra.mxu0 %v2173
        %2197 = vmatprep.subr.bf16.mxu0 0
        %2198 = vmatpush1.bf16.msra.mxu0 0
        %2199 = vmatprep.subr.bf16.mxu0 0
        %2200 = vmatpush1.bf16.msra.mxu0 0
        %2201 = vmatprep.subr.bf16.mxu0 0
        %2202 = vmatpush1.bf16.msra.mxu0 0
        %2203 = vmatprep.subr.bf16.mxu0 0
        %2204 = vmatpush1.bf16.msra.mxu0 0
        %2205 = vmatprep.subr.bf16.mxu0 0
        %2206 = vmatpush1.bf16.msra.mxu0 0
        %2207 = vmatprep.subr.bf16.mxu0 0
        %2208 = vmatpush1.bf16.msra.mxu0 0
        %2209 = vmatprep.subr.bf16.mxu0 0
        %2210 = vmatpush1.bf16.msra.mxu0 0
        %2211 = vmatprep.subr.bf16.mxu0 0
        %2212 = vmatpush1.bf16.msra.mxu0 0
        %2213 = vmatprep.subr.bf16.mxu0 0
        %2214 = vmatpush1.bf16.msra.mxu0 0
        %2215 = vmatprep.subr.bf16.mxu0 0
        %2216 = vmatpush1.bf16.msra.mxu0 0
        %2217 = vmatprep.subr.bf16.mxu0 0
        %2218 = vmatpush1.bf16.msra.mxu0 0
        %2219 = vmatprep.subr.bf16.mxu0 0
        %2220 = vmatpush1.bf16.msra.mxu0 0
        %2221 = vmatprep.mubr.bf16.mxu0 0
        %2222 = vmatmul.mubr.bf16.gmra.mrb[0].mxu0 %v2184
        %v2223 = vpop.f32.mrb[0].mxu0
        %v2224 = vadd.f32 %v2136, %v2223
        %v2225 = vpop.f32.mrb[0].mxu0
        %v2226 = vadd.f32 %v2140, %v2225
        %v2227 = vpop.f32.mrb[0].mxu0
        %v2228 = vadd.f32 %v2136, %v2227
        %v2229 = vpop.f32.mrb[0].mxu0
        %v2230 = vadd.f32 %v2140, %v2229
        %2231 = vmatprep.mubr.bf16.mxu0 0
        %2232 = vmatmul.mubr.bf16.gmra.mrb[0].mxu0 %v2187
        %v2233 = vpop.f32.mrb[0].mxu0
        %v2234 = vadd.f32 %v2136, %v2233
        %v2235 = vpop.f32.mrb[0].mxu0
        %v2236 = vadd.f32 %v2140, %v2235
        %v2237 = vpop.f32.mrb[0].mxu0
        %v2238 = vpop.f32.mrb[0].mxu0
        %2239 = vdwg.mxu0
        %s2240 = scalar_lea.vmem %s6, 32
        %v2241 = vld [vmem:[%s2240] sm:$0xf]
        %v2242 = vld [vmem:[%s2240 + $0x4] sm:$0xf]
        %v2243 = vld [vmem:[%s2240 + $0x8] sm:$0xf]
        %v2244 = vld [vmem:[%s2240 + $0xc] sm:$0xf]
        %v2245 = vld [vmem:[%s2240 + $0x10] sm:$0xf]
        %v2246 = vld [vmem:[%s2240 + $0x14] sm:$0xf]
        %v2247 = vld [vmem:[%s2240 + $0x18] sm:$0xf]
        %v2248 = vld [vmem:[%s2240 + $0x1c] sm:$0xf]
        %v2249 = vpack.c.bf16 %v2228, %v2224
        %v2250 = vpack.c.bf16 %v2234, %v2234
        %2253 = vrot.lane.b32.xlu0 %v2249, 64
        %v2254 = vpop.permute.xlu0 %2253
        %2255 = vrot.lane.b32.xlu0 %v2250, 64
        %v2256 = vpop.permute.xlu0 %2255
        %v2258 = vsel %vm781, %v2249, 0
        %v2261 = vsel %vm781, %v2250, 0
        %v2264 = vsel %vm781, %v2254, 0
        %v2267 = vsel %vm781, %v2256, 0
        %2269 = vmatprep.subr.bf16.mxu0 0
        %2270 = vmatpush1.bf16.xpose.msra.mxu0 %v2264
        %2271 = vmatprep.subr.bf16.mxu0 0
        %2272 = vmatpush1.bf16.xpose.msra.mxu0 %v2267
        %2273 = vmatprep.subr.bf16.mxu0 0
        %2274 = vmatpush1.bf16.xpose.msra.mxu0 0
        %2275 = vmatprep.subr.bf16.mxu0 0
        %2276 = vmatpush1.bf16.xpose.msra.mxu0 0
        %2277 = vmatprep.subr.bf16.mxu0 0
        %2278 = vmatpush1.bf16.xpose.msra.mxu0 0
        %2279 = vmatprep.subr.bf16.mxu0 0
        %2280 = vmatpush1.bf16.xpose.msra.mxu0 0
        %2281 = vmatprep.subr.bf16.mxu0 0
        %2282 = vmatpush1.bf16.xpose.msra.mxu0 0
        %2283 = vmatprep.subr.bf16.mxu0 0
        %2284 = vmatpush1.bf16.xpose.msra.mxu0 0
        %2285 = vmatprep.subr.bf16.mxu0 0
        %2286 = vmatpush1.bf16.xpose.msra.mxu0 0
        %2287 = vmatprep.subr.bf16.mxu0 0
        %2288 = vmatpush1.bf16.xpose.msra.mxu0 0
        %2289 = vmatprep.subr.bf16.mxu0 0
        %2290 = vmatpush1.bf16.xpose.msra.mxu0 0
        %2291 = vmatprep.subr.bf16.mxu0 0
        %2292 = vmatpush1.bf16.xpose.msra.mxu0 0
        %2293 = vmatprep.subr.bf16.mxu0 0
        %2294 = vmatpush1.bf16.xpose.msra.mxu0 0
        %2295 = vmatprep.subr.bf16.mxu0 0
        %2296 = vmatpush1.bf16.xpose.msra.mxu0 0
        %2297 = vmatprep.subr.bf16.mxu0 0
        %2298 = vmatpush1.bf16.xpose.msra.mxu0 0
        %2299 = vmatprep.subr.bf16.mxu0 0
        %2300 = vmatpush1.bf16.xpose.msra.mxu0 0
        %2301 = vmatprep.mubr.bf16.mxu0 0
        %2302 = vmatmul.mubr.bf16.gmra.mrb[0].mxu0 %v2258
        %v2303 = vpop.f32.mrb[0].mxu0
        %v2304 = vadd.f32 0.0, %v2303
        %v2305 = vpop.f32.mrb[0].mxu0
        %v2306 = vpop.f32.mrb[0].mxu0
        %v2307 = vadd.f32 0.0, %v2306
        %v2308 = vpop.f32.mrb[0].mxu0
        %2309 = vmatprep.mubr.bf16.mxu0 0
        %2310 = vmatmul.mubr.bf16.gmra.mrb[0].mxu0 %v2261
        %v2311 = vpop.f32.mrb[0].mxu0
        %v2312 = vadd.f32 0.0, %v2311
        %v2313 = vpop.f32.mrb[0].mxu0
        %v2314 = vpop.f32.mrb[0].mxu0
        %v2315 = vpop.f32.mrb[0].mxu0
        %2316 = vdwg.mxu0
        %v2317 = vsel %vm495, %v2304, -1e+30
        %v2318 = vsel %vm495, %v2307, -1e+30
        %v2319 = vsel %vm495, %v2312, -1e+30
        %v2320 = vsel %vm845, %v2317, -inf
        %2321 = vmax.xlane.f32.xlu0 %v2320
        %v2322 = vpop.xlane.xlu0 %2321
        %v2323 = vsel %vm845, %v2318, -inf
        %2324 = vmax.xlane.f32.xlu0 %v2323
        %v2325 = vpop.xlane.xlu0 %2324
        %v2326 = vsel %vm845, %v2319, -inf
        %2327 = vmax.xlane.f32.xlu0 %v2326
        %v2328 = vpop.xlane.xlu0 %2327
        %v2329 = vsub.f32 %v2317, %v2322
        %v2330 = vsub.f32 %v2318, %v2325
        %v2331 = vsub.f32 %v2319, %v2328
        %v2332 = vmul.f32 %v2329, 1.442695
        %v2333 = vpow.pop %v2332
        %v2334 = vmul.f32 %v2330, 1.442695
        %v2335 = vpow.pop %v2334
        %v2336 = vmul.f32 %v2331, 1.442695
        %v2337 = vpow.pop %v2336
        %v2338 = vsel %vm845, %v2333, 0.0
        %2339 = vadd.xlane.f32.xlu0 %v2338
        %v2340 = vpop.xlane.xlu0 %2339
        %v2341 = vsel %vm845, %v2335, 0.0
        %2342 = vadd.xlane.f32.xlu0 %v2341
        %v2343 = vpop.xlane.xlu0 %2342
        %v2344 = vsel %vm845, %v2337, 0.0
        %2345 = vadd.xlane.f32.xlu0 %v2344
        %v2346 = vpop.xlane.xlu0 %2345
        %v2347 = vrcp.pop %v2340
        %v2348 = vmul.f32 %v2333, %v2347
        %v2349 = vrcp.pop %v2343
        %v2350 = vmul.f32 %v2335, %v2349
        %v2351 = vrcp.pop %v2346
        %v2352 = vmul.f32 %v2337, %v2351
        %v2353 = vpack.c.bf16 %v2350, %v2348
        %v2354 = vpack.c.bf16 %v2352, %v2352
        %v2355 = vpack.c.bf16 %v2230, %v2226
        %v2356 = vpack.c.bf16 %v2236, %v2236
        %v2358 = vsel %vm845, %v2353, 0
        %v2361 = vsel %vm845, %v2354, 0
        %v2364 = vsel %vm889, %v2356, 0
        %2366 = vmatprep.subr.bf16.mxu0 0
        %2367 = vmatpush1.bf16.msra.mxu0 %v2355
        %2368 = vmatprep.subr.bf16.mxu0 0
        %2369 = vmatpush1.bf16.msra.mxu0 %v2364
        %2370 = vmatprep.subr.bf16.mxu0 0
        %2371 = vmatpush1.bf16.msra.mxu0 0
        %2372 = vmatprep.subr.bf16.mxu0 0
        %2373 = vmatpush1.bf16.msra.mxu0 0
        %2374 = vmatprep.subr.bf16.mxu0 0
        %2375 = vmatpush1.bf16.msra.mxu0 0
        %2376 = vmatprep.subr.bf16.mxu0 0
        %2377 = vmatpush1.bf16.msra.mxu0 0
        %2378 = vmatprep.subr.bf16.mxu0 0
        %2379 = vmatpush1.bf16.msra.mxu0 0
        %2380 = vmatprep.subr.bf16.mxu0 0
        %2381 = vmatpush1.bf16.msra.mxu0 0
        %2382 = vmatprep.subr.bf16.mxu0 0
        %2383 = vmatpush1.bf16.msra.mxu0 0
        %2384 = vmatprep.subr.bf16.mxu0 0
        %2385 = vmatpush1.bf16.msra.mxu0 0
        %2386 = vmatprep.subr.bf16.mxu0 0
        %2387 = vmatpush1.bf16.msra.mxu0 0
        %2388 = vmatprep.subr.bf16.mxu0 0
        %2389 = vmatpush1.bf16.msra.mxu0 0
        %2390 = vmatprep.subr.bf16.mxu0 0
        %2391 = vmatpush1.bf16.msra.mxu0 0
        %2392 = vmatprep.subr.bf16.mxu0 0
        %2393 = vmatpush1.bf16.msra.mxu0 0
        %2394 = vmatprep.subr.bf16.mxu0 0
        %2395 = vmatpush1.bf16.msra.mxu0 0
        %2396 = vmatprep.subr.bf16.mxu0 0
        %2397 = vmatpush1.bf16.msra.mxu0 0
        %2398 = vmatprep.mubr.bf16.mxu0 0
        %2399 = vmatmul.mubr.bf16.gmra.mrb[0].mxu0 %v2358
        %v2400 = vpop.f32.mrb[0].mxu0
        %v2401 = vadd.f32 0.0, %v2400
        %v2402 = vpop.f32.mrb[0].mxu0
        %v2403 = vpop.f32.mrb[0].mxu0
        %v2404 = vadd.f32 0.0, %v2403
        %v2405 = vpop.f32.mrb[0].mxu0
        %2406 = vmatprep.mubr.bf16.mxu0 0
        %2407 = vmatmul.mubr.bf16.gmra.mrb[0].mxu0 %v2361
        %v2408 = vpop.f32.mrb[0].mxu0
        %v2409 = vadd.f32 0.0, %v2408
        %v2410 = vpop.f32.mrb[0].mxu0
        %v2411 = vpop.f32.mrb[0].mxu0
        %v2412 = vpop.f32.mrb[0].mxu0
        %2413 = vdwg.mxu0
        %v2414 = vpack.c.bf16 %v2404, %v2401
        %v2415 = vpack.c.bf16 %v2409, %v2409
        %2416 = vrot.lane.b32.xlu0 %v2249, 112
        %v2417 = vpop.permute.xlu0 %2416
        %2418 = vrot.lane.b32.xlu0 %v2250, 112
        %v2419 = vpop.permute.xlu0 %2418
        %2420 = vrot.lane.b32.xlu0 %v2249, 48
        %v2421 = vpop.permute.xlu0 %2420
        %2422 = vrot.lane.b32.xlu0 %v2250, 48
        %v2423 = vpop.permute.xlu0 %2422
        %v2425 = vsel %vm781, %v2417, 0
        %v2428 = vsel %vm781, %v2419, 0
        %v2431 = vsel %vm781, %v2421, 0
        %v2434 = vsel %vm781, %v2423, 0
        %2436 = vmatprep.subr.bf16.mxu0 0
        %2437 = vmatpush1.bf16.xpose.msra.mxu0 %v2431
        %2438 = vmatprep.subr.bf16.mxu0 0
        %2439 = vmatpush1.bf16.xpose.msra.mxu0 %v2434
        %2440 = vmatprep.subr.bf16.mxu0 0
        %2441 = vmatpush1.bf16.xpose.msra.mxu0 0
        %2442 = vmatprep.subr.bf16.mxu0 0
        %2443 = vmatpush1.bf16.xpose.msra.mxu0 0
        %2444 = vmatprep.subr.bf16.mxu0 0
        %2445 = vmatpush1.bf16.xpose.msra.mxu0 0
        %2446 = vmatprep.subr.bf16.mxu0 0
        %2447 = vmatpush1.bf16.xpose.msra.mxu0 0
        %2448 = vmatprep.subr.bf16.mxu0 0
        %2449 = vmatpush1.bf16.xpose.msra.mxu0 0
        %2450 = vmatprep.subr.bf16.mxu0 0
        %2451 = vmatpush1.bf16.xpose.msra.mxu0 0
        %2452 = vmatprep.subr.bf16.mxu0 0
        %2453 = vmatpush1.bf16.xpose.msra.mxu0 0
        %2454 = vmatprep.subr.bf16.mxu0 0
        %2455 = vmatpush1.bf16.xpose.msra.mxu0 0
        %2456 = vmatprep.subr.bf16.mxu0 0
        %2457 = vmatpush1.bf16.xpose.msra.mxu0 0
        %2458 = vmatprep.subr.bf16.mxu0 0
        %2459 = vmatpush1.bf16.xpose.msra.mxu0 0
        %2460 = vmatprep.subr.bf16.mxu0 0
        %2461 = vmatpush1.bf16.xpose.msra.mxu0 0
        %2462 = vmatprep.subr.bf16.mxu0 0
        %2463 = vmatpush1.bf16.xpose.msra.mxu0 0
        %2464 = vmatprep.subr.bf16.mxu0 0
        %2465 = vmatpush1.bf16.xpose.msra.mxu0 0
        %2466 = vmatprep.subr.bf16.mxu0 0
        %2467 = vmatpush1.bf16.xpose.msra.mxu0 0
        %2468 = vmatprep.mubr.bf16.mxu0 0
        %2469 = vmatmul.mubr.bf16.gmra.mrb[0].mxu0 %v2425
        %v2470 = vpop.f32.mrb[0].mxu0
        %v2471 = vadd.f32 0.0, %v2470
        %v2472 = vpop.f32.mrb[0].mxu0
        %v2473 = vpop.f32.mrb[0].mxu0
        %v2474 = vadd.f32 0.0, %v2473
        %v2475 = vpop.f32.mrb[0].mxu0
        %2476 = vmatprep.mubr.bf16.mxu0 0
        %2477 = vmatmul.mubr.bf16.gmra.mrb[0].mxu0 %v2428
        %v2478 = vpop.f32.mrb[0].mxu0
        %v2479 = vadd.f32 0.0, %v2478
        %v2480 = vpop.f32.mrb[0].mxu0
        %v2481 = vpop.f32.mrb[0].mxu0
        %v2482 = vpop.f32.mrb[0].mxu0
        %2483 = vdwg.mxu0
        %v2484 = vsel %vm495, %v2471, -1e+30
        %v2485 = vsel %vm495, %v2474, -1e+30
        %v2486 = vsel %vm495, %v2479, -1e+30
        %v2487 = vsel %vm845, %v2484, -inf
        %2488 = vmax.xlane.f32.xlu0 %v2487
        %v2489 = vpop.xlane.xlu0 %2488
        %v2490 = vsel %vm845, %v2485, -inf
        %2491 = vmax.xlane.f32.xlu0 %v2490
        %v2492 = vpop.xlane.xlu0 %2491
        %v2493 = vsel %vm845, %v2486, -inf
        %2494 = vmax.xlane.f32.xlu0 %v2493
        %v2495 = vpop.xlane.xlu0 %2494
        %v2496 = vsub.f32 %v2484, %v2489
        %v2497 = vsub.f32 %v2485, %v2492
        %v2498 = vsub.f32 %v2486, %v2495
        %v2499 = vmul.f32 %v2496, 1.442695
        %v2500 = vpow.pop %v2499
        %v2501 = vmul.f32 %v2497, 1.442695
        %v2502 = vpow.pop %v2501
        %v2503 = vmul.f32 %v2498, 1.442695
        %v2504 = vpow.pop %v2503
        %v2505 = vsel %vm845, %v2500, 0.0
        %2506 = vadd.xlane.f32.xlu0 %v2505
        %v2507 = vpop.xlane.xlu0 %2506
        %v2508 = vsel %vm845, %v2502, 0.0
        %2509 = vadd.xlane.f32.xlu0 %v2508
        %v2510 = vpop.xlane.xlu0 %2509
        %v2511 = vsel %vm845, %v2504, 0.0
        %2512 = vadd.xlane.f32.xlu0 %v2511
        %v2513 = vpop.xlane.xlu0 %2512
        %v2514 = vrcp.pop %v2507
        %v2515 = vmul.f32 %v2500, %v2514
        %v2516 = vrcp.pop %v2510
        %v2517 = vmul.f32 %v2502, %v2516
        %v2518 = vrcp.pop %v2513
        %v2519 = vmul.f32 %v2504, %v2518
        %v2520 = vpack.c.bf16 %v2517, %v2515
        %v2521 = vpack.c.bf16 %v2519, %v2519
        %2524 = vrot.lane.b32.xlu0 %v2355, 112
        %v2525 = vpop.permute.xlu0 %2524
        %2526 = vrot.lane.b32.xlu0 %v2356, 112
        %v2527 = vpop.permute.xlu0 %2526
        %v2530 = vsel %vm845, %v2520, 0
        %v2533 = vsel %vm845, %v2521, 0
        %v2536 = vsel %vm889, %v2527, 0
        %2538 = vmatprep.subr.bf16.mxu0 0
        %2539 = vmatpush1.bf16.msra.mxu0 %v2525
        %2540 = vmatprep.subr.bf16.mxu0 0
        %2541 = vmatpush1.bf16.msra.mxu0 %v2536
        %2542 = vmatprep.subr.bf16.mxu0 0
        %2543 = vmatpush1.bf16.msra.mxu0 0
        %2544 = vmatprep.subr.bf16.mxu0 0
        %2545 = vmatpush1.bf16.msra.mxu0 0
        %2546 = vmatprep.subr.bf16.mxu0 0
        %2547 = vmatpush1.bf16.msra.mxu0 0
        %2548 = vmatprep.subr.bf16.mxu0 0
        %2549 = vmatpush1.bf16.msra.mxu0 0
        %2550 = vmatprep.subr.bf16.mxu0 0
        %2551 = vmatpush1.bf16.msra.mxu0 0
        %2552 = vmatprep.subr.bf16.mxu0 0
        %2553 = vmatpush1.bf16.msra.mxu0 0
        %2554 = vmatprep.subr.bf16.mxu0 0
        %2555 = vmatpush1.bf16.msra.mxu0 0
        %2556 = vmatprep.subr.bf16.mxu0 0
        %2557 = vmatpush1.bf16.msra.mxu0 0
        %2558 = vmatprep.subr.bf16.mxu0 0
        %2559 = vmatpush1.bf16.msra.mxu0 0
        %2560 = vmatprep.subr.bf16.mxu0 0
        %2561 = vmatpush1.bf16.msra.mxu0 0
        %2562 = vmatprep.subr.bf16.mxu0 0
        %2563 = vmatpush1.bf16.msra.mxu0 0
        %2564 = vmatprep.subr.bf16.mxu0 0
        %2565 = vmatpush1.bf16.msra.mxu0 0
        %2566 = vmatprep.subr.bf16.mxu0 0
        %2567 = vmatpush1.bf16.msra.mxu0 0
        %2568 = vmatprep.subr.bf16.mxu0 0
        %2569 = vmatpush1.bf16.msra.mxu0 0
        %2570 = vmatprep.mubr.bf16.mxu0 0
        %2571 = vmatmul.mubr.bf16.gmra.mrb[0].mxu0 %v2530
        %v2572 = vpop.f32.mrb[0].mxu0
        %v2573 = vadd.f32 0.0, %v2572
        %v2574 = vpop.f32.mrb[0].mxu0
        %v2575 = vpop.f32.mrb[0].mxu0
        %v2576 = vadd.f32 0.0, %v2575
        %v2577 = vpop.f32.mrb[0].mxu0
        %2578 = vmatprep.mubr.bf16.mxu0 0
        %2579 = vmatmul.mubr.bf16.gmra.mrb[0].mxu0 %v2533
        %v2580 = vpop.f32.mrb[0].mxu0
        %v2581 = vadd.f32 0.0, %v2580
        %v2582 = vpop.f32.mrb[0].mxu0
        %v2583 = vpop.f32.mrb[0].mxu0
        %v2584 = vpop.f32.mrb[0].mxu0
        %2585 = vdwg.mxu0
        %v2586 = vpack.c.bf16 %v2576, %v2573
        %v2587 = vpack.c.bf16 %v2581, %v2581
        %v2590 = vunpack.c.l.b16 %v2243
        %v2591 = vunpack.c.l.b16 %v2244
        %v2592 = vpack.c.b16 %v2591, %v2590
        %v2595 = vsel %vm781, %v2586, 0
        %v2598 = vsel %vm781, %v2587, 0
        %2600 = vmatprep.subr.bf16.mxu0 0
        %2601 = vmatpush1.bf16.msra.mxu0 %v2592
        %2602 = vmatprep.subr.bf16.mxu0 0
        %2603 = vmatpush1.bf16.msra.mxu0 0
        %2604 = vmatprep.subr.bf16.mxu0 0
        %2605 = vmatpush1.bf16.msra.mxu0 0
        %2606 = vmatprep.subr.bf16.mxu0 0
        %2607 = vmatpush1.bf16.msra.mxu0 0
        %2608 = vmatprep.subr.bf16.mxu0 0
        %2609 = vmatpush1.bf16.msra.mxu0 0
        %2610 = vmatprep.subr.bf16.mxu0 0
        %2611 = vmatpush1.bf16.msra.mxu0 0
        %2612 = vmatprep.subr.bf16.mxu0 0
        %2613 = vmatpush1.bf16.msra.mxu0 0
        %2614 = vmatprep.subr.bf16.mxu0 0
        %2615 = vmatpush1.bf16.msra.mxu0 0
        %2616 = vmatprep.subr.bf16.mxu0 0
        %2617 = vmatpush1.bf16.msra.mxu0 0
        %2618 = vmatprep.subr.bf16.mxu0 0
        %2619 = vmatpush1.bf16.msra.mxu0 0
        %2620 = vmatprep.subr.bf16.mxu0 0
        %2621 = vmatpush1.bf16.msra.mxu0 0
        %2622 = vmatprep.subr.bf16.mxu0 0
        %2623 = vmatpush1.bf16.msra.mxu0 0
        %2624 = vmatprep.subr.bf16.mxu0 0
        %2625 = vmatpush1.bf16.msra.mxu0 0
        %2626 = vmatprep.subr.bf16.mxu0 0
        %2627 = vmatpush1.bf16.msra.mxu0 0
        %2628 = vmatprep.subr.bf16.mxu0 0
        %2629 = vmatpush1.bf16.msra.mxu0 0
        %2630 = vmatprep.subr.bf16.mxu0 0
        %2631 = vmatpush1.bf16.msra.mxu0 0
        %2632 = vmatprep.mubr.bf16.mxu0 0
        %2633 = vmatmul.mubr.bf16.gmra.mrb[0].mxu0 %v2595
        %v2634 = vpop.f32.mrb[0].mxu0
        %v2635 = vadd.f32 0.0, %v2634
        %v2636 = vpop.f32.mrb[0].mxu0
        %v2637 = vpop.f32.mrb[0].mxu0
        %v2638 = vadd.f32 0.0, %v2637
        %v2639 = vpop.f32.mrb[0].mxu0
        %2640 = vmatprep.mubr.bf16.mxu0 0
        %2641 = vmatmul.mubr.bf16.gmra.mrb[0].mxu0 %v2598
        %v2642 = vpop.f32.mrb[0].mxu0
        %v2643 = vadd.f32 0.0, %v2642
        %v2644 = vpop.f32.mrb[0].mxu0
        %v2645 = vpop.f32.mrb[0].mxu0
        %v2646 = vpop.f32.mrb[0].mxu0
        %2647 = vdwg.mxu0
        %v2650 = vunpack.c.l.b16 %v2241
        %v2651 = vunpack.c.l.b16 %v2242
        %v2652 = vpack.c.b16 %v2651, %v2650
        %v2655 = vsel %vm781, %v2414, 0
        %v2658 = vsel %vm781, %v2415, 0
        %2660 = vmatprep.subr.bf16.mxu0 0
        %2661 = vmatpush1.bf16.msra.mxu0 %v2652
        %2662 = vmatprep.subr.bf16.mxu0 0
        %2663 = vmatpush1.bf16.msra.mxu0 0
        %2664 = vmatprep.subr.bf16.mxu0 0
        %2665 = vmatpush1.bf16.msra.mxu0 0
        %2666 = vmatprep.subr.bf16.mxu0 0
        %2667 = vmatpush1.bf16.msra.mxu0 0
        %2668 = vmatprep.subr.bf16.mxu0 0
        %2669 = vmatpush1.bf16.msra.mxu0 0
        %2670 = vmatprep.subr.bf16.mxu0 0
        %2671 = vmatpush1.bf16.msra.mxu0 0
        %2672 = vmatprep.subr.bf16.mxu0 0
        %2673 = vmatpush1.bf16.msra.mxu0 0
        %2674 = vmatprep.subr.bf16.mxu0 0
        %2675 = vmatpush1.bf16.msra.mxu0 0
        %2676 = vmatprep.subr.bf16.mxu0 0
        %2677 = vmatpush1.bf16.msra.mxu0 0
        %2678 = vmatprep.subr.bf16.mxu0 0
        %2679 = vmatpush1.bf16.msra.mxu0 0
        %2680 = vmatprep.subr.bf16.mxu0 0
        %2681 = vmatpush1.bf16.msra.mxu0 0
        %2682 = vmatprep.subr.bf16.mxu0 0
        %2683 = vmatpush1.bf16.msra.mxu0 0
        %2684 = vmatprep.subr.bf16.mxu0 0
        %2685 = vmatpush1.bf16.msra.mxu0 0
        %2686 = vmatprep.subr.bf16.mxu0 0
        %2687 = vmatpush1.bf16.msra.mxu0 0
        %2688 = vmatprep.subr.bf16.mxu0 0
        %2689 = vmatpush1.bf16.msra.mxu0 0
        %2690 = vmatprep.subr.bf16.mxu0 0
        %2691 = vmatpush1.bf16.msra.mxu0 0
        %2692 = vmatprep.mubr.bf16.mxu0 0
        %2693 = vmatmul.mubr.bf16.gmra.mrb[0].mxu0 %v2655
        %v2694 = vpop.f32.mrb[0].mxu0
        %v2695 = vadd.f32 %v2635, %v2694
        %v2696 = vpop.f32.mrb[0].mxu0
        %v2697 = vpop.f32.mrb[0].mxu0
        %v2698 = vadd.f32 %v2638, %v2697
        %v2699 = vpop.f32.mrb[0].mxu0
        %2700 = vmatprep.mubr.bf16.mxu0 0
        %2701 = vmatmul.mubr.bf16.gmra.mrb[0].mxu0 %v2658
        %v2702 = vpop.f32.mrb[0].mxu0
        %v2703 = vadd.f32 %v2643, %v2702
        %v2704 = vpop.f32.mrb[0].mxu0
        %v2705 = vpop.f32.mrb[0].mxu0
        %v2706 = vpop.f32.mrb[0].mxu0
        %2707 = vdwg.mxu0
        %2708 = vrot.lane.b32.xlu0 %v2249, 96
        %v2709 = vpop.permute.xlu0 %2708
        %2710 = vrot.lane.b32.xlu0 %v2250, 96
        %v2711 = vpop.permute.xlu0 %2710
        %2712 = vrot.lane.b32.xlu0 %v2249, 32
        %v2713 = vpop.permute.xlu0 %2712
        %2714 = vrot.lane.b32.xlu0 %v2250, 32
        %v2715 = vpop.permute.xlu0 %2714
        %v2717 = vsel %vm781, %v2709, 0
        %v2720 = vsel %vm781, %v2711, 0
        %v2723 = vsel %vm781, %v2713, 0
        %v2726 = vsel %vm781, %v2715, 0
        %2728 = vmatprep.subr.bf16.mxu0 0
        %2729 = vmatpush1.bf16.xpose.msra.mxu0 %v2723
        %2730 = vmatprep.subr.bf16.mxu0 0
        %2731 = vmatpush1.bf16.xpose.msra.mxu0 %v2726
        %2732 = vmatprep.subr.bf16.mxu0 0
        %2733 = vmatpush1.bf16.xpose.msra.mxu0 0
        %2734 = vmatprep.subr.bf16.mxu0 0
        %2735 = vmatpush1.bf16.xpose.msra.mxu0 0
        %2736 = vmatprep.subr.bf16.mxu0 0
        %2737 = vmatpush1.bf16.xpose.msra.mxu0 0
        %2738 = vmatprep.subr.bf16.mxu0 0
        %2739 = vmatpush1.bf16.xpose.msra.mxu0 0
        %2740 = vmatprep.subr.bf16.mxu0 0
        %2741 = vmatpush1.bf16.xpose.msra.mxu0 0
        %2742 = vmatprep.subr.bf16.mxu0 0
        %2743 = vmatpush1.bf16.xpose.msra.mxu0 0
        %2744 = vmatprep.subr.bf16.mxu0 0
        %2745 = vmatpush1.bf16.xpose.msra.mxu0 0
        %2746 = vmatprep.subr.bf16.mxu0 0
        %2747 = vmatpush1.bf16.xpose.msra.mxu0 0
        %2748 = vmatprep.subr.bf16.mxu0 0
        %2749 = vmatpush1.bf16.xpose.msra.mxu0 0
        %2750 = vmatprep.subr.bf16.mxu0 0
        %2751 = vmatpush1.bf16.xpose.msra.mxu0 0
        %2752 = vmatprep.subr.bf16.mxu0 0
        %2753 = vmatpush1.bf16.xpose.msra.mxu0 0
        %2754 = vmatprep.subr.bf16.mxu0 0
        %2755 = vmatpush1.bf16.xpose.msra.mxu0 0
        %2756 = vmatprep.subr.bf16.mxu0 0
        %2757 = vmatpush1.bf16.xpose.msra.mxu0 0
        %2758 = vmatprep.subr.bf16.mxu0 0
        %2759 = vmatpush1.bf16.xpose.msra.mxu0 0
        %2760 = vmatprep.mubr.bf16.mxu0 0
        %2761 = vmatmul.mubr.bf16.gmra.mrb[0].mxu0 %v2717
        %v2762 = vpop.f32.mrb[0].mxu0
        %v2763 = vadd.f32 0.0, %v2762
        %v2764 = vpop.f32.mrb[0].mxu0
        %v2765 = vpop.f32.mrb[0].mxu0
        %v2766 = vadd.f32 0.0, %v2765
        %v2767 = vpop.f32.mrb[0].mxu0
        %2768 = vmatprep.mubr.bf16.mxu0 0
        %2769 = vmatmul.mubr.bf16.gmra.mrb[0].mxu0 %v2720
        %v2770 = vpop.f32.mrb[0].mxu0
        %v2771 = vadd.f32 0.0, %v2770
        %v2772 = vpop.f32.mrb[0].mxu0
        %v2773 = vpop.f32.mrb[0].mxu0
        %v2774 = vpop.f32.mrb[0].mxu0
        %2775 = vdwg.mxu0
        %v2776 = vsel %vm495, %v2763, -1e+30
        %v2777 = vsel %vm495, %v2766, -1e+30
        %v2778 = vsel %vm495, %v2771, -1e+30
        %v2779 = vsel %vm845, %v2776, -inf
        %2780 = vmax.xlane.f32.xlu0 %v2779
        %v2781 = vpop.xlane.xlu0 %2780
        %v2782 = vsel %vm845, %v2777, -inf
        %2783 = vmax.xlane.f32.xlu0 %v2782
        %v2784 = vpop.xlane.xlu0 %2783
        %v2785 = vsel %vm845, %v2778, -inf
        %2786 = vmax.xlane.f32.xlu0 %v2785
        %v2787 = vpop.xlane.xlu0 %2786
        %v2788 = vsub.f32 %v2776, %v2781
        %v2789 = vsub.f32 %v2777, %v2784
        %v2790 = vsub.f32 %v2778, %v2787
        %v2791 = vmul.f32 %v2788, 1.442695
        %v2792 = vpow.pop %v2791
        %v2793 = vmul.f32 %v2789, 1.442695
        %v2794 = vpow.pop %v2793
        %v2795 = vmul.f32 %v2790, 1.442695
        %v2796 = vpow.pop %v2795
        %v2797 = vsel %vm845, %v2792, 0.0
        %2798 = vadd.xlane.f32.xlu0 %v2797
        %v2799 = vpop.xlane.xlu0 %2798
        %v2800 = vsel %vm845, %v2794, 0.0
        %2801 = vadd.xlane.f32.xlu0 %v2800
        %v2802 = vpop.xlane.xlu0 %2801
        %v2803 = vsel %vm845, %v2796, 0.0
        %2804 = vadd.xlane.f32.xlu0 %v2803
        %v2805 = vpop.xlane.xlu0 %2804
        %v2806 = vrcp.pop %v2799
        %v2807 = vmul.f32 %v2792, %v2806
        %v2808 = vrcp.pop %v2802
        %v2809 = vmul.f32 %v2794, %v2808
        %v2810 = vrcp.pop %v2805
        %v2811 = vmul.f32 %v2796, %v2810
        %v2812 = vpack.c.bf16 %v2809, %v2807
        %v2813 = vpack.c.bf16 %v2811, %v2811
        %2814 = vrot.lane.b32.xlu0 %v2355, 96
        %v2815 = vpop.permute.xlu0 %2814
        %2816 = vrot.lane.b32.xlu0 %v2356, 96
        %v2817 = vpop.permute.xlu0 %2816
        %v2820 = vsel %vm845, %v2812, 0
        %v2823 = vsel %vm845, %v2813, 0
        %v2826 = vsel %vm889, %v2817, 0
        %2828 = vmatprep.subr.bf16.mxu0 0
        %2829 = vmatpush1.bf16.msra.mxu0 %v2815
        %2830 = vmatprep.subr.bf16.mxu0 0
        %2831 = vmatpush1.bf16.msra.mxu0 %v2826
        %2832 = vmatprep.subr.bf16.mxu0 0
        %2833 = vmatpush1.bf16.msra.mxu0 0
        %2834 = vmatprep.subr.bf16.mxu0 0
        %2835 = vmatpush1.bf16.msra.mxu0 0
        %2836 = vmatprep.subr.bf16.mxu0 0
        %2837 = vmatpush1.bf16.msra.mxu0 0
        %2838 = vmatprep.subr.bf16.mxu0 0
        %2839 = vmatpush1.bf16.msra.mxu0 0
        %2840 = vmatprep.subr.bf16.mxu0 0
        %2841 = vmatpush1.bf16.msra.mxu0 0
        %2842 = vmatprep.subr.bf16.mxu0 0
        %2843 = vmatpush1.bf16.msra.mxu0 0
        %2844 = vmatprep.subr.bf16.mxu0 0
        %2845 = vmatpush1.bf16.msra.mxu0 0
        %2846 = vmatprep.subr.bf16.mxu0 0
        %2847 = vmatpush1.bf16.msra.mxu0 0
        %2848 = vmatprep.subr.bf16.mxu0 0
        %2849 = vmatpush1.bf16.msra.mxu0 0
        %2850 = vmatprep.subr.bf16.mxu0 0
        %2851 = vmatpush1.bf16.msra.mxu0 0
        %2852 = vmatprep.subr.bf16.mxu0 0
        %2853 = vmatpush1.bf16.msra.mxu0 0
        %2854 = vmatprep.subr.bf16.mxu0 0
        %2855 = vmatpush1.bf16.msra.mxu0 0
        %2856 = vmatprep.subr.bf16.mxu0 0
        %2857 = vmatpush1.bf16.msra.mxu0 0
        %2858 = vmatprep.subr.bf16.mxu0 0
        %2859 = vmatpush1.bf16.msra.mxu0 0
        %2860 = vmatprep.mubr.bf16.mxu0 0
        %2861 = vmatmul.mubr.bf16.gmra.mrb[0].mxu0 %v2820
        %v2862 = vpop.f32.mrb[0].mxu0
        %v2863 = vadd.f32 0.0, %v2862
        %v2864 = vpop.f32.mrb[0].mxu0
        %v2865 = vpop.f32.mrb[0].mxu0
        %v2866 = vadd.f32 0.0, %v2865
        %v2867 = vpop.f32.mrb[0].mxu0
        %2868 = vmatprep.mubr.bf16.mxu0 0
        %2869 = vmatmul.mubr.bf16.gmra.mrb[0].mxu0 %v2823
        %v2870 = vpop.f32.mrb[0].mxu0
        %v2871 = vadd.f32 0.0, %v2870
        %v2872 = vpop.f32.mrb[0].mxu0
        %v2873 = vpop.f32.mrb[0].mxu0
        %v2874 = vpop.f32.mrb[0].mxu0
        %2875 = vdwg.mxu0
        %v2876 = vpack.c.bf16 %v2866, %v2863
        %v2877 = vpack.c.bf16 %v2871, %v2871
        %v2880 = vunpack.c.l.b16 %v2245
        %v2881 = vunpack.c.l.b16 %v2246
        %v2882 = vpack.c.b16 %v2881, %v2880
        %v2885 = vsel %vm781, %v2876, 0
        %v2888 = vsel %vm781, %v2877, 0
        %2890 = vmatprep.subr.bf16.mxu0 0
        %2891 = vmatpush1.bf16.msra.mxu0 %v2882
        %2892 = vmatprep.subr.bf16.mxu0 0
        %2893 = vmatpush1.bf16.msra.mxu0 0
        %2894 = vmatprep.subr.bf16.mxu0 0
        %2895 = vmatpush1.bf16.msra.mxu0 0
        %2896 = vmatprep.subr.bf16.mxu0 0
        %2897 = vmatpush1.bf16.msra.mxu0 0
        %2898 = vmatprep.subr.bf16.mxu0 0
        %2899 = vmatpush1.bf16.msra.mxu0 0
        %2900 = vmatprep.subr.bf16.mxu0 0
        %2901 = vmatpush1.bf16.msra.mxu0 0
        %2902 = vmatprep.subr.bf16.mxu0 0
        %2903 = vmatpush1.bf16.msra.mxu0 0
        %2904 = vmatprep.subr.bf16.mxu0 0
        %2905 = vmatpush1.bf16.msra.mxu0 0
        %2906 = vmatprep.subr.bf16.mxu0 0
        %2907 = vmatpush1.bf16.msra.mxu0 0
        %2908 = vmatprep.subr.bf16.mxu0 0
        %2909 = vmatpush1.bf16.msra.mxu0 0
        %2910 = vmatprep.subr.bf16.mxu0 0
        %2911 = vmatpush1.bf16.msra.mxu0 0
        %2912 = vmatprep.subr.bf16.mxu0 0
        %2913 = vmatpush1.bf16.msra.mxu0 0
        %2914 = vmatprep.subr.bf16.mxu0 0
        %2915 = vmatpush1.bf16.msra.mxu0 0
        %2916 = vmatprep.subr.bf16.mxu0 0
        %2917 = vmatpush1.bf16.msra.mxu0 0
        %2918 = vmatprep.subr.bf16.mxu0 0
        %2919 = vmatpush1.bf16.msra.mxu0 0
        %2920 = vmatprep.subr.bf16.mxu0 0
        %2921 = vmatpush1.bf16.msra.mxu0 0
        %2922 = vmatprep.mubr.bf16.mxu0 0
        %2923 = vmatmul.mubr.bf16.gmra.mrb[0].mxu0 %v2885
        %v2924 = vpop.f32.mrb[0].mxu0
        %v2925 = vadd.f32 0.0, %v2924
        %v2926 = vpop.f32.mrb[0].mxu0
        %v2927 = vpop.f32.mrb[0].mxu0
        %v2928 = vadd.f32 0.0, %v2927
        %v2929 = vpop.f32.mrb[0].mxu0
        %2930 = vmatprep.mubr.bf16.mxu0 0
        %2931 = vmatmul.mubr.bf16.gmra.mrb[0].mxu0 %v2888
        %v2932 = vpop.f32.mrb[0].mxu0
        %v2933 = vadd.f32 0.0, %v2932
        %v2934 = vpop.f32.mrb[0].mxu0
        %v2935 = vpop.f32.mrb[0].mxu0
        %v2936 = vpop.f32.mrb[0].mxu0
        %2937 = vdwg.mxu0
        %v2938 = vadd.f32 %v2695, %v2925
        %v2939 = vadd.f32 %v2698, %v2928
        %v2940 = vadd.f32 %v2703, %v2933
        %2941 = vrot.lane.b32.xlu0 %v2249, 80
        %v2942 = vpop.permute.xlu0 %2941
        %2943 = vrot.lane.b32.xlu0 %v2250, 80
        %v2944 = vpop.permute.xlu0 %2943
        %2945 = vrot.lane.b32.xlu0 %v2249, 16
        %v2946 = vpop.permute.xlu0 %2945
        %2947 = vrot.lane.b32.xlu0 %v2250, 16
        %v2948 = vpop.permute.xlu0 %2947
        %v2950 = vsel %vm781, %v2942, 0
        %v2953 = vsel %vm781, %v2944, 0
        %v2956 = vsel %vm781, %v2946, 0
        %v2959 = vsel %vm781, %v2948, 0
        %2961 = vmatprep.subr.bf16.mxu0 0
        %2962 = vmatpush1.bf16.xpose.msra.mxu0 %v2956
        %2963 = vmatprep.subr.bf16.mxu0 0
        %2964 = vmatpush1.bf16.xpose.msra.mxu0 %v2959
        %2965 = vmatprep.subr.bf16.mxu0 0
        %2966 = vmatpush1.bf16.xpose.msra.mxu0 0
        %2967 = vmatprep.subr.bf16.mxu0 0
        %2968 = vmatpush1.bf16.xpose.msra.mxu0 0
        %2969 = vmatprep.subr.bf16.mxu0 0
        %2970 = vmatpush1.bf16.xpose.msra.mxu0 0
        %2971 = vmatprep.subr.bf16.mxu0 0
        %2972 = vmatpush1.bf16.xpose.msra.mxu0 0
        %2973 = vmatprep.subr.bf16.mxu0 0
        %2974 = vmatpush1.bf16.xpose.msra.mxu0 0
        %2975 = vmatprep.subr.bf16.mxu0 0
        %2976 = vmatpush1.bf16.xpose.msra.mxu0 0
        %2977 = vmatprep.subr.bf16.mxu0 0
        %2978 = vmatpush1.bf16.xpose.msra.mxu0 0
        %2979 = vmatprep.subr.bf16.mxu0 0
        %2980 = vmatpush1.bf16.xpose.msra.mxu0 0
        %2981 = vmatprep.subr.bf16.mxu0 0
        %2982 = vmatpush1.bf16.xpose.msra.mxu0 0
        %2983 = vmatprep.subr.bf16.mxu0 0
        %2984 = vmatpush1.bf16.xpose.msra.mxu0 0
        %2985 = vmatprep.subr.bf16.mxu0 0
        %2986 = vmatpush1.bf16.xpose.msra.mxu0 0
        %2987 = vmatprep.subr.bf16.mxu0 0
        %2988 = vmatpush1.bf16.xpose.msra.mxu0 0
        %2989 = vmatprep.subr.bf16.mxu0 0
        %2990 = vmatpush1.bf16.xpose.msra.mxu0 0
        %2991 = vmatprep.subr.bf16.mxu0 0
        %2992 = vmatpush1.bf16.xpose.msra.mxu0 0
        %2993 = vmatprep.mubr.bf16.mxu0 0
        %2994 = vmatmul.mubr.bf16.gmra.mrb[0].mxu0 %v2950
        %v2995 = vpop.f32.mrb[0].mxu0
        %v2996 = vadd.f32 0.0, %v2995
        %v2997 = vpop.f32.mrb[0].mxu0
        %v2998 = vpop.f32.mrb[0].mxu0
        %v2999 = vadd.f32 0.0, %v2998
        %v3000 = vpop.f32.mrb[0].mxu0
        %3001 = vmatprep.mubr.bf16.mxu0 0
        %3002 = vmatmul.mubr.bf16.gmra.mrb[0].mxu0 %v2953
        %v3003 = vpop.f32.mrb[0].mxu0
        %v3004 = vadd.f32 0.0, %v3003
        %v3005 = vpop.f32.mrb[0].mxu0
        %v3006 = vpop.f32.mrb[0].mxu0
        %v3007 = vpop.f32.mrb[0].mxu0
        %3008 = vdwg.mxu0
        %v3009 = vsel %vm495, %v2996, -1e+30
        %v3010 = vsel %vm495, %v2999, -1e+30
        %v3011 = vsel %vm495, %v3004, -1e+30
        %v3012 = vsel %vm845, %v3009, -inf
        %3013 = vmax.xlane.f32.xlu0 %v3012
        %v3014 = vpop.xlane.xlu0 %3013
        %v3015 = vsel %vm845, %v3010, -inf
        %3016 = vmax.xlane.f32.xlu0 %v3015
        %v3017 = vpop.xlane.xlu0 %3016
        %v3018 = vsel %vm845, %v3011, -inf
        %3019 = vmax.xlane.f32.xlu0 %v3018
        %v3020 = vpop.xlane.xlu0 %3019
        %v3021 = vsub.f32 %v3009, %v3014
        %v3022 = vsub.f32 %v3010, %v3017
        %v3023 = vsub.f32 %v3011, %v3020
        %v3024 = vmul.f32 %v3021, 1.442695
        %v3025 = vpow.pop %v3024
        %v3026 = vmul.f32 %v3022, 1.442695
        %v3027 = vpow.pop %v3026
        %v3028 = vmul.f32 %v3023, 1.442695
        %v3029 = vpow.pop %v3028
        %v3030 = vsel %vm845, %v3025, 0.0
        %3031 = vadd.xlane.f32.xlu0 %v3030
        %v3032 = vpop.xlane.xlu0 %3031
        %v3033 = vsel %vm845, %v3027, 0.0
        %3034 = vadd.xlane.f32.xlu0 %v3033
        %v3035 = vpop.xlane.xlu0 %3034
        %v3036 = vsel %vm845, %v3029, 0.0
        %3037 = vadd.xlane.f32.xlu0 %v3036
        %v3038 = vpop.xlane.xlu0 %3037
        %v3039 = vrcp.pop %v3032
        %v3040 = vmul.f32 %v3025, %v3039
        %v3041 = vrcp.pop %v3035
        %v3042 = vmul.f32 %v3027, %v3041
        %v3043 = vrcp.pop %v3038
        %v3044 = vmul.f32 %v3029, %v3043
        %v3045 = vpack.c.bf16 %v3042, %v3040
        %v3046 = vpack.c.bf16 %v3044, %v3044
        %3047 = vrot.lane.b32.xlu0 %v2355, 80
        %v3048 = vpop.permute.xlu0 %3047
        %3049 = vrot.lane.b32.xlu0 %v2356, 80
        %v3050 = vpop.permute.xlu0 %3049
        %v3053 = vsel %vm845, %v3045, 0
        %v3056 = vsel %vm845, %v3046, 0
        %v3059 = vsel %vm889, %v3050, 0
        %3061 = vmatprep.subr.bf16.mxu0 0
        %3062 = vmatpush1.bf16.msra.mxu0 %v3048
        %3063 = vmatprep.subr.bf16.mxu0 0
        %3064 = vmatpush1.bf16.msra.mxu0 %v3059
        %3065 = vmatprep.subr.bf16.mxu0 0
        %3066 = vmatpush1.bf16.msra.mxu0 0
        %3067 = vmatprep.subr.bf16.mxu0 0
        %3068 = vmatpush1.bf16.msra.mxu0 0
        %3069 = vmatprep.subr.bf16.mxu0 0
        %3070 = vmatpush1.bf16.msra.mxu0 0
        %3071 = vmatprep.subr.bf16.mxu0 0
        %3072 = vmatpush1.bf16.msra.mxu0 0
        %3073 = vmatprep.subr.bf16.mxu0 0
        %3074 = vmatpush1.bf16.msra.mxu0 0
        %3075 = vmatprep.subr.bf16.mxu0 0
        %3076 = vmatpush1.bf16.msra.mxu0 0
        %3077 = vmatprep.subr.bf16.mxu0 0
        %3078 = vmatpush1.bf16.msra.mxu0 0
        %3079 = vmatprep.subr.bf16.mxu0 0
        %3080 = vmatpush1.bf16.msra.mxu0 0
        %3081 = vmatprep.subr.bf16.mxu0 0
        %3082 = vmatpush1.bf16.msra.mxu0 0
        %3083 = vmatprep.subr.bf16.mxu0 0
        %3084 = vmatpush1.bf16.msra.mxu0 0
        %3085 = vmatprep.subr.bf16.mxu0 0
        %3086 = vmatpush1.bf16.msra.mxu0 0
        %3087 = vmatprep.subr.bf16.mxu0 0
        %3088 = vmatpush1.bf16.msra.mxu0 0
        %3089 = vmatprep.subr.bf16.mxu0 0
        %3090 = vmatpush1.bf16.msra.mxu0 0
        %3091 = vmatprep.subr.bf16.mxu0 0
        %3092 = vmatpush1.bf16.msra.mxu0 0
        %3093 = vmatprep.mubr.bf16.mxu0 0
        %3094 = vmatmul.mubr.bf16.gmra.mrb[0].mxu0 %v3053
        %v3095 = vpop.f32.mrb[0].mxu0
        %v3096 = vadd.f32 0.0, %v3095
        %v3097 = vpop.f32.mrb[0].mxu0
        %v3098 = vpop.f32.mrb[0].mxu0
        %v3099 = vadd.f32 0.0, %v3098
        %v3100 = vpop.f32.mrb[0].mxu0
        %3101 = vmatprep.mubr.bf16.mxu0 0
        %3102 = vmatmul.mubr.bf16.gmra.mrb[0].mxu0 %v3056
        %v3103 = vpop.f32.mrb[0].mxu0
        %v3104 = vadd.f32 0.0, %v3103
        %v3105 = vpop.f32.mrb[0].mxu0
        %v3106 = vpop.f32.mrb[0].mxu0
        %v3107 = vpop.f32.mrb[0].mxu0
        %3108 = vdwg.mxu0
        %v3109 = vpack.c.bf16 %v3099, %v3096
        %v3110 = vpack.c.bf16 %v3104, %v3104
        %v3113 = vunpack.c.l.b16 %v2247
        %v3114 = vunpack.c.l.b16 %v2248
        %v3115 = vpack.c.b16 %v3114, %v3113
        %v3118 = vsel %vm781, %v3109, 0
        %v3121 = vsel %vm781, %v3110, 0
        %3123 = vmatprep.subr.bf16.mxu0 0
        %3124 = vmatpush1.bf16.msra.mxu0 %v3115
        %3125 = vmatprep.subr.bf16.mxu0 0
        %3126 = vmatpush1.bf16.msra.mxu0 0
        %3127 = vmatprep.subr.bf16.mxu0 0
        %3128 = vmatpush1.bf16.msra.mxu0 0
        %3129 = vmatprep.subr.bf16.mxu0 0
        %3130 = vmatpush1.bf16.msra.mxu0 0
        %3131 = vmatprep.subr.bf16.mxu0 0
        %3132 = vmatpush1.bf16.msra.mxu0 0
        %3133 = vmatprep.subr.bf16.mxu0 0
        %3134 = vmatpush1.bf16.msra.mxu0 0
        %3135 = vmatprep.subr.bf16.mxu0 0
        %3136 = vmatpush1.bf16.msra.mxu0 0
        %3137 = vmatprep.subr.bf16.mxu0 0
        %3138 = vmatpush1.bf16.msra.mxu0 0
        %3139 = vmatprep.subr.bf16.mxu0 0
        %3140 = vmatpush1.bf16.msra.mxu0 0
        %3141 = vmatprep.subr.bf16.mxu0 0
        %3142 = vmatpush1.bf16.msra.mxu0 0
        %3143 = vmatprep.subr.bf16.mxu0 0
        %3144 = vmatpush1.bf16.msra.mxu0 0
        %3145 = vmatprep.subr.bf16.mxu0 0
        %3146 = vmatpush1.bf16.msra.mxu0 0
        %3147 = vmatprep.subr.bf16.mxu0 0
        %3148 = vmatpush1.bf16.msra.mxu0 0
        %3149 = vmatprep.subr.bf16.mxu0 0
        %3150 = vmatpush1.bf16.msra.mxu0 0
        %3151 = vmatprep.subr.bf16.mxu0 0
        %3152 = vmatpush1.bf16.msra.mxu0 0
        %3153 = vmatprep.subr.bf16.mxu0 0
        %3154 = vmatpush1.bf16.msra.mxu0 0
        %3155 = vmatprep.mubr.bf16.mxu0 0
        %3156 = vmatmul.mubr.bf16.gmra.mrb[0].mxu0 %v3118
        %v3157 = vpop.f32.mrb[0].mxu0
        %v3158 = vadd.f32 0.0, %v3157
        %v3159 = vpop.f32.mrb[0].mxu0
        %v3160 = vpop.f32.mrb[0].mxu0
        %v3161 = vadd.f32 0.0, %v3160
        %v3162 = vpop.f32.mrb[0].mxu0
        %3163 = vmatprep.mubr.bf16.mxu0 0
        %3164 = vmatmul.mubr.bf16.gmra.mrb[0].mxu0 %v3121
        %v3165 = vpop.f32.mrb[0].mxu0
        %v3166 = vadd.f32 0.0, %v3165
        %v3167 = vpop.f32.mrb[0].mxu0
        %v3168 = vpop.f32.mrb[0].mxu0
        %v3169 = vpop.f32.mrb[0].mxu0
        %3170 = vdwg.mxu0
        %v3171 = vadd.f32 %v2938, %v3158
        %v3172 = vadd.f32 %v2939, %v3161
        %v3173 = vadd.f32 %v2940, %v3166
        %v3174 = vadd.f32 %v2061, %v3171
        %v3175 = vadd.f32 %v2062, %v3172
        %v3176 = vadd.f32 %v2063, %v3173
        %s3177 = scalar_lea.vmem %s7, 1
        %v3178 = vld [vmem:[%s3177] sm:$0x1]
        %v3180 = vlaneseq
        %v3181 = vshrl.u32 %v3180, 7
        %v3182 = vsub.s32 0, %v3181
        %v3183 = vrot.slane %v3178, %v3182
        %v3185 = vadd.f32 %v3174, %v3183
        %v3186 = vadd.f32 %v3175, %v3183
        %v3187 = vadd.f32 %v3176, %v3183
        %v3188 = vsel %vm536, %v3185, 0.0
        %3189 = vadd.xlane.f32.xlu0 %v3188
        %v3190 = vpop.xlane.xlu0 %3189
        %v3191 = vsel %vm536, %v3186, 0.0
        %3192 = vadd.xlane.f32.xlu0 %v3191
        %v3193 = vpop.xlane.xlu0 %3192
        %v3194 = vsel %vm536, %v3187, 0.0
        %3195 = vadd.xlane.f32.xlu0 %v3194
        %v3196 = vpop.xlane.xlu0 %3195
        %v3197 = vmul.f32 %v3190, %v601
        %v3198 = vmul.f32 %v3193, %v601
        %v3199 = vmul.f32 %v3196, %v601
        %v3200 = vsub.f32 %v3185, %v3197
        %v3201 = vsub.f32 %v3186, %v3198
        %v3202 = vsub.f32 %v3187, %v3199
        %v3203 = vmul.f32 %v3200, %v3200
        %v3204 = vmul.f32 %v3201, %v3201
        %v3205 = vmul.f32 %v3202, %v3202
        %v3206 = vsel %vm536, %v3203, 0.0
        %3207 = vadd.xlane.f32.xlu0 %v3206
        %v3208 = vpop.xlane.xlu0 %3207
        %v3209 = vsel %vm536, %v3204, 0.0
        %3210 = vadd.xlane.f32.xlu0 %v3209
        %v3211 = vpop.xlane.xlu0 %3210
        %v3212 = vsel %vm536, %v3205, 0.0
        %3213 = vadd.xlane.f32.xlu0 %v3212
        %v3214 = vpop.xlane.xlu0 %3213
        %v3215 = vmul.f32 %v3208, %v601
        %v3216 = vmul.f32 %v3211, %v601
        %v3217 = vmul.f32 %v3214, %v601
        %v3218 = vadd.f32 %v3215, 1e-06
        %v3219 = vadd.f32 %v3216, 1e-06
        %v3220 = vadd.f32 %v3217, 1e-06
        %v3221 = vrsqrt.pop %v3218
        %v3222 = vrsqrt.pop %v3219
        %v3223 = vrsqrt.pop %v3220
        %v3224 = vmul.f32 %v3200, %v3221
        %v3225 = vmul.f32 %v3201, %v3222
        %v3226 = vmul.f32 %v3202, %v3223
        %v3227 = vlaneseq
        %v3228 = vshrl.u32 %v3227, 7
        %v3229 = vsub.s32 2, %v3228
        %v3230 = vrot.slane %v2065, %v3229
        %v3231 = vmul.f32 %v3224, %v3230
        %v3232 = vmul.f32 %v3225, %v3230
        %v3233 = vmul.f32 %v3226, %v3230
        %v3234 = vlaneseq
        %v3235 = vshrl.u32 %v3234, 7
        %v3236 = vsub.s32 3, %v3235
        %v3237 = vrot.slane %v2065, %v3236
        %v3238 = vadd.f32 %v3231, %v3237
        %v3239 = vadd.f32 %v3232, %v3237
        %v3240 = vadd.f32 %v3233, %v3237
        %v3241 = vpack.c.bf16 %v3239, %v3238
        %v3242 = vpack.c.bf16 %v3240, %v3240
        %s3243 = scalar_lea.vmem %s8, 32
        %v3244 = vld [vmem:[%s3243] sm:$0xf]
        %v3245 = vld [vmem:[%s3243 + $0x4] sm:$0xf]
        %v3246 = vld [vmem:[%s3243 + $0x8] sm:$0xf]
        %v3247 = vld [vmem:[%s3243 + $0xc] sm:$0xf]
        %v3248 = vld [vmem:[%s3243 + $0x10] sm:$0xf]
        %v3249 = vld [vmem:[%s3243 + $0x14] sm:$0xf]
        %v3250 = vld [vmem:[%s3243 + $0x18] sm:$0xf]
        %v3251 = vld [vmem:[%s3243 + $0x1c] sm:$0xf]
        %s3252 = scalar_lea.vmem %s9, 1
        %v3253 = vld [vmem:[%s3252] sm:$0x1]
        %v3255 = vlaneseq
        %v3256 = vshrl.u32 %v3255, 7
        %v3257 = vsub.s32 0, %v3256
        %v3258 = vrot.slane %v3253, %v3257
        %v3268 = vunpack.c.l.b16 %v3244
        %v3269 = vunpack.c.l.b16 %v3245
        %v3270 = vunpack.c.l.b16 %v3246
        %v3271 = vunpack.c.l.b16 %v3247
        %v3272 = vunpack.c.l.b16 %v3248
        %v3273 = vunpack.c.l.b16 %v3249
        %v3274 = vunpack.c.l.b16 %v3250
        %v3275 = vunpack.c.l.b16 %v3251
        %v3276 = vpack.c.b16 %v3269, %v3268
        %v3277 = vpack.c.b16 %v3271, %v3270
        %v3278 = vpack.c.b16 %v3273, %v3272
        %v3279 = vpack.c.b16 %v3275, %v3274
        %v3285 = vsel %vm536, %v3241, 0
        %v3288 = vsel %vm536, %v3242, 0
        %3290 = vmatprep.subr.bf16.mxu0 0
        %3291 = vmatpush1.bf16.msra.mxu0 %v3276
        %3292 = vmatprep.subr.bf16.mxu0 0
        %3293 = vmatpush1.bf16.msra.mxu0 %v3277
        %3294 = vmatprep.subr.bf16.mxu0 0
        %3295 = vmatpush1.bf16.msra.mxu0 %v3278
        %3296 = vmatprep.subr.bf16.mxu0 0
        %3297 = vmatpush1.bf16.msra.mxu0 %v3279
        %3298 = vmatprep.subr.bf16.mxu0 0
        %3299 = vmatpush1.bf16.msra.mxu0 0
        %3300 = vmatprep.subr.bf16.mxu0 0
        %3301 = vmatpush1.bf16.msra.mxu0 0
        %3302 = vmatprep.subr.bf16.mxu0 0
        %3303 = vmatpush1.bf16.msra.mxu0 0
        %3304 = vmatprep.subr.bf16.mxu0 0
        %3305 = vmatpush1.bf16.msra.mxu0 0
        %3306 = vmatprep.subr.bf16.mxu0 0
        %3307 = vmatpush1.bf16.msra.mxu0 0
        %3308 = vmatprep.subr.bf16.mxu0 0
        %3309 = vmatpush1.bf16.msra.mxu0 0
        %3310 = vmatprep.subr.bf16.mxu0 0
        %3311 = vmatpush1.bf16.msra.mxu0 0
        %3312 = vmatprep.subr.bf16.mxu0 0
        %3313 = vmatpush1.bf16.msra.mxu0 0
        %3314 = vmatprep.subr.bf16.mxu0 0
        %3315 = vmatpush1.bf16.msra.mxu0 0
        %3316 = vmatprep.subr.bf16.mxu0 0
        %3317 = vmatpush1.bf16.msra.mxu0 0
        %3318 = vmatprep.subr.bf16.mxu0 0
        %3319 = vmatpush1.bf16.msra.mxu0 0
        %3320 = vmatprep.subr.bf16.mxu0 0
        %3321 = vmatpush1.bf16.msra.mxu0 0
        %3322 = vmatprep.mubr.bf16.mxu0 0
        %3323 = vmatmul.mubr.bf16.gmra.mrb[0].mxu0 %v3285
        %v3324 = vpop.f32.mrb[0].mxu0
        %v3325 = vadd.f32 %v3258, %v3324
        %v3326 = vpop.f32.mrb[0].mxu0
        %v3327 = vpop.f32.mrb[0].mxu0
        %v3328 = vadd.f32 %v3258, %v3327
        %v3329 = vpop.f32.mrb[0].mxu0
        %3330 = vmatprep.mubr.bf16.mxu0 0
        %3331 = vmatmul.mubr.bf16.gmra.mrb[0].mxu0 %v3288
        %v3332 = vpop.f32.mrb[0].mxu0
        %v3333 = vadd.f32 %v3258, %v3332
        %v3334 = vpop.f32.mrb[0].mxu0
        %v3335 = vpop.f32.mrb[0].mxu0
        %v3336 = vpop.f32.mrb[0].mxu0
        %3337 = vdwg.mxu0
        %v3338 = vmul.f32 %v3325, 0.70710677
        %v3339 = vmul.f32 %v3328, 0.70710677
        %v3340 = vmul.f32 %v3333, 0.70710677
        %vm3341 = vcmp.ge.f32.partialorder %v3338, 0.0
        %vm3342 = vcmp.ge.f32.partialorder %v3339, 0.0
        %vm3343 = vcmp.ge.f32.partialorder %v3340, 0.0
        %v3344 = vsel %vm3341, 1.0, -1.0
        %v3345 = vsel %vm3342, 1.0, -1.0
        %v3346 = vsel %vm3343, 1.0, -1.0
        %v3347 = vand.u32 2147483647, %v3338
        %v3348 = vand.u32 2147483647, %v3339
        %v3349 = vand.u32 2147483647, %v3340
        %v3350 = vmul.f32 %v3347, 0.3275911
        %v3351 = vmul.f32 %v3348, 0.3275911
        %v3352 = vmul.f32 %v3349, 0.3275911
        %v3353 = vadd.f32 %v3350, 1.0
        %v3354 = vadd.f32 %v3351, 1.0
        %v3355 = vadd.f32 %v3352, 1.0
        %v3356 = vrcp.pop %v3353
        %v3357 = vrcp.pop %v3354
        %v3358 = vrcp.pop %v3355
        %v3359 = vmul.f32 %v3356, 1.0614054
        %v3360 = vmul.f32 %v3357, 1.0614054
        %v3361 = vmul.f32 %v3358, 1.0614054
        %v3362 = vsub.f32 %v3359, 1.4531521
        %v3363 = vsub.f32 %v3360, 1.4531521
        %v3364 = vsub.f32 %v3361, 1.4531521
        %v3365 = vmul.f32 %v3362, %v3356
        %v3366 = vmul.f32 %v3363, %v3357
        %v3367 = vmul.f32 %v3364, %v3358
        %v3368 = vadd.f32 %v3365, 1.4214138
        %v3369 = vadd.f32 %v3366, 1.4214138
        %v3370 = vadd.f32 %v3367, 1.4214138
        %v3371 = vmul.f32 %v3368, %v3356
        %v3372 = vmul.f32 %v3369, %v3357
        %v3373 = vmul.f32 %v3370, %v3358
        %v3374 = vsub.f32 %v3371, 0.28449672
        %v3375 = vsub.f32 %v3372, 0.28449672
        %v3376 = vsub.f32 %v3373, 0.28449672
        %v3377 = vmul.f32 %v3374, %v3356
        %v3378 = vmul.f32 %v3375, %v3357
        %v3379 = vmul.f32 %v3376, %v3358
        %v3380 = vadd.f32 %v3377, 0.2548296
        %v3381 = vadd.f32 %v3378, 0.2548296
        %v3382 = vadd.f32 %v3379, 0.2548296
        %v3383 = vmul.f32 %v3380, %v3356
        %v3384 = vmul.f32 %v3381, %v3357
        %v3385 = vmul.f32 %v3382, %v3358
        %v3386 = vsub.f32 0.0, %v3347
        %v3387 = vsub.f32 0.0, %v3348
        %v3388 = vsub.f32 0.0, %v3349
        %v3389 = vmul.f32 %v3386, %v3347
        %v3390 = vmul.f32 %v3387, %v3348
        %v3391 = vmul.f32 %v3388, %v3349
        %v3392 = vmul.f32 %v3389, 1.442695
        %v3393 = vpow.pop %v3392
        %v3394 = vmul.f32 %v3390, 1.442695
        %v3395 = vpow.pop %v3394
        %v3396 = vmul.f32 %v3391, 1.442695
        %v3397 = vpow.pop %v3396
        %v3398 = vmul.f32 %v3383, %v3393
        %v3399 = vmul.f32 %v3384, %v3395
        %v3400 = vmul.f32 %v3385, %v3397
        %v3401 = vsub.f32 1.0, %v3398
        %v3402 = vsub.f32 1.0, %v3399
        %v3403 = vsub.f32 1.0, %v3400
        %v3404 = vmul.f32 %v3344, %v3401
        %v3405 = vmul.f32 %v3345, %v3402
        %v3406 = vmul.f32 %v3346, %v3403
        %v3407 = vmul.f32 %v3325, 0.5
        %v3408 = vmul.f32 %v3328, 0.5
        %v3409 = vmul.f32 %v3333, 0.5
        %v3410 = vadd.f32 %v3404, 1.0
        %v3411 = vadd.f32 %v3405, 1.0
        %v3412 = vadd.f32 %v3406, 1.0
        %v3413 = vmul.f32 %v3407, %v3410
        %v3414 = vmul.f32 %v3408, %v3411
        %v3415 = vmul.f32 %v3409, %v3412
        %v3416 = vpack.c.bf16 %v3414, %v3413
        %v3417 = vpack.c.bf16 %v3415, %v3415
        %s3418 = scalar_lea.vmem %s10, 64
        %v3419 = vld [vmem:[%s3418] sm:$0xf]
        %v3420 = vld [vmem:[%s3418 + $0x4] sm:$0xf]
        %v3421 = vld [vmem:[%s3418 + $0x8] sm:$0xf]
        %v3422 = vld [vmem:[%s3418 + $0xc] sm:$0xf]
        %v3423 = vld [vmem:[%s3418 + $0x10] sm:$0xf]
        %v3424 = vld [vmem:[%s3418 + $0x14] sm:$0xf]
        %v3425 = vld [vmem:[%s3418 + $0x18] sm:$0xf]
        %v3426 = vld [vmem:[%s3418 + $0x1c] sm:$0xf]
        %v3427 = vld [vmem:[%s3418 + $0x20] sm:$0xf]
        %v3428 = vld [vmem:[%s3418 + $0x24] sm:$0xf]
        %v3429 = vld [vmem:[%s3418 + $0x28] sm:$0xf]
        %v3430 = vld [vmem:[%s3418 + $0x2c] sm:$0xf]
        %v3431 = vld [vmem:[%s3418 + $0x30] sm:$0xf]
        %v3432 = vld [vmem:[%s3418 + $0x34] sm:$0xf]
        %v3433 = vld [vmem:[%s3418 + $0x38] sm:$0xf]
        %v3434 = vld [vmem:[%s3418 + $0x3c] sm:$0xf]
        %s3435 = scalar_lea.vmem %s11, 1
        %v3436 = vld [vmem:[%s3435] sm:$0x1]
        %v3438 = vlaneseq
        %v3439 = vshrl.u32 %v3438, 7
        %v3440 = vsub.s32 0, %v3439
        %v3441 = vrot.slane %v3436, %v3440
        %v3459 = vunpack.c.l.b16 %v3419
        %v3460 = vunpack.c.l.b16 %v3420
        %v3461 = vunpack.c.l.b16 %v3421
        %v3462 = vunpack.c.l.b16 %v3422
        %v3463 = vunpack.c.l.b16 %v3423
        %v3464 = vunpack.c.l.b16 %v3424
        %v3465 = vunpack.c.l.b16 %v3425
        %v3466 = vunpack.c.l.b16 %v3426
        %v3467 = vunpack.c.l.b16 %v3427
        %v3468 = vunpack.c.l.b16 %v3428
        %v3469 = vunpack.c.l.b16 %v3429
        %v3470 = vunpack.c.l.b16 %v3430
        %v3471 = vunpack.c.l.b16 %v3431
        %v3472 = vunpack.c.l.b16 %v3432
        %v3473 = vunpack.c.l.b16 %v3433
        %v3474 = vunpack.c.l.b16 %v3434
        %v3475 = vpack.c.b16 %v3460, %v3459
        %v3476 = vpack.c.b16 %v3462, %v3461
        %v3477 = vpack.c.b16 %v3464, %v3463
        %v3478 = vpack.c.b16 %v3466, %v3465
        %v3479 = vpack.c.b16 %v3468, %v3467
        %v3480 = vpack.c.b16 %v3470, %v3469
        %v3481 = vpack.c.b16 %v3472, %v3471
        %v3482 = vpack.c.b16 %v3474, %v3473
        %3491 = vmatprep.subr.bf16.mxu0 0
        %3492 = vmatpush1.bf16.msra.mxu0 %v3475
        %3493 = vmatprep.subr.bf16.mxu0 0
        %3494 = vmatpush1.bf16.msra.mxu0 %v3476
        %3495 = vmatprep.subr.bf16.mxu0 0
        %3496 = vmatpush1.bf16.msra.mxu0 %v3477
        %3497 = vmatprep.subr.bf16.mxu0 0
        %3498 = vmatpush1.bf16.msra.mxu0 %v3478
        %3499 = vmatprep.subr.bf16.mxu0 0
        %3500 = vmatpush1.bf16.msra.mxu0 %v3479
        %3501 = vmatprep.subr.bf16.mxu0 0
        %3502 = vmatpush1.bf16.msra.mxu0 %v3480
        %3503 = vmatprep.subr.bf16.mxu0 0
        %3504 = vmatpush1.bf16.msra.mxu0 %v3481
        %3505 = vmatprep.subr.bf16.mxu0 0
        %3506 = vmatpush1.bf16.msra.mxu0 %v3482
        %3507 = vmatprep.subr.bf16.mxu0 0
        %3508 = vmatpush1.bf16.msra.mxu0 0
        %3509 = vmatprep.subr.bf16.mxu0 0
        %3510 = vmatpush1.bf16.msra.mxu0 0
        %3511 = vmatprep.subr.bf16.mxu0 0
        %3512 = vmatpush1.bf16.msra.mxu0 0
        %3513 = vmatprep.subr.bf16.mxu0 0
        %3514 = vmatpush1.bf16.msra.mxu0 0
        %3515 = vmatprep.subr.bf16.mxu0 0
        %3516 = vmatpush1.bf16.msra.mxu0 0
        %3517 = vmatprep.subr.bf16.mxu0 0
        %3518 = vmatpush1.bf16.msra.mxu0 0
        %3519 = vmatprep.subr.bf16.mxu0 0
        %3520 = vmatpush1.bf16.msra.mxu0 0
        %3521 = vmatprep.subr.bf16.mxu0 0
        %3522 = vmatpush1.bf16.msra.mxu0 0
        %3523 = vmatprep.mubr.bf16.mxu0 0
        %3524 = vmatmul.mubr.bf16.gmra.mrb[0].mxu0 %v3416
        %v3525 = vpop.f32.mrb[0].mxu0
        %v3526 = vpop.f32.mrb[0].mxu0
        %v3527 = vpop.f32.mrb[0].mxu0
        %v3528 = vpop.f32.mrb[0].mxu0
        %3529 = vmatprep.mubr.bf16.mxu0 0
        %3530 = vmatmul.mubr.bf16.gmra.mrb[0].mxu0 %v3417
        %v3531 = vpop.f32.mrb[0].mxu0
        %v3532 = vadd.f32 %v3441, %v3531
        %v3533 = vpop.f32.mrb[0].mxu0
        %v3534 = vpop.f32.mrb[0].mxu0
        %v3535 = vpop.f32.mrb[0].mxu0
        %3536 = vdwg.mxu0
        %v3537 = vadd.f32 %v3187, %v3532
        %v3538 = vld [vmem:[%s12] sm:$0x1]
        %v3539 = vld [vmem:[%s12 + $0x1] sm:$0x1]
        %v3540 = vsel %vm536, %v3537, 0.0
        %3541 = vadd.xlane.f32.xlu0 %v3540
        %v3542 = vpop.xlane.xlu0 %3541
        %v3543 = vmul.f32 %v3542, %v601
        %v3544 = vsub.f32 %v3537, %v3543
        %v3545 = vmul.f32 %v3544, %v3544
        %v3546 = vsel %vm536, %v3545, 0.0
        %3547 = vadd.xlane.f32.xlu0 %v3546
        %v3548 = vpop.xlane.xlu0 %3547
        %v3549 = vmul.f32 %v3548, %v601
        %v3550 = vadd.f32 %v3549, 1e-06
        %v3551 = vrsqrt.pop %v3550
        %v3552 = vmul.f32 %v3544, %v3551
        %v3553 = vlaneseq
        %v3554 = vshrl.u32 %v3553, 7
        %v3555 = vsub.s32 0, %v3554
        %v3556 = vrot.slane %v3538, %v3555
        %v3557 = vmul.f32 %v3552, %v3556
        %v3558 = vlaneseq
        %v3559 = vshrl.u32 %v3558, 7
        %v3560 = vsub.s32 0, %v3559
        %v3561 = vrot.slane %v3539, %v3560
        %v3562 = vadd.f32 %v3557, %v3561
        %v3563 = vpack.c.bf16 %v3562, %v3562
        %v3564 = vld [vmem:[%s13] sm:$0xf]
        %v3565 = vld [vmem:[%s13 + $0x4] sm:$0xf]
        %v3566 = vld [vmem:[%s13 + $0x8] sm:$0xf]
        %v3567 = vld [vmem:[%s13 + $0xc] sm:$0xf]
        %v3568 = vld [vmem:[%s13 + $0x10] sm:$0xf]
        %v3569 = vld [vmem:[%s13 + $0x14] sm:$0xf]
        %v3570 = vld [vmem:[%s13 + $0x18] sm:$0xf]
        %v3571 = vld [vmem:[%s13 + $0x1c] sm:$0xf]
        %v3572 = vld [vmem:[%s14] sm:$0x1]
        %v3581 = vunpack.c.l.b16 %v3564
        %v3582 = vunpack.c.l.b16 %v3565
        %v3583 = vunpack.c.l.b16 %v3566
        %v3584 = vunpack.c.l.b16 %v3567
        %v3585 = vunpack.c.l.b16 %v3568
        %v3586 = vunpack.c.l.b16 %v3569
        %v3587 = vunpack.c.l.b16 %v3570
        %v3588 = vunpack.c.l.b16 %v3571
        %v3589 = vpack.c.b16 %v3582, %v3581
        %v3590 = vpack.c.b16 %v3584, %v3583
        %v3591 = vpack.c.b16 %v3586, %v3585
        %v3592 = vpack.c.b16 %v3588, %v3587
        %v3598 = vsel %vm536, %v3563, 0
        %3600 = vmatprep.subr.bf16.mxu0 0
        %3601 = vmatpush1.bf16.msra.mxu0 %v3589
        %3602 = vmatprep.subr.bf16.mxu0 0
        %3603 = vmatpush1.bf16.msra.mxu0 %v3590
        %3604 = vmatprep.subr.bf16.mxu0 0
        %3605 = vmatpush1.bf16.msra.mxu0 %v3591
        %3606 = vmatprep.subr.bf16.mxu0 0
        %3607 = vmatpush1.bf16.msra.mxu0 %v3592
        %3608 = vmatprep.subr.bf16.mxu0 0
        %3609 = vmatpush1.bf16.msra.mxu0 0
        %3610 = vmatprep.subr.bf16.mxu0 0
        %3611 = vmatpush1.bf16.msra.mxu0 0
        %3612 = vmatprep.subr.bf16.mxu0 0
        %3613 = vmatpush1.bf16.msra.mxu0 0
        %3614 = vmatprep.subr.bf16.mxu0 0
        %3615 = vmatpush1.bf16.msra.mxu0 0
        %3616 = vmatprep.subr.bf16.mxu0 0
        %3617 = vmatpush1.bf16.msra.mxu0 0
        %3618 = vmatprep.subr.bf16.mxu0 0
        %3619 = vmatpush1.bf16.msra.mxu0 0
        %3620 = vmatprep.subr.bf16.mxu0 0
        %3621 = vmatpush1.bf16.msra.mxu0 0
        %3622 = vmatprep.subr.bf16.mxu0 0
        %3623 = vmatpush1.bf16.msra.mxu0 0
        %3624 = vmatprep.subr.bf16.mxu0 0
        %3625 = vmatpush1.bf16.msra.mxu0 0
        %3626 = vmatprep.subr.bf16.mxu0 0
        %3627 = vmatpush1.bf16.msra.mxu0 0
        %3628 = vmatprep.subr.bf16.mxu0 0
        %3629 = vmatpush1.bf16.msra.mxu0 0
        %3630 = vmatprep.subr.bf16.mxu0 0
        %3631 = vmatpush1.bf16.msra.mxu0 0
        %3632 = vmatprep.mubr.bf16.mxu0 0
        %3633 = vmatmul.mubr.bf16.gmra.mrb[0].mxu0 %v3598
        %v3634 = vpop.f32.mrb[0].mxu0
        %v3635 = vadd.f32 %v3572, %v3634
        %v3636 = vpop.f32.mrb[0].mxu0
        %v3637 = vpop.f32.mrb[0].mxu0
        %v3638 = vpop.f32.mrb[0].mxu0
        %3639 = vdwg.mxu0
        %vm3640 = vcmask 253952
        %3641 = vst.msk [vmem:[%s486] sm:$0x1] %vm3640, %v3635
        %s3642 = sand.u32 %s357, 1
        %s3643 = scalar_lea.sflag [#allocation3], %s3642
        %s3644 = sand.u32 %s357, 1
        %s3645 = scalar_lea.vmem [#allocation2], %s3644
        // Predicated region
        $region81: #{vit_forward.1} parent=79 // pred_check
          %p3646 = pneg %p367
        $region82: #{vit_forward.1} parent=79 // pred_check_branch
          %3648 = sbr.rel (%p3646) target = $region84
        $region83: #{vit_forward.1} parent=79 // pred_region
          %s3650 = ssub.s32 16, 16
          %3651 = vsyncadd %s3643, %s3650
          %s3652 = smul.addr %s29, 16
          %s3653 = scalar_lea.hbm %s15, %s3652
          %s3655 = sshll.u32 %s3645, 4
          %s3656 = int_to_ptr.vmem [resolvable:$true] %s3655
          %3658 = dma.vmem_to_hbm [thread:$0]  %s3656, 16, %s3653, %s3643
        $region84: #{vit_forward.1} parent=79 // pred_fallthru
          _
      $region80: #{vit_forward.1} parent=5 // pred_fallthru
        _
      %p3659 = scmp.le.s32.totalorder 2, %s24
      // Predicated region
      $region85: #{vit_forward.1} parent=5 // pred_check
        %p3660 = pneg %p3659
      $region86: #{vit_forward.1} parent=5 // pred_check_branch
        %3662 = sbr.rel (%p3660) target = $region88
      $region87: #{vit_forward.1} parent=5 // pred_region
        %s3663 = ssub.s32 %s24, 2
        // Predicated region
        $region89: #{vit_forward.1} parent=87 // pred_check
          %p3664 = pneg %p373
        $region90: #{vit_forward.1} parent=87 // pred_check_branch
          %3666 = sbr.rel (%p3664) target = $region92
        $region91: #{vit_forward.1} parent=87 // pred_region
          %s3667 = sand.u32 %s358, 1
          %s3668 = scalar_lea.sflag [#allocation3], %s3667
          %s3669 = sand.u32 %s358, 1
          %s3670 = scalar_lea.vmem [#allocation2], %s3669
          %3671 = dma.done %s3668, 16
        $region92: #{vit_forward.1} parent=87 // pred_fallthru
          _
      $region88: #{vit_forward.1} parent=5 // pred_fallthru
        _
    $region6: #{vit_forward.1} parent=1 // loop_footer
      %s28 = sadd.s32 1, %s24
    $region7: #{vit_forward.1} parent=1 // loop_footer_branch
      %23 = sbr.rel target = $region3
    $region8: #{vit_forward.1} parent=1 // loop_exit
      _
    %3672 = vsyncpa [#allocation3], 1
    %s3673 = scalar_lea.sflag [#allocation3], 1
    %3674 = vsyncpa %s3673, 1

</llo_original>
